<compile_context>
chip_gen: v7x
topology: tpu7x:2x2x1
jax: 0.10.0
libtpu: 0.0.40
codegen_flags: <defaults>
</compile_context>

<pallas_src>
import functools
import math

import jax
import jax.numpy as jnp
from jax.experimental import pallas as pl
from jax.experimental.pallas import tpu as pltpu


# ----------------------------------------------------------------------------- #
# helpers
# ----------------------------------------------------------------------------- #
def _round_up(v, m):
    return ((v + m - 1) // m) * m


def _pick_vmem_limit():
    try:
        kind = jax.devices()[0].device_kind.lower()
    except Exception:
        kind = ""
    if "7" in kind:                      # v7x: 64 MiB physical VMEM per TensorCore
        return 48 * 1024 * 1024
    return 80 * 1024 * 1024              # v5e / v6e: 128 MiB physical


_VMEM_LIMIT = _pick_vmem_limit()


def _pick_dim(n, cap, mult):
    """Return (tile, padded_n).  Prefer the full dim (legal block, no pad),
    else a divisor that is a multiple of `mult`, else pad up (rare)."""
    if n <= cap:
        return n, n
    t = (cap // mult) * mult
    while t >= mult:
        if n % t == 0:
            return t, n
        t -= mult
    return cap, _round_up(n, cap)


def _divisor_tile(n, cap):
    """Largest divisor of n that is <= cap and a multiple of 8 (fallback: n)."""
    if n <= cap:
        return n
    for t in range(cap, 7, -1):
        if n % t == 0 and t % 8 == 0:
            return t
    return n


def _swish(y):
    # y * sigmoid(y); the divide goes to the EUP slot via the approx reciprocal.
    return y * pl.reciprocal(1.0 + jnp.exp(-y), approx=True)


# ----------------------------------------------------------------------------- #
# generic tiled matmul (used for 1x1 convs, QKV/proj, stride-2 im2col conv)
# ----------------------------------------------------------------------------- #
def _mm_kernel(*refs, act, has_add):
    if has_add:
        x_ref, w_ref, b_ref, a_ref, o_ref, acc_ref = refs
    else:
        x_ref, w_ref, b_ref, o_ref, acc_ref = refs
        a_ref = None
    k = pl.program_id(2)

    @pl.when(k == 0)
    def _():
        acc_ref[...] = jnp.zeros_like(acc_ref)

    acc_ref[...] += jnp.dot(x_ref[...], w_ref[...],
                            preferred_element_type=jnp.float32)

    @pl.when(k == pl.num_programs(2) - 1)
    def _():
        y = acc_ref[...] + b_ref[...]
        if has_add:
            y = y + a_ref[...].astype(jnp.float32)
        if act == "swish":
            y = _swish(y)
        o_ref[...] = y.astype(o_ref.dtype)


def matmul_fused(x, w, b, add=None, act=None, out_dtype=jnp.bfloat16):
    """y = act(x @ w + b [+ add]).  x:(M,K), w:(K,N), b:(N,), add:(M,N)."""
    M, K = x.shape
    N = w.shape[1]
    tm, Mp = _pick_dim(M, 512, 8)
    tn, Np = _pick_dim(N, 512, 128)
    tk, Kp = _pick_dim(K, 1024, 128)

    xb = x.astype(jnp.bfloat16)
    wb = w.astype(jnp.bfloat16)
    if (Mp, Kp) != (M, K):
        xb = jnp.pad(xb, ((0, Mp - M), (0, Kp - K)))
    if (Kp, Np) != (K, N):
        wb = jnp.pad(wb, ((0, Kp - K), (0, Np - N)))
    bb = b.astype(jnp.float32).reshape(1, N)
    if Np != N:
        bb = jnp.pad(bb, ((0, 0), (0, Np - N)))

    inputs = [xb, wb, bb]
    in_specs = [
        pl.BlockSpec((tm, tk), lambda i, j, k: (i, k)),
        pl.BlockSpec((tk, tn), lambda i, j, k: (k, j)),
        pl.BlockSpec((1, tn), lambda i, j, k: (0, j)),
    ]
    has_add = add is not None
    if has_add:
        ab = add.astype(jnp.bfloat16)
        if (Mp, Np) != (M, N):
            ab = jnp.pad(ab, ((0, Mp - M), (0, Np - N)))
        inputs.append(ab)
        in_specs.append(pl.BlockSpec((tm, tn), lambda i, j, k: (i, j)))

    out = pl.pallas_call(
        functools.partial(_mm_kernel, act=act, has_add=has_add),
        out_shape=jax.ShapeDtypeStruct((Mp, Np), out_dtype),
        grid=(Mp // tm, Np // tn, Kp // tk),
        in_specs=in_specs,
        out_specs=pl.BlockSpec((tm, tn), lambda i, j, k: (i, j)),
        scratch_shapes=[pltpu.VMEM((tm, tn), jnp.float32)],
        compiler_params=pltpu.CompilerParams(
            dimension_semantics=("parallel", "parallel", "arbitrary"),
            vmem_limit_bytes=_VMEM_LIMIT),
    )(*inputs)
    if (Mp, Np) != (M, N):
        out = out[:M, :N]
    return out


# ----------------------------------------------------------------------------- #
# fused 3x3 stride-1 convolution (no im2col materialization)
# ----------------------------------------------------------------------------- #
def _conv_kernel(*refs, kh, kw, tro, wo, has_add, act, emit_stats):
    x_ref, w_ref, b_ref = refs[0], refs[1], refs[2]
    idx = 3
    a_ref = None
    if has_add:
        a_ref = refs[idx]
        idx += 1
    o_ref = refs[idx]
    idx += 1
    s1_ref = s2_ref = None
    if emit_stats:
        s1_ref, s2_ref = refs[idx], refs[idx + 1]

    cin = x_ref.shape[-1]
    acc = None
    for ky in range(kh):
        for kx in range(kw):
            xs = x_ref[0, ky:ky + tro, kx:kx + wo, :].reshape(tro * wo, cin)
            p = jnp.dot(xs, w_ref[ky, kx], preferred_element_type=jnp.float32)
            acc = p if acc is None else acc + p
    y = acc + b_ref[...]
    if has_add:
        y = y + a_ref[0].astype(jnp.float32)
    if emit_stats:
        # per-band channel sum / sum-of-squares of the (pre-activation) conv output
        s1_ref[0] = jnp.sum(y, axis=0, keepdims=True)
        s2_ref[0] = jnp.sum(y * y, axis=0, keepdims=True)
    if act == "swish":
        y = _swish(y)
    o_ref[0] = y.astype(o_ref.dtype)


def _conv2d_im2col(x, w, b, stride=1, padding=((1, 1), (1, 1)), add=None, act=None,
                   out_dtype=jnp.bfloat16):
    """Fallback conv (stride != 1 / awkward shapes) through the tiled matmul."""
    B, H, W, Cin = x.shape
    kh, kw, _, Cout = w.shape
    xb = x.astype(jnp.bfloat16)
    xp = jnp.pad(xb, ((0, 0), padding[0], padding[1], (0, 0)))
    Hp = H + padding[0][0] + padding[0][1]
    Wp = W + padding[1][0] + padding[1][1]
    Ho = (Hp - kh) // stride + 1
    Wo = (Wp - kw) // stride + 1
    patches = []
    for ky in range(kh):
        for kx in range(kw):
            patches.append(
                xp[:, ky:ky + stride * (Ho - 1) + 1:stride,
                      kx:kx + stride * (Wo - 1) + 1:stride, :])
    xcol = jnp.concatenate(patches, axis=-1).reshape(B * Ho * Wo, kh * kw * Cin)
    add2 = None if add is None else add.astype(jnp.bfloat16).reshape(B * Ho * Wo, Cout)
    y = matmul_fused(xcol, w.reshape(kh * kw * Cin, Cout), b,
                     add=add2, act=act, out_dtype=out_dtype)
    return y.reshape(B, Ho, Wo, Cout)


def conv2d(x, w, b, add=None, act=None, out_dtype=jnp.bfloat16, emit_stats=False):
    """'Same' stride-1 kxk conv on NHWC input.  The padded input stays in HBM;
    each grid step DMAs one haloed row-band into VMEM and accumulates the kh*kw
    taps in-register (fused bias / residual-add / swish epilogue).  Optionally
    emits per-(batch,channel) sum/sumsq so a following GroupNorm needs no extra
    statistics pass over HBM."""
    B, H, W, Cin = x.shape
    kh, kw, _, Cout = w.shape
    ph, pw = (kh - 1) // 2, (kw - 1) // 2
    Ho, Wo = H, W

    if (W % 8 != 0) or (kh % 2 == 0) or (kw % 2 == 0):
        out = _conv2d_im2col(x, w, b, stride=1, padding=((ph, ph), (pw, pw)),
                             add=add, act=act, out_dtype=out_dtype)
        if emit_stats:
            of = out.astype(jnp.float32).reshape(B, H * W, Cout)
            return out, of.sum(axis=1), (of * of).sum(axis=1)
        return out

    Cin_p = _round_up(Cin, 8)
    xb = x.astype(jnp.bfloat16)
    xp = jnp.pad(xb, ((0, 0), (ph, ph), (pw, pw), (0, Cin_p - Cin)))
    Hp, Wp = H + 2 * ph, W + 2 * pw
    wb = w.astype(jnp.bfloat16)
    if Cin_p != Cin:
        wb = jnp.pad(wb, ((0, 0), (0, 0), (0, Cin_p - Cin), (0, 0)))

    # output-channel tile
    if Cout <= 512:
        tn = Cout
    else:
        tn = Cout
        t = 512
        while t >= 128:
            if Cout % t == 0:
                tn = t
                break
            t -= 128

    # row band tile (largest divisor of Ho fitting the VMEM budget)
    TRo = 1
    for cand in range(Ho, 0, -1):
        if Ho % cand:
            continue
        est = ((cand + kh - 1) * Wp * Cin_p * 2 + cand * Wo * tn * 6 +
               kh * kw * Cin_p * tn * 2)
        if est <= 6 * 1024 * 1024:
            TRo = cand
            break
    NB = Ho // TRo
    TRi = TRo + kh - 1
    if NB == 1:
        bands = xp                                    # (B, Hp, Wp, Cin_p), Hp == TRi
    else:
        bands = jnp.concatenate(
            [xp[:, i * TRo:i * TRo + TRi][:, None] for i in range(NB)], axis=1)
        bands = bands.reshape(B * NB, TRi, Wp, Cin_p)
    NBtot = B * NB

    bb = b.astype(jnp.float32).reshape(1, Cout)
    inputs = [bands, wb, bb]
    in_specs = [
        pl.BlockSpec((1, TRi, Wp, Cin_p), lambda i, j: (i, 0, 0, 0)),
        pl.BlockSpec((kh, kw, Cin_p, tn), lambda i, j: (0, 0, 0, j)),
        pl.BlockSpec((1, tn), lambda i, j: (0, j)),
    ]
    has_add = add is not None
    if has_add:
        ab = add.astype(jnp.bfloat16).reshape(NBtot, TRo * Wo, Cout)
        inputs.append(ab)
        in_specs.append(pl.BlockSpec((1, TRo * Wo, tn), lambda i, j: (i, 0, j)))

    out_shapes = [jax.ShapeDtypeStruct((NBtot, TRo * Wo, Cout), out_dtype)]
    out_specs = [pl.BlockSpec((1, TRo * Wo, tn), lambda i, j: (i, 0, j))]
    if emit_stats:
        out_shapes += [jax.ShapeDtypeStruct((NBtot, 1, Cout), jnp.float32)] * 2
        out_specs += [pl.BlockSpec((1, 1, tn), lambda i, j: (i, 0, j))] * 2

    res = pl.pallas_call(
        functools.partial(_conv_kernel, kh=kh, kw=kw, tro=TRo, wo=Wo,
                          has_add=has_add, act=act, emit_stats=emit_stats),
        out_shape=tuple(out_shapes) if emit_stats else out_shapes[0],
        grid=(NBtot, Cout // tn),
        in_specs=in_specs,
        out_specs=tuple(out_specs) if emit_stats else out_specs[0],
        compiler_params=pltpu.CompilerParams(
            dimension_semantics=("parallel", "parallel"),
            vmem_limit_bytes=_VMEM_LIMIT),
    )(*inputs)

    if emit_stats:
        out, s1, s2 = res
    else:
        out = res
    out = out.reshape(B, Ho, Wo, Cout)
    if emit_stats:
        cs = s1.reshape(B, NB, Cout).sum(axis=1)
        cs2 = s2.reshape(B, NB, Cout).sum(axis=1)
        return out, cs, cs2
    return out


def conv1x1(x, w, b, add=None, act=None, out_dtype=jnp.bfloat16):
    B, H, W, Cin = x.shape
    y = matmul_fused(x.reshape(B * H * W, Cin), w, b, add=add, act=act,
                     out_dtype=out_dtype)
    return y.reshape(B, H, W, w.shape[1])


# ----------------------------------------------------------------------------- #
# GroupNorm (+ fused temb add / swish)
# ----------------------------------------------------------------------------- #
def _gn_stats_kernel(x_ref, s1_ref, s2_ref):
    @pl.when(pl.program_id(1) == 0)
    def _():
        s1_ref[...] = jnp.zeros_like(s1_ref)
        s2_ref[...] = jnp.zeros_like(s2_ref)

    x = x_ref[0].astype(jnp.float32)                       # (TR, C)
    s1_ref[...] += jnp.sum(x, axis=0, keepdims=True)[None]
    s2_ref[...] += jnp.sum(x * x, axis=0, keepdims=True)[None]


def _affine_act_kernel(x_ref, sc_ref, sh_ref, o_ref, *, act):
    y = x_ref[0].astype(jnp.float32) * sc_ref[0] + sh_ref[0]
    if act:
        y = _swish(y)
    o_ref[0] = y.astype(o_ref.dtype)


def group_norm_swish(x, gamma, beta, temb=None, num_groups=32, eps=1e-6,
                     act=True, out_dtype=jnp.bfloat16, channel_sums=None):
    """GroupNorm(32, C, eps) on NHWC input with optional fused per-(B,C) temb add
    (folded analytically into the statistics + shift) and fused swish.  If
    channel_sums=(sum, sumsq) is supplied (from the producing conv's epilogue)
    the statistics pass over HBM is skipped entirely."""
    B, H, W, C = x.shape
    G = num_groups
    assert C % G == 0, "channel count must be divisible by num_groups"
    cpg = C // G
    HW = H * W
    TR = _divisor_tile(HW, 1024)
    xr = x.reshape(B, HW, C)

    if channel_sums is None:
        # TODO(synk): for C < 128 (toy configs) the lane dim is masked; the real
        # model has C >= 128 so the GN passes are lane-dense there.
        s1, s2 = pl.pallas_call(
            _gn_stats_kernel,
            out_shape=(jax.ShapeDtypeStruct((B, 1, C), jnp.float32),
                       jax.ShapeDtypeStruct((B, 1, C), jnp.float32)),
            grid=(B, HW // TR),
            in_specs=[pl.BlockSpec((1, TR, C), lambda b, r: (b, r, 0))],
            out_specs=(pl.BlockSpec((1, 1, C), lambda b, r: (b, 0, 0)),
                       pl.BlockSpec((1, 1, C), lambda b, r: (b, 0, 0))),
            compiler_params=pltpu.CompilerParams(
                dimension_semantics=("parallel", "arbitrary"),
                vmem_limit_bytes=_VMEM_LIMIT),
        )(xr)
        cs = s1[:, 0, :]
        cs2 = s2[:, 0, :]
    else:
        cs, cs2 = channel_sums

    # Fold the (B, C) timestep-embedding broadcast add into the statistics:
    # sum(x+t) = sum(x) + HW*t ; sum((x+t)^2) = sum(x^2) + 2 t sum(x) + HW t^2.
    if temb is not None:
        cs2 = cs2 + 2.0 * temb * cs + float(HW) * temb * temb
        cs = cs + float(HW) * temb

    n = float(HW * cpg)
    gs = cs.reshape(B, G, cpg).sum(-1)
    gs2 = cs2.reshape(B, G, cpg).sum(-1)
    mean = gs / n
    var = jnp.maximum(gs2 / n - mean * mean, 0.0)
    inv = jax.lax.rsqrt(var + eps)
    mean_c = jnp.repeat(mean, cpg, axis=1)                 # (B, C)
    inv_c = jnp.repeat(inv, cpg, axis=1)
    scale = inv_c * gamma[None, :]
    t_add = temb if temb is not None else 0.0
    shift = (t_add - mean_c) * scale + beta[None, :]       # absorbs temb + mean + beta

    out = pl.pallas_call(
        functools.partial(_affine_act_kernel, act=act),
        out_shape=jax.ShapeDtypeStruct((B, HW, C), out_dtype),
        grid=(B, HW // TR),
        in_specs=[pl.BlockSpec((1, TR, C), lambda b, r: (b, r, 0)),
                  pl.BlockSpec((1, 1, C), lambda b, r: (b, 0, 0)),
                  pl.BlockSpec((1, 1, C), lambda b, r: (b, 0, 0))],
        out_specs=pl.BlockSpec((1, TR, C), lambda b, r: (b, r, 0)),
        compiler_params=pltpu.CompilerParams(
            dimension_semantics=("parallel", "parallel"),
            vmem_limit_bytes=_VMEM_LIMIT),
    )(xr, scale.reshape(B, 1, C), shift.reshape(B, 1, C))
    return out.reshape(B, H, W, C)


# ----------------------------------------------------------------------------- #
# flash attention (online softmax over KV tiles; optional packed-qkv reads)
# ----------------------------------------------------------------------------- #
def _flash_kernel(q_ref, k_ref, v_ref, o_ref, m_sc, l_sc, acc_sc):
    kv = pl.program_id(2)

    @pl.when(kv == 0)
    def _():
        m_sc[...] = jnp.full_like(m_sc, -jnp.inf)
        l_sc[...] = jnp.zeros_like(l_sc)
        acc_sc[...] = jnp.zeros_like(acc_sc)

    q = q_ref[0]                                           # (tq, C) bf16
    k = k_ref[0]                                           # (tk, C) bf16
    s = jax.lax.dot_general(q, k, (((1,), (1,)), ((), ())),
                            preferred_element_type=jnp.float32)   # (tq, tk)
    m_new = jnp.maximum(m_sc[...], jnp.max(s, axis=-1, keepdims=True))
    alpha = jnp.exp(m_sc[...] - m_new)
    p = jnp.exp(s - m_new)
    l_sc[...] = alpha * l_sc[...] + jnp.sum(p, axis=-1, keepdims=True)
    acc_sc[...] = alpha * acc_sc[...] + jnp.dot(
        p.astype(v_ref.dtype), v_ref[0], preferred_element_type=jnp.float32)
    m_sc[...] = m_new

    @pl.when(kv == pl.num_programs(2) - 1)
    def _():
        o_ref[0] = (acc_sc[...] *
                    pl.reciprocal(l_sc[...], approx=True)).astype(o_ref.dtype)


def flash_attention(q, k, v, head_dim, packed=False, out_dtype=jnp.bfloat16):
    """If packed: q=k=v is the fused (B,HW,3C) qkv tensor and BlockSpec index
    maps pick last-dim block 0/1/2 (no XLA slice copies)."""
    B, HW = q.shape[0], q.shape[1]
    C = head_dim
    tq = _divisor_tile(HW, 512)
    tk = _divisor_tile(HW, 512)
    if packed:
        q_map = lambda b, qi, ki: (b, qi, 0)
        k_map = lambda b, qi, ki: (b, ki, 1)
        v_map = lambda b, qi, ki: (b, ki, 2)
    else:
        q_map = lambda b, qi, ki: (b, qi, 0)
        k_map = lambda b, qi, ki: (b, ki, 0)
        v_map = lambda b, qi, ki: (b, ki, 0)
    return pl.pallas_call(
        _flash_kernel,
        out_shape=jax.ShapeDtypeStruct((B, HW, C), out_dtype),
        grid=(B, HW // tq, HW // tk),
        in_specs=[pl.BlockSpec((1, tq, C), q_map),
                  pl.BlockSpec((1, tk, C), k_map),
                  pl.BlockSpec((1, tk, C), v_map)],
        out_specs=pl.BlockSpec((1, tq, C), lambda b, qi, ki: (b, qi, 0)),
        scratch_shapes=[pltpu.VMEM((tq, 1), jnp.float32),
                        pltpu.VMEM((tq, 1), jnp.float32),
                        pltpu.VMEM((tq, C), jnp.float32)],
        compiler_params=pltpu.CompilerParams(
            dimension_semantics=("parallel", "parallel", "arbitrary"),
            vmem_limit_bytes=_VMEM_LIMIT),
    )(q, k, v)


# ----------------------------------------------------------------------------- #
# layers
# ----------------------------------------------------------------------------- #
def get_timestep_embedding(t, embedding_dim):
    half_dim = embedding_dim // 2
    emb = math.log(10000) / (half_dim - 1)
    emb = jnp.exp(jnp.arange(half_dim, dtype=jnp.float32) * -emb)
    emb = t.astype(jnp.float32)[:, None] * emb[None, :]
    emb = jnp.concatenate([jnp.sin(emb), jnp.cos(emb)], axis=1)
    if embedding_dim % 2 == 1:
        emb = jnp.pad(emb, ((0, 0), (0, 1)))
    return emb


def resnet_block(x, temb_sw, p):
    """temb_sw is swish(temb), precomputed once.  dropout=0.0 (eval) -> identity."""
    h = group_norm_swish(x, p["norm1_g"], p["norm1_b"], act=True)          # bf16
    # conv1 also emits channel sum/sumsq so GN2 needs no stats pass over HBM.
    h, cs, cs2 = conv2d(h, p["conv1_w"], p["conv1_b"], emit_stats=True)
    t_proj = None
    if temb_sw is not None:
        # tiny (B, Cout) matmul: plain XLA, a Pallas launch would be pure overhead
        t_proj = temb_sw @ p["temb_w"] + p["temb_b"]
    # temb broadcast-add folded analytically into the GN2 statistics/shift.
    h = group_norm_swish(h, p["norm2_g"], p["norm2_b"], temb=t_proj, act=True,
                         channel_sums=(cs, cs2))
    # TODO(synk): dropout=0.0 (eval) -> identity; stochastic dropout not implemented.
    if p["nin_w"] is not None:
        shortcut = conv1x1(x, p["nin_w"], p["nin_b"])
    else:
        shortcut = x.astype(jnp.bfloat16)
    return conv2d(h, p["conv2_w"], p["conv2_b"], add=shortcut)             # residual fused


def attn_block(x, p):
    B, H, W, C = x.shape
    HW = H * W
    h = group_norm_swish(x, p["norm_g"], p["norm_b"], act=False)           # bf16, no swish
    hf = h.reshape(B * HW, C)
    scale = float(C) ** (-0.5)
    if C % 128 == 0:
        # fused QKV projection; flash reads directly from the packed tensor.
        w_qkv = jnp.concatenate([p["q_w"] * scale, p["k_w"], p["v_w"]], axis=1)
        b_qkv = jnp.concatenate([p["q_b"] * scale, p["k_b"], p["v_b"]])
        qkv = matmul_fused(hf, w_qkv, b_qkv).reshape(B, HW, 3 * C)
        o = flash_attention(qkv, qkv, qkv, head_dim=C, packed=True)
    else:
        # small-C fallback: three un-padded matmuls, no slice copies.
        q = matmul_fused(hf, p["q_w"] * scale, p["q_b"] * scale).reshape(B, HW, C)
        k = matmul_fused(hf, p["k_w"], p["k_b"]).reshape(B, HW, C)
        v = matmul_fused(hf, p["v_w"], p["v_b"]).reshape(B, HW, C)
        o = flash_attention(q, k, v, head_dim=C, packed=False)
    o = matmul_fused(o.reshape(B * HW, C), p["proj_w"], p["proj_b"],
                     add=x.reshape(B * HW, C).astype(jnp.bfloat16))        # residual fused
    return o.reshape(B, H, W, C)


def downsample(x, p):
    # torch: pad (left=0,right=1,top=0,bottom=1) then 3x3 conv stride 2, padding 0
    # TODO(synk): stride-2 conv still uses an im2col matmul (~2.25x traffic); a
    # phase-decomposed fused kernel would remove it.
    return _conv2d_im2col(x, p["w"], p["b"], stride=2, padding=((0, 1), (0, 1)))


def upsample(x, p):
    # TODO(synk): nearest-neighbour x2 is still a materialized 4x bf16 copy;
    # fusing it into the conv's input indexing would remove the blowup.
    xb = jnp.repeat(jnp.repeat(x.astype(jnp.bfloat16), 2, axis=1), 2, axis=2)
    return conv2d(xb, p["w"], p["b"])


# ----------------------------------------------------------------------------- #
# Deterministic parameter initialization (mirrors Model.__init__ shapes)
# ----------------------------------------------------------------------------- #
class ParamInit:
    def __init__(self, seed):
        self.key = jax.random.PRNGKey(seed)

    def normal(self, shape, scale=0.05):
        self.key, sub = jax.random.split(self.key)
        return scale * jax.random.normal(sub, shape, jnp.float32)


def init_resnet(pi, cin, cout, temb_ch):
    return dict(
        norm1_g=jnp.ones((cin,), jnp.float32), norm1_b=jnp.zeros((cin,), jnp.float32),
        conv1_w=pi.normal((3, 3, cin, cout)), conv1_b=jnp.zeros((cout,), jnp.float32),
        temb_w=pi.normal((temb_ch, cout)), temb_b=jnp.zeros((cout,), jnp.float32),
        norm2_g=jnp.ones((cout,), jnp.float32), norm2_b=jnp.zeros((cout,), jnp.float32),
        conv2_w=pi.normal((3, 3, cout, cout)), conv2_b=jnp.zeros((cout,), jnp.float32),
        nin_w=pi.normal((cin, cout)) if cin != cout else None,
        nin_b=jnp.zeros((cout,), jnp.float32) if cin != cout else None,
    )


def init_attn(pi, c):
    z = jnp.zeros((c,), jnp.float32)
    return dict(
        norm_g=jnp.ones((c,), jnp.float32), norm_b=z,
        q_w=pi.normal((c, c)), q_b=z,
        k_w=pi.normal((c, c)), k_b=z,
        v_w=pi.normal((c, c)), v_b=z,
        proj_w=pi.normal((c, c)), proj_b=z,
    )


def init_model(pi, *, ch, out_ch, ch_mult, num_res_blocks, attn_resolutions,
               in_channels, resolution):
    temb_ch = ch * 4
    num_resolutions = len(ch_mult)
    params = dict(
        temb_dense0_w=pi.normal((ch, temb_ch)), temb_dense0_b=jnp.zeros((temb_ch,), jnp.float32),
        temb_dense1_w=pi.normal((temb_ch, temb_ch)), temb_dense1_b=jnp.zeros((temb_ch,), jnp.float32),
        conv_in_w=pi.normal((3, 3, in_channels, ch)), conv_in_b=jnp.zeros((ch,), jnp.float32),
    )
    curr_res = resolution
    in_ch_mult = (1,) + tuple(ch_mult)
    down = []
    block_in = ch
    for i_level in range(num_resolutions):
        blocks, attns = [], []
        block_in = ch * in_ch_mult[i_level]
        block_out = ch * ch_mult[i_level]
        for _ in range(num_res_blocks):
            blocks.append(init_resnet(pi, block_in, block_out, temb_ch))
            block_in = block_out
            if curr_res in attn_resolutions:
                attns.append(init_attn(pi, block_in))
        lvl = dict(block=blocks, attn=attns)
        if i_level != num_resolutions - 1:
            lvl["downsample"] = dict(w=pi.normal((3, 3, block_in, block_in)),
                                     b=jnp.zeros((block_in,), jnp.float32))
            curr_res //= 2
        down.append(lvl)
    params["down"] = down
    params["mid_block1"] = init_resnet(pi, block_in, block_in, temb_ch)
    params["mid_attn"] = init_attn(pi, block_in)
    params["mid_block2"] = init_resnet(pi, block_in, block_in, temb_ch)
    up = []
    for i_level in reversed(range(num_resolutions)):
        blocks, attns = [], []
        block_out = ch * ch_mult[i_level]
        skip_in = ch * ch_mult[i_level]
        for i_block in range(num_res_blocks + 1):
            if i_block == num_res_blocks:
                skip_in = ch * in_ch_mult[i_level]
            blocks.append(init_resnet(pi, block_in + skip_in, block_out, temb_ch))
            block_in = block_out
            if curr_res in attn_resolutions:
                attns.append(init_attn(pi, block_in))
        lvl = dict(block=blocks, attn=attns)
        if i_level != 0:
            lvl["upsample"] = dict(w=pi.normal((3, 3, block_in, block_in)),
                                   b=jnp.zeros((block_in,), jnp.float32))
            curr_res *= 2
        up.insert(0, lvl)
    params["up"] = up
    params["norm_out_g"] = jnp.ones((block_in,), jnp.float32)
    params["norm_out_b"] = jnp.zeros((block_in,), jnp.float32)
    params["conv_out_w"] = pi.normal((3, 3, block_in, out_ch))
    params["conv_out_b"] = jnp.zeros((out_ch,), jnp.float32)
    return params


# ----------------------------------------------------------------------------- #
# Model forward (mirrors Model.forward exactly)
# ----------------------------------------------------------------------------- #
def model_forward(params, x_nchw, t, cfg):
    # layout: input NCHW (PyTorch) -> NHWC internal -> output NCHW
    x = jnp.transpose(x_nchw, (0, 2, 3, 1)).astype(jnp.float32)
    ch = cfg["ch"]
    num_resolutions = len(cfg["ch_mult"])
    num_res_blocks = cfg["num_res_blocks"]

    # timestep embedding (tiny matmuls kept in plain XLA); the reference only ever
    # consumes nonlinearity(temb), so swish(temb) is computed once and shared.
    emb = get_timestep_embedding(t, ch)
    temb = emb @ params["temb_dense0_w"] + params["temb_dense0_b"]
    temb = temb * jax.nn.sigmoid(temb)
    temb = temb @ params["temb_dense1_w"] + params["temb_dense1_b"]
    temb_sw = temb * jax.nn.sigmoid(temb)

    # downsampling (skip activations kept in bf16)
    hs = [conv2d(x, params["conv_in_w"], params["conv_in_b"])]
    for i_level in range(num_resolutions):
        lvl = params["down"][i_level]
        for i_block in range(num_res_blocks):
            h = resnet_block(hs[-1], temb_sw, lvl["block"][i_block])
            if len(lvl["attn"]) > 0:
                h = attn_block(h, lvl["attn"][i_block])
            hs.append(h)
        if i_level != num_resolutions - 1:
            hs.append(downsample(hs[-1], lvl["downsample"]))

    # middle
    h = hs[-1]
    h = resnet_block(h, temb_sw, params["mid_block1"])
    h = attn_block(h, params["mid_attn"])
    h = resnet_block(h, temb_sw, params["mid_block2"])

    # upsampling
    for i_level in reversed(range(num_resolutions)):
        lvl = params["up"][i_level]
        for i_block in range(num_res_blocks + 1):
            skip = hs.pop()
            # TODO(synk): the skip concat is still one HBM copy; splitting the first
            # conv's K-reduction over the two sources would remove it.
            h = resnet_block(jnp.concatenate([h, skip], axis=-1), temb_sw,
                             lvl["block"][i_block])
            if len(lvl["attn"]) > 0:
                h = attn_block(h, lvl["attn"][i_block])
        if i_level != 0:
            h = upsample(h, lvl["upsample"])

    # end
    h = group_norm_swish(h, params["norm_out_g"], params["norm_out_b"], act=True)
    h = conv2d(h, params["conv_out_w"], params["conv_out_b"], out_dtype=jnp.float32)
    return jnp.transpose(h, (0, 3, 1, 2))


# ----------------------------------------------------------------------------- #
if __name__ == "__main__":
    cfg = dict(ch=32, out_ch=4, ch_mult=(1, 2), num_res_blocks=1,
               attn_resolutions=(8,), in_channels=4, resolution=16)

    pi = ParamInit(42)
    params = init_model(pi, **cfg)

    key = jax.random.PRNGKey(0)
    kx, _ = jax.random.split(key)
    B = 2
    x = jax.random.normal(kx, (B, cfg["in_channels"], cfg["resolution"], cfg["resolution"]),
                          jnp.float32)
    t = jnp.array([3, 7], dtype=jnp.int32)

    y = model_forward(params, x, t, cfg)
    y = jax.block_until_ready(y)
    assert y.shape == (B, cfg["out_ch"], cfg["resolution"], cfg["resolution"])
    assert jnp.all(jnp.isfinite(y))
    print("KERNEL_OK")
</pallas_src>

<mosaic_0001>
module attributes {stable_mosaic.version = 11 : i64} {
  func.func @_conv_kernel(%arg0: i32, %arg1: i32, %arg2: memref<1x18x18x8xbf16, #tpu.memory_space<vmem>>, %arg3: memref<3x3x8x32xbf16, #tpu.memory_space<vmem>>, %arg4: memref<1x32xf32, #tpu.memory_space<vmem>>, %arg5: memref<1x256x32xbf16, #tpu.memory_space<vmem>>) attributes {dimension_semantics = [#tpu.dimension_semantics<parallel>, #tpu.dimension_semantics<parallel>], iteration_bounds = array<i64: 2, 1>, scalar_prefetch = 0 : i64, scratch_operands = 0 : i64, tpu.core_type = #tpu.core_type<tc>, window_params = [{transform_indices = @transform_0, window_bounds = array<i64: 1, 18, 18, 8>}, {transform_indices = @transform_1, window_bounds = array<i64: 3, 3, 8, 32>}, {transform_indices = @transform_2, window_bounds = array<i64: 1, 32>}, {transform_indices = @transform_3, window_bounds = array<i64: 1, 256, 32>}]} {
    %c0 = arith.constant 0 : index
    %c0_0 = arith.constant 0 : index
    %c0_1 = arith.constant 0 : index
    %c0_2 = arith.constant 0 : index
    %0 = vector.load %arg2[%c0, %c0_0, %c0_1, %c0_2] : memref<1x18x18x8xbf16, #tpu.memory_space<vmem>>, vector<1x16x16x8xbf16>
    %1 = vector.shape_cast %0 : vector<1x16x16x8xbf16> to vector<16x16x8xbf16>
    %2 = vector.shape_cast %1 : vector<16x16x8xbf16> to vector<256x8xbf16>
    %c0_3 = arith.constant 0 : index
    %c0_4 = arith.constant 0 : index
    %c0_5 = arith.constant 0 : index
    %c0_6 = arith.constant 0 : index
    %3 = vector.load %arg3[%c0_3, %c0_4, %c0_5, %c0_6] : memref<3x3x8x32xbf16, #tpu.memory_space<vmem>>, vector<1x1x8x32xbf16>
    %4 = vector.shape_cast %3 : vector<1x1x8x32xbf16> to vector<8x32xbf16>
    %cst = arith.constant dense<0.000000e+00> : vector<256x32xf32>
    %5 = tpu.matmul %2, %4, %cst {dimension_numbers = #tpu.dot_dimension_numbers<[1], [0], [0], [1], [0, 0, 1, 1], [], []>} : vector<256x8xbf16>, vector<8x32xbf16>, vector<256x32xf32> -> vector<256x32xf32>
    %c0_7 = arith.constant 0 : index
    %c0_8 = arith.constant 0 : index
    %c1 = arith.constant 1 : index
    %c0_9 = arith.constant 0 : index
    %6 = vector.load %arg2[%c0_7, %c0_8, %c1, %c0_9] : memref<1x18x18x8xbf16, #tpu.memory_space<vmem>>, vector<1x16x16x8xbf16>
    %7 = vector.shape_cast %6 : vector<1x16x16x8xbf16> to vector<16x16x8xbf16>
    %8 = vector.shape_cast %7 : vector<16x16x8xbf16> to vector<256x8xbf16>
    %c0_10 = arith.constant 0 : index
    %c1_11 = arith.constant 1 : index
    %c0_12 = arith.constant 0 : index
    %c0_13 = arith.constant 0 : index
    %9 = vector.load %arg3[%c0_10, %c1_11, %c0_12, %c0_13] : memref<3x3x8x32xbf16, #tpu.memory_space<vmem>>, vector<1x1x8x32xbf16>
    %10 = vector.shape_cast %9 : vector<1x1x8x32xbf16> to vector<8x32xbf16>
    %cst_14 = arith.constant dense<0.000000e+00> : vector<256x32xf32>
    %11 = tpu.matmul %8, %10, %cst_14 {dimension_numbers = #tpu.dot_dimension_numbers<[1], [0], [0], [1], [0, 0, 1, 1], [], []>} : vector<256x8xbf16>, vector<8x32xbf16>, vector<256x32xf32> -> vector<256x32xf32>
    %12 = arith.addf %5, %11 : vector<256x32xf32>
    %c0_15 = arith.constant 0 : index
    %c0_16 = arith.constant 0 : index
    %c2 = arith.constant 2 : index
    %c0_17 = arith.constant 0 : index
    %13 = vector.load %arg2[%c0_15, %c0_16, %c2, %c0_17] : memref<1x18x18x8xbf16, #tpu.memory_space<vmem>>, vector<1x16x16x8xbf16>
    %14 = vector.shape_cast %13 : vector<1x16x16x8xbf16> to vector<16x16x8xbf16>
    %15 = vector.shape_cast %14 : vector<16x16x8xbf16> to vector<256x8xbf16>
    %c0_18 = arith.constant 0 : index
    %c2_19 = arith.constant 2 : index
    %c0_20 = arith.constant 0 : index
    %c0_21 = arith.constant 0 : index
    %16 = vector.load %arg3[%c0_18, %c2_19, %c0_20, %c0_21] : memref<3x3x8x32xbf16, #tpu.memory_space<vmem>>, vector<1x1x8x32xbf16>
    %17 = vector.shape_cast %16 : vector<1x1x8x32xbf16> to vector<8x32xbf16>
    %cst_22 = arith.constant dense<0.000000e+00> : vector<256x32xf32>
    %18 = tpu.matmul %15, %17, %cst_22 {dimension_numbers = #tpu.dot_dimension_numbers<[1], [0], [0], [1], [0, 0, 1, 1], [], []>} : vector<256x8xbf16>, vector<8x32xbf16>, vector<256x32xf32> -> vector<256x32xf32>
    %19 = arith.addf %12, %18 : vector<256x32xf32>
    %c0_23 = arith.constant 0 : index
    %c1_24 = arith.constant 1 : index
    %c0_25 = arith.constant 0 : index
    %c0_26 = arith.constant 0 : index
    %20 = vector.load %arg2[%c0_23, %c1_24, %c0_25, %c0_26] : memref<1x18x18x8xbf16, #tpu.memory_space<vmem>>, vector<1x16x16x8xbf16>
    %21 = vector.shape_cast %20 : vector<1x16x16x8xbf16> to vector<16x16x8xbf16>
    %22 = vector.shape_cast %21 : vector<16x16x8xbf16> to vector<256x8xbf16>
    %c1_27 = arith.constant 1 : index
    %c0_28 = arith.constant 0 : index
    %c0_29 = arith.constant 0 : index
    %c0_30 = arith.constant 0 : index
    %23 = vector.load %arg3[%c1_27, %c0_28, %c0_29, %c0_30] : memref<3x3x8x32xbf16, #tpu.memory_space<vmem>>, vector<1x1x8x32xbf16>
    %24 = vector.shape_cast %23 : vector<1x1x8x32xbf16> to vector<8x32xbf16>
    %cst_31 = arith.constant dense<0.000000e+00> : vector<256x32xf32>
    %25 = tpu.matmul %22, %24, %cst_31 {dimension_numbers = #tpu.dot_dimension_numbers<[1], [0], [0], [1], [0, 0, 1, 1], [], []>} : vector<256x8xbf16>, vector<8x32xbf16>, vector<256x32xf32> -> vector<256x32xf32>
    %26 = arith.addf %19, %25 : vector<256x32xf32>
    %c0_32 = arith.constant 0 : index
    %c1_33 = arith.constant 1 : index
    %c1_34 = arith.constant 1 : index
    %c0_35 = arith.constant 0 : index
    %27 = vector.load %arg2[%c0_32, %c1_33, %c1_34, %c0_35] : memref<1x18x18x8xbf16, #tpu.memory_space<vmem>>, vector<1x16x16x8xbf16>
    %28 = vector.shape_cast %27 : vector<1x16x16x8xbf16> to vector<16x16x8xbf16>
    %29 = vector.shape_cast %28 : vector<16x16x8xbf16> to vector<256x8xbf16>
    %c1_36 = arith.constant 1 : index
    %c1_37 = arith.constant 1 : index
    %c0_38 = arith.constant 0 : index
    %c0_39 = arith.constant 0 : index
    %30 = vector.load %arg3[%c1_36, %c1_37, %c0_38, %c0_39] : memref<3x3x8x32xbf16, #tpu.memory_space<vmem>>, vector<1x1x8x32xbf16>
    %31 = vector.shape_cast %30 : vector<1x1x8x32xbf16> to vector<8x32xbf16>
    %cst_40 = arith.constant dense<0.000000e+00> : vector<256x32xf32>
    %32 = tpu.matmul %29, %31, %cst_40 {dimension_numbers = #tpu.dot_dimension_numbers<[1], [0], [0], [1], [0, 0, 1, 1], [], []>} : vector<256x8xbf16>, vector<8x32xbf16>, vector<256x32xf32> -> vector<256x32xf32>
    %33 = arith.addf %26, %32 : vector<256x32xf32>
    %c0_41 = arith.constant 0 : index
    %c1_42 = arith.constant 1 : index
    %c2_43 = arith.constant 2 : index
    %c0_44 = arith.constant 0 : index
    %34 = vector.load %arg2[%c0_41, %c1_42, %c2_43, %c0_44] : memref<1x18x18x8xbf16, #tpu.memory_space<vmem>>, vector<1x16x16x8xbf16>
    %35 = vector.shape_cast %34 : vector<1x16x16x8xbf16> to vector<16x16x8xbf16>
    %36 = vector.shape_cast %35 : vector<16x16x8xbf16> to vector<256x8xbf16>
    %c1_45 = arith.constant 1 : index
    %c2_46 = arith.constant 2 : index
    %c0_47 = arith.constant 0 : index
    %c0_48 = arith.constant 0 : index
    %37 = vector.load %arg3[%c1_45, %c2_46, %c0_47, %c0_48] : memref<3x3x8x32xbf16, #tpu.memory_space<vmem>>, vector<1x1x8x32xbf16>
    %38 = vector.shape_cast %37 : vector<1x1x8x32xbf16> to vector<8x32xbf16>
    %cst_49 = arith.constant dense<0.000000e+00> : vector<256x32xf32>
    %39 = tpu.matmul %36, %38, %cst_49 {dimension_numbers = #tpu.dot_dimension_numbers<[1], [0], [0], [1], [0, 0, 1, 1], [], []>} : vector<256x8xbf16>, vector<8x32xbf16>, vector<256x32xf32> -> vector<256x32xf32>
    %40 = arith.addf %33, %39 : vector<256x32xf32>
    %c0_50 = arith.constant 0 : index
    %c2_51 = arith.constant 2 : index
    %c0_52 = arith.constant 0 : index
    %c0_53 = arith.constant 0 : index
    %41 = vector.load %arg2[%c0_50, %c2_51, %c0_52, %c0_53] : memref<1x18x18x8xbf16, #tpu.memory_space<vmem>>, vector<1x16x16x8xbf16>
    %42 = vector.shape_cast %41 : vector<1x16x16x8xbf16> to vector<16x16x8xbf16>
    %43 = vector.shape_cast %42 : vector<16x16x8xbf16> to vector<256x8xbf16>
    %c2_54 = arith.constant 2 : index
    %c0_55 = arith.constant 0 : index
    %c0_56 = arith.constant 0 : index
    %c0_57 = arith.constant 0 : index
    %44 = vector.load %arg3[%c2_54, %c0_55, %c0_56, %c0_57] : memref<3x3x8x32xbf16, #tpu.memory_space<vmem>>, vector<1x1x8x32xbf16>
    %45 = vector.shape_cast %44 : vector<1x1x8x32xbf16> to vector<8x32xbf16>
    %cst_58 = arith.constant dense<0.000000e+00> : vector<256x32xf32>
    %46 = tpu.matmul %43, %45, %cst_58 {dimension_numbers = #tpu.dot_dimension_numbers<[1], [0], [0], [1], [0, 0, 1, 1], [], []>} : vector<256x8xbf16>, vector<8x32xbf16>, vector<256x32xf32> -> vector<256x32xf32>
    %47 = arith.addf %40, %46 : vector<256x32xf32>
    %c0_59 = arith.constant 0 : index
    %c2_60 = arith.constant 2 : index
    %c1_61 = arith.constant 1 : index
    %c0_62 = arith.constant 0 : index
    %48 = vector.load %arg2[%c0_59, %c2_60, %c1_61, %c0_62] : memref<1x18x18x8xbf16, #tpu.memory_space<vmem>>, vector<1x16x16x8xbf16>
    %49 = vector.shape_cast %48 : vector<1x16x16x8xbf16> to vector<16x16x8xbf16>
    %50 = vector.shape_cast %49 : vector<16x16x8xbf16> to vector<256x8xbf16>
    %c2_63 = arith.constant 2 : index
    %c1_64 = arith.constant 1 : index
    %c0_65 = arith.constant 0 : index
    %c0_66 = arith.constant 0 : index
    %51 = vector.load %arg3[%c2_63, %c1_64, %c0_65, %c0_66] : memref<3x3x8x32xbf16, #tpu.memory_space<vmem>>, vector<1x1x8x32xbf16>
    %52 = vector.shape_cast %51 : vector<1x1x8x32xbf16> to vector<8x32xbf16>
    %cst_67 = arith.constant dense<0.000000e+00> : vector<256x32xf32>
    %53 = tpu.matmul %50, %52, %cst_67 {dimension_numbers = #tpu.dot_dimension_numbers<[1], [0], [0], [1], [0, 0, 1, 1], [], []>} : vector<256x8xbf16>, vector<8x32xbf16>, vector<256x32xf32> -> vector<256x32xf32>
    %54 = arith.addf %47, %53 : vector<256x32xf32>
    %c0_68 = arith.constant 0 : index
    %c2_69 = arith.constant 2 : index
    %c2_70 = arith.constant 2 : index
    %c0_71 = arith.constant 0 : index
    %55 = vector.load %arg2[%c0_68, %c2_69, %c2_70, %c0_71] : memref<1x18x18x8xbf16, #tpu.memory_space<vmem>>, vector<1x16x16x8xbf16>
    %56 = vector.shape_cast %55 : vector<1x16x16x8xbf16> to vector<16x16x8xbf16>
    %57 = vector.shape_cast %56 : vector<16x16x8xbf16> to vector<256x8xbf16>
    %c2_72 = arith.constant 2 : index
    %c2_73 = arith.constant 2 : index
    %c0_74 = arith.constant 0 : index
    %c0_75 = arith.constant 0 : index
    %58 = vector.load %arg3[%c2_72, %c2_73, %c0_74, %c0_75] : memref<3x3x8x32xbf16, #tpu.memory_space<vmem>>, vector<1x1x8x32xbf16>
    %59 = vector.shape_cast %58 : vector<1x1x8x32xbf16> to vector<8x32xbf16>
    %cst_76 = arith.constant dense<0.000000e+00> : vector<256x32xf32>
    %60 = tpu.matmul %57, %59, %cst_76 {dimension_numbers = #tpu.dot_dimension_numbers<[1], [0], [0], [1], [0, 0, 1, 1], [], []>} : vector<256x8xbf16>, vector<8x32xbf16>, vector<256x32xf32> -> vector<256x32xf32>
    %61 = arith.addf %54, %60 : vector<256x32xf32>
    %c0_77 = arith.constant 0 : index
    %c0_78 = arith.constant 0 : index
    %62 = vector.load %arg4[%c0_77, %c0_78] : memref<1x32xf32, #tpu.memory_space<vmem>>, vector<1x32xf32>
    %63 = vector.broadcast %62 : vector<1x32xf32> to vector<256x32xf32>
    %64 = arith.addf %61, %63 : vector<256x32xf32>
    %65 = arith.truncf %64 : vector<256x32xf32> to vector<256x32xbf16>
    %c0_79 = arith.constant 0 : index
    %c0_80 = arith.constant 0 : index
    %c0_81 = arith.constant 0 : index
    %66 = vector.load %arg5[%c0_79, %c0_80, %c0_81] : memref<1x256x32xbf16, #tpu.memory_space<vmem>>, vector<1x256x32xbf16>
    %67 = vector.shape_cast %66 : vector<1x256x32xbf16> to vector<256x32xbf16>
    %68 = vector.shape_cast %65 : vector<256x32xbf16> to vector<1x256x32xbf16>
    tpu.vector_store %arg5[%c0_79, %c0_80, %c0_81], %68 {strides = array<i32>} : memref<1x256x32xbf16, #tpu.memory_space<vmem>>, vector<1x256x32xbf16>,
    return
  }
  func.func @transform_0(%arg0: i32, %arg1: i32) -> (i32, i32, i32, i32) {
    %c0_i32 = arith.constant 0 : i32
    %c0_i32_0 = arith.constant 0 : i32
    %c0_i32_1 = arith.constant 0 : i32
    %c0_i32_2 = arith.constant 0 : i32
    return %arg0, %c0_i32, %c0_i32_0, %c0_i32_1 : i32, i32, i32, i32
  }
  func.func @transform_1(%arg0: i32, %arg1: i32) -> (i32, i32, i32, i32) {
    %c0_i32 = arith.constant 0 : i32
    %c0_i32_0 = arith.constant 0 : i32
    %c0_i32_1 = arith.constant 0 : i32
    %c0_i32_2 = arith.constant 0 : i32
    return %c0_i32, %c0_i32_0, %c0_i32_1, %arg1 : i32, i32, i32, i32
  }
  func.func @transform_2(%arg0: i32, %arg1: i32) -> (i32, i32) {
    %c0_i32 = arith.constant 0 : i32
    %c0_i32_0 = arith.constant 0 : i32
    return %c0_i32, %arg1 : i32, i32
  }
  func.func @transform_3(%arg0: i32, %arg1: i32) -> (i32, i32, i32) {
    %c0_i32 = arith.constant 0 : i32
    %c0_i32_0 = arith.constant 0 : i32
    return %arg0, %c0_i32, %arg1 : i32, i32, i32
  }
}

</mosaic_0001>

<llo_original>
// kernel: tpu_custom_call.1
$region0: #{tpu_custom_call.1}
  #allocation0 [shape = 'u32[]', space=smem, size = 0x4, offset = 0x4, fixed_abs, tag = 'smem constant byte address 0x4 - core index']
  #allocation1 [shape = 'u32[144,128]{1,0:T(1,128)}', space=vmem, size = 0x12000, scoped, tag = 'internal scratch']
  %s0 = inlined_call_operand.hbm [shape: bf16[2,18,18,8], index: 0, kind: input, shape index: {}]
  %s1 = inlined_call_operand.hbm [shape: bf16[3,3,8,32], index: 1, kind: input, shape index: {}]
  %s2 = inlined_call_operand.hbm [shape: f32[1,32], index: 2, kind: input, shape index: {}]
  %s3 = inlined_call_operand.hbm [shape: bf16[2,256,32], index: 3, kind: output, shape index: {}]
  %s4 = sld [smem:[#allocation0]]
  $region57: #{tpu_custom_call.1} parent=0
    _
  %s6 = ssub.s32 1, %s4
  %s7 = scalar_select 0, %s6, %s4
  $region1: #{tpu_custom_call.1} parent=0
    #allocation2 [shape = 'u8[221184]{0}', space=vmem, size = 0x36000, scoped, tag = 'input window, operand 0']
    #allocation3 [shape = 's32[2]{0}', space=sflag, size = 0x8, scoped, tag = 'scoped memory for tpu_custom_call.1']
    #allocation4 [shape = 's32[2]{0}', space=sflag, size = 0x8, scoped, tag = 'scoped memory for tpu_custom_call.1']
    #allocation5 [shape = 'u8[18432]{0}', space=vmem, size = 0x4800, scoped, tag = 'input window, operand 1, single buffered']
    #allocation6 [shape = 's32[1]{0}', space=sflag, size = 0x4, scoped, tag = 'scoped memory for tpu_custom_call.1']
    #allocation7 [shape = 'u8[512]{0}', space=vmem, size = 0x400, scoped, tag = 'input window, operand 2, single buffered']
    #allocation8 [shape = 'u8[131072]{0}', space=vmem, size = 0x20000, scoped, tag = 'output window, operand 0']
    %8 = vsyncpa [#allocation3], 0
    %s9 = scalar_lea.sflag [#allocation3], 1
    %10 = vsyncpa %s9, 0
    %11 = vsyncpa [#allocation6], 0
    %12 = vsyncpa [#allocation4], 0
    %s13 = scalar_lea.sflag [#allocation4], 1
    %14 = vsyncpa %s13, 0
    loop: start=0, step=1, limit=4
    $region2: #{tpu_custom_call.1} parent=1 // loop_pre_header
      _
    $region3: #{tpu_custom_call.1} parent=1 // loop_header
      %s16 = sphi 0, %s20
      %p17 = scmp.ge.s32.totalorder %s16, 4
      %s23 = sphi 0, %s35
      %s24 = sphi 0, %s31
      %s25 = sphi 0, %s23
      %s26 = sphi 0, %s24
      %s27 = sphi 0, %s25
      %s28 = sphi 0, %s26
      %s38 = sphi 0, %s40
      %s41 = sphi 0, %s38
      %s42 = sphi 0, %s41
      %s58 = sphi 0, %s42
      %s64 = sphi 0, %s66
      %s67 = sphi 0, %s64
      %s68 = sphi 0, %s67
      %s84 = sphi 0, %s68
      %s90 = sphi 0, %s92
      %s93 = sphi 0, %s90
      %s94 = sphi 0, %s93
      %s110 = sphi 0, %s94
      %s118 = sphi 0, %s120
      %s121 = sphi 0, %s118
      %s122 = sphi 0, %s121
      %s138 = sphi 0, %s122
    $region4: #{tpu_custom_call.1} parent=1 // loop_header_branch
      %19 = sbr.rel (%p17) target = $region8
    $region5: #{tpu_custom_call.1} parent=1 // loop_body
      %s21 = ssub.s32 %s16, 1
      %s22 = ssub.s32 %s16, 2
      %s29 = sadd.s32 1, %s24
      %p30 = scmp.ge.s32.totalorder %s29, 1
      %s31 = scalar_select %p30, 0, %s29
      %s32 = sadd.s32 1, %s23
      %s33 = scalar_select %p30, %s32, %s23
      %p34 = scmp.ge.s32.totalorder %s33, 2
      %s35 = scalar_select %p34, 0, %s33
      %s36 = ssub.s32 %s23, %s35
      %p37 = scmp.eq.s32.totalorder %s36, 0
      %s39 = sadd.s32 %s38, 1
      %s40 = scalar_select %p37, %s38, %s39
      %p43 = pneg %p37
      %p44 = scmp.eq.s32.totalorder %s16, 1
      %p45 = por %p43, %p44
      %p46 = scmp.ne.s32.totalorder %s38, %s41
      %p47 = scmp.eq.s32.totalorder %s16, 0
      %p48 = por %p46, %p47
      %p49 = scmp.ne.s32.totalorder %s38, %s41
      %p50 = scmp.eq.s32.totalorder %s21, 1
      %p51 = por %p49, %p50
      %p52 = scmp.ne.s32.totalorder %s41, %s42
      %p53 = scmp.eq.s32.totalorder %s21, 0
      %p54 = por %p52, %p53
      %p55 = scmp.ne.s32.totalorder %s41, %s42
      %p56 = scmp.eq.s32.totalorder %s22, 1
      %p57 = por %p55, %p56
      %p59 = scmp.ne.s32.totalorder %s42, %s58
      %p60 = scmp.eq.s32.totalorder %s22, 0
      %p61 = por %p59, %p60
      %s62 = ssub.s32 %s24, %s31
      %p63 = scmp.eq.s32.totalorder %s62, 0
      %s65 = sadd.s32 %s64, 1
      %s66 = scalar_select %p63, %s64, %s65
      %p69 = pneg %p63
      %p70 = scmp.eq.s32.totalorder %s16, 1
      %p71 = por %p69, %p70
      %p72 = scmp.ne.s32.totalorder %s64, %s67
      %p73 = scmp.eq.s32.totalorder %s16, 0
      %p74 = por %p72, %p73
      %p75 = scmp.ne.s32.totalorder %s64, %s67
      %p76 = scmp.eq.s32.totalorder %s21, 1
      %p77 = por %p75, %p76
      %p78 = scmp.ne.s32.totalorder %s67, %s68
      %p79 = scmp.eq.s32.totalorder %s21, 0
      %p80 = por %p78, %p79
      %p81 = scmp.ne.s32.totalorder %s67, %s68
      %p82 = scmp.eq.s32.totalorder %s22, 1
      %p83 = por %p81, %p82
      %p85 = scmp.ne.s32.totalorder %s68, %s84
      %p86 = scmp.eq.s32.totalorder %s22, 0
      %p87 = por %p85, %p86
      %s88 = ssub.s32 %s24, %s31
      %p89 = scmp.eq.s32.totalorder %s88, 0
      %s91 = sadd.s32 %s90, 1
      %s92 = scalar_select %p89, %s90, %s91
      %p95 = pneg %p89
      %p96 = scmp.eq.s32.totalorder %s16, 1
      %p97 = por %p95, %p96
      %p98 = scmp.ne.s32.totalorder %s90, %s93
      %p99 = scmp.eq.s32.totalorder %s16, 0
      %p100 = por %p98, %p99
      %p101 = scmp.ne.s32.totalorder %s90, %s93
      %p102 = scmp.eq.s32.totalorder %s21, 1
      %p103 = por %p101, %p102
      %p104 = scmp.ne.s32.totalorder %s93, %s94
      %p105 = scmp.eq.s32.totalorder %s21, 0
      %p106 = por %p104, %p105
      %p107 = scmp.ne.s32.totalorder %s93, %s94
      %p108 = scmp.eq.s32.totalorder %s22, 1
      %p109 = por %p107, %p108
      %p111 = scmp.ne.s32.totalorder %s94, %s110
      %p112 = scmp.eq.s32.totalorder %s22, 0
      %p113 = por %p111, %p112
      %s114 = ssub.s32 %s23, %s35
      %s115 = ssub.s32 %s24, %s31
      %s116 = sor.u32 %s114, %s115
      %p117 = scmp.eq.s32.totalorder %s116, 0
      %s119 = sadd.s32 %s118, 1
      %s120 = scalar_select %p117, %s118, %s119
      %p123 = pneg %p117
      %p124 = scmp.eq.s32.totalorder %s16, 1
      %p125 = por %p123, %p124
      %p126 = scmp.ne.s32.totalorder %s118, %s121
      %p127 = scmp.eq.s32.totalorder %s16, 0
      %p128 = por %p126, %p127
      %p129 = scmp.ne.s32.totalorder %s118, %s121
      %p130 = scmp.eq.s32.totalorder %s21, 1
      %p131 = por %p129, %p130
      %p132 = scmp.ne.s32.totalorder %s121, %s122
      %p133 = scmp.eq.s32.totalorder %s21, 0
      %p134 = por %p132, %p133
      %p135 = scmp.ne.s32.totalorder %s121, %s122
      %p136 = scmp.eq.s32.totalorder %s22, 1
      %p137 = por %p135, %p136
      %p139 = scmp.ne.s32.totalorder %s122, %s138
      %p140 = scmp.eq.s32.totalorder %s22, 0
      %p141 = por %p139, %p140
      %p142 = scmp.le.s32.totalorder 1, %s16
      %p143 = scmp.lt.s32.totalorder %s16, 3
      %p144 = pnand %p142, %p143
      %p145 = pneg %p144
      // Predicated region
      $region9: #{tpu_custom_call.1} parent=5 // pred_check
        _
      $region10: #{tpu_custom_call.1} parent=5 // pred_check_branch
        %147 = sbr.rel (%p144) target = $region12
      $region11: #{tpu_custom_call.1} parent=5 // pred_region
        %s148 = ssub.s32 %s16, 1
        // Predicated region
        $region13: #{tpu_custom_call.1} parent=11 // pred_check
          %p149 = pneg %p80
        $region14: #{tpu_custom_call.1} parent=11 // pred_check_branch
          %151 = sbr.rel (%p149) target = $region16
        $region15: #{tpu_custom_call.1} parent=11 // pred_region
          %s153 = ssub.s32 576, 576
          %154 = vsyncadd [#allocation6], %s153
          %s155 = smul.addr %s26, 64
          %s156 = scalar_lea.hbm %s1, %s155
          %s157 = sshll.u32 [#allocation5], 4
          %s158 = int_to_ptr.vmem [resolvable:$true] %s157
          %163 = dma.hbm_to_vmem [thread:$0]  %s156, 576, %s158, [#allocation6], 64, 64, 4
        $region16: #{tpu_custom_call.1} parent=11 // pred_fallthru
          _
        // Predicated region
        $region17: #{tpu_custom_call.1} parent=11 // pred_check
          %p164 = pneg %p106
        $region18: #{tpu_custom_call.1} parent=11 // pred_check_branch
          %166 = sbr.rel (%p164) target = $region20
        $region19: #{tpu_custom_call.1} parent=11 // pred_region
          %s168 = ssub.s32 16, 16
          %169 = vsyncadd [#allocation6], %s168
          %s170 = smul.addr %s26, 16
          %s171 = scalar_lea.hbm %s2, %s170
          %s173 = sshll.u32 [#allocation7], 4
          %s174 = int_to_ptr.vmem [resolvable:$true] %s173
          %176 = dma.hbm_to_vmem [thread:$0]  %s171, 16, %s174, [#allocation6]
        $region20: #{tpu_custom_call.1} parent=11 // pred_fallthru
          _
      $region12: #{tpu_custom_call.1} parent=5 // pred_fallthru
        _
      %p177 = scmp.lt.s32.totalorder %s16, 2
      // Predicated region
      $region21: #{tpu_custom_call.1} parent=5 // pred_check
        %p178 = pneg %p177
      $region22: #{tpu_custom_call.1} parent=5 // pred_check_branch
        %180 = sbr.rel (%p178) target = $region24
      $region23: #{tpu_custom_call.1} parent=5 // pred_region
        // Predicated region
        $region25: #{tpu_custom_call.1} parent=23 // pred_check
          %p181 = pneg %p48
        $region26: #{tpu_custom_call.1} parent=23 // pred_check_branch
          %183 = sbr.rel (%p181) target = $region28
        $region27: #{tpu_custom_call.1} parent=23 // pred_region
          %s184 = sand.u32 %s38, 1
          %s185 = scalar_lea.sflag [#allocation3], %s184
          %s186 = sand.u32 %s38, 1
          %s187 = smul.addr %s186, 216
          %s188 = scalar_lea.vmem [#allocation2], %s187
          %s190 = ssub.s32 3456, 3456
          %191 = vsyncadd %s185, %s190
          %s192 = smul.addr %s23, 54
          %s193 = smul.addr %s192, 64
          %s194 = scalar_lea.hbm %s0, %s193
          %s195 = sshll.u32 %s188, 4
          %s196 = int_to_ptr.vmem [resolvable:$true] %s195
          %201 = dma.hbm_to_vmem [thread:$0]  %s194, 3456, %s196, %s185, 64, 64, 4
        $region28: #{tpu_custom_call.1} parent=23 // pred_fallthru
          _
      $region24: #{tpu_custom_call.1} parent=5 // pred_fallthru
        _
      %p202 = scmp.le.s32.totalorder 1, %s16
      %p203 = scmp.lt.s32.totalorder %s16, 3
      %p204 = pnand %p202, %p203
      %p205 = pneg %p204
      // Predicated region
      $region29: #{tpu_custom_call.1} parent=5 // pred_check
        _
      $region30: #{tpu_custom_call.1} parent=5 // pred_check_branch
        %207 = sbr.rel (%p204) target = $region32
      $region31: #{tpu_custom_call.1} parent=5 // pred_region
        %s208 = ssub.s32 %s16, 1
        %s209 = sand.u32 %s41, 1
        %s210 = scalar_lea.sflag [#allocation3], %s209
        %s211 = sand.u32 %s41, 1
        %s212 = smul.addr %s211, 216
        %s213 = scalar_lea.vmem [#allocation2], %s212
        // Predicated region
        $region33: #{tpu_custom_call.1} parent=31 // pred_check
          %p214 = pneg %p54
        $region34: #{tpu_custom_call.1} parent=31 // pred_check_branch
          %216 = sbr.rel (%p214) target = $region36
        $region35: #{tpu_custom_call.1} parent=31 // pred_region
          %217 = dma.done %s210, 3456
        $region36: #{tpu_custom_call.1} parent=31 // pred_fallthru
          _
        // Predicated region
        $region37: #{tpu_custom_call.1} parent=31 // pred_check
          %p218 = pneg %p80
        $region38: #{tpu_custom_call.1} parent=31 // pred_check_branch
          %220 = sbr.rel (%p218) target = $region40
        $region39: #{tpu_custom_call.1} parent=31 // pred_region
          %221 = dma.done [#allocation6], 576
        $region40: #{tpu_custom_call.1} parent=31 // pred_fallthru
          _
        // Predicated region
        $region41: #{tpu_custom_call.1} parent=31 // pred_check
          %p222 = pneg %p106
        $region42: #{tpu_custom_call.1} parent=31 // pred_check_branch
          %224 = sbr.rel (%p222) target = $region44
        $region43: #{tpu_custom_call.1} parent=31 // pred_region
          %225 = dma.done [#allocation6], 16
        $region44: #{tpu_custom_call.1} parent=31 // pred_fallthru
          _
        %s226 = sand.u32 %s41, 1
        %s227 = scalar_lea.sflag [#allocation3], %s226
        %s228 = sand.u32 %s41, 1
        %s229 = smul.addr %s228, 216
        %s230 = scalar_lea.vmem [#allocation2], %s229
        %p231 = pneg %p54
        %p232 = pneg %p51
        %p233 = pneg %p80
        %p234 = pneg %p77
        %p235 = pneg %p106
        %p236 = pneg %p103
        %p237 = pneg %p134
        %p238 = pneg %p131
        %s239 = sand.u32 %s121, 1
        %s240 = scalar_lea.sflag [#allocation4], %s239
        %s241 = sand.u32 %s121, 1
        %s242 = smul.addr %s241, 128
        %s243 = scalar_lea.vmem [#allocation8], %s242
        %v245 = vld [vmem:[%s213] sm:$0xf]
        %v246 = vld [vmem:[%s213 + $0x4] sm:$0xf]
        %v247 = vld [vmem:[%s213 + $0xc] sm:$0xf]
        %v248 = vld [vmem:[%s213 + $0x10] sm:$0xf]
        %v249 = vld [vmem:[%s213 + $0x18] sm:$0xf]
        %v250 = vld [vmem:[%s213 + $0x1c] sm:$0xf]
        %v251 = vld [vmem:[%s213 + $0x24] sm:$0xf]
        %v252 = vld [vmem:[%s213 + $0x28] sm:$0xf]
        %v253 = vld [vmem:[%s213 + $0x30] sm:$0xf]
        %v254 = vld [vmem:[%s213 + $0x34] sm:$0xf]
        %v255 = vld [vmem:[%s213 + $0x3c] sm:$0xf]
        %v256 = vld [vmem:[%s213 + $0x40] sm:$0xf]
        %v257 = vld [vmem:[%s213 + $0x48] sm:$0xf]
        %v258 = vld [vmem:[%s213 + $0x4c] sm:$0xf]
        %v259 = vld [vmem:[%s213 + $0x54] sm:$0xf]
        %v260 = vld [vmem:[%s213 + $0x58] sm:$0xf]
        %v261 = vld [vmem:[%s213 + $0x60] sm:$0xf]
        %v262 = vld [vmem:[%s213 + $0x64] sm:$0xf]
        %v263 = vld [vmem:[%s213 + $0x6c] sm:$0xf]
        %v264 = vld [vmem:[%s213 + $0x70] sm:$0xf]
        %v265 = vld [vmem:[%s213 + $0x78] sm:$0xf]
        %v266 = vld [vmem:[%s213 + $0x7c] sm:$0xf]
        %v267 = vld [vmem:[%s213 + $0x84] sm:$0xf]
        %v268 = vld [vmem:[%s213 + $0x88] sm:$0xf]
        %v269 = vld [vmem:[%s213 + $0x90] sm:$0xf]
        %v270 = vld [vmem:[%s213 + $0x94] sm:$0xf]
        %v271 = vld [vmem:[%s213 + $0x9c] sm:$0xf]
        %v272 = vld [vmem:[%s213 + $0xa0] sm:$0xf]
        %v273 = vld [vmem:[%s213 + $0xa8] sm:$0xf]
        %v274 = vld [vmem:[%s213 + $0xac] sm:$0xf]
        %v275 = vld [vmem:[%s213 + $0xb4] sm:$0xf]
        %v276 = vld [vmem:[%s213 + $0xb8] sm:$0xf]
        %v277 = vld [vmem:[#allocation5] sm:$0xf]
        %v278 = vld [vmem:[%s213 + $0x8] sm:$0x1]
        %v279 = vld [vmem:[%s213 + $0x14] sm:$0x1]
        %v280 = vld [vmem:[%s213 + $0x20] sm:$0x1]
        %v281 = vld [vmem:[%s213 + $0x2c] sm:$0x1]
        %v282 = vld [vmem:[%s213 + $0x38] sm:$0x1]
        %v283 = vld [vmem:[%s213 + $0x44] sm:$0x1]
        %v284 = vld [vmem:[%s213 + $0x50] sm:$0x1]
        %v285 = vld [vmem:[%s213 + $0x5c] sm:$0x1]
        %v286 = vld [vmem:[%s213 + $0x68] sm:$0x1]
        %v287 = vld [vmem:[%s213 + $0x74] sm:$0x1]
        %v288 = vld [vmem:[%s213 + $0x80] sm:$0x1]
        %v289 = vld [vmem:[%s213 + $0x8c] sm:$0x1]
        %v290 = vld [vmem:[%s213 + $0x98] sm:$0x1]
        %v291 = vld [vmem:[%s213 + $0xa4] sm:$0x1]
        %v292 = vld [vmem:[%s213 + $0xb0] sm:$0x1]
        %v293 = vld [vmem:[%s213 + $0xbc] sm:$0x1]
        %vm294 = vsmask.f32 3328
        %vm295 = vsmask.f32 7440
        %vm296 = vmor %vm294, %vm295
        %v298 = vshrl.u32 %v245, 16
        %v300 = vrot.slane %v298, 4
        %v301 = vshll.u32 %v245, 16
        %v303 = vrot.slane %v301, 5
        %v304 = vor.u32 %v300, %v303
        %v305 = vrot.slane %v304, 4
        %v307 = vshll.u32 %v246, 16
        %v309 = vrot.slane %v307, 5
        %v310 = vsel %vm296, %v305, %v309
        %v311 = vshrl.u32 %v246, 16
        %v313 = vrot.slane %v311, 4
        %v314 = vor.u32 %v313, %v309
        %v315 = vrot.slane %v314, 4
        %v317 = vshll.u32 %v278, 16
        %v319 = vrot.slane %v317, 5
        %v320 = vsel %vm296, %v315, %v319
        %v322 = vshrl.u32 %v247, 16
        %v324 = vrot.slane %v322, 4
        %v325 = vshll.u32 %v247, 16
        %v327 = vrot.slane %v325, 5
        %v328 = vor.u32 %v324, %v327
        %v329 = vrot.slane %v328, 4
        %v331 = vshll.u32 %v248, 16
        %v333 = vrot.slane %v331, 5
        %v334 = vsel %vm296, %v329, %v333
        %v335 = vshrl.u32 %v248, 16
        %v337 = vrot.slane %v335, 4
        %v338 = vor.u32 %v337, %v333
        %v339 = vrot.slane %v338, 4
        %v341 = vshll.u32 %v279, 16
        %v343 = vrot.slane %v341, 5
        %v344 = vsel %vm296, %v339, %v343
        %v346 = vshrl.u32 %v249, 16
        %v348 = vrot.slane %v346, 4
        %v349 = vshll.u32 %v249, 16
        %v351 = vrot.slane %v349, 5
        %v352 = vor.u32 %v348, %v351
        %v353 = vrot.slane %v352, 4
        %v355 = vshll.u32 %v250, 16
        %v357 = vrot.slane %v355, 5
        %v358 = vsel %vm296, %v353, %v357
        %v359 = vshrl.u32 %v250, 16
        %v361 = vrot.slane %v359, 4
        %v362 = vor.u32 %v361, %v357
        %v363 = vrot.slane %v362, 4
        %v365 = vshll.u32 %v280, 16
        %v367 = vrot.slane %v365, 5
        %v368 = vsel %vm296, %v363, %v367
        %v370 = vshrl.u32 %v251, 16
        %v372 = vrot.slane %v370, 4
        %v373 = vshll.u32 %v251, 16
        %v375 = vrot.slane %v373, 5
        %v376 = vor.u32 %v372, %v375
        %v377 = vrot.slane %v376, 4
        %v379 = vshll.u32 %v252, 16
        %v381 = vrot.slane %v379, 5
        %v382 = vsel %vm296, %v377, %v381
        %v383 = vshrl.u32 %v252, 16
        %v385 = vrot.slane %v383, 4
        %v386 = vor.u32 %v385, %v381
        %v387 = vrot.slane %v386, 4
        %v389 = vshll.u32 %v281, 16
        %v391 = vrot.slane %v389, 5
        %v392 = vsel %vm296, %v387, %v391
        %v394 = vshrl.u32 %v253, 16
        %v396 = vrot.slane %v394, 4
        %v397 = vshll.u32 %v253, 16
        %v399 = vrot.slane %v397, 5
        %v400 = vor.u32 %v396, %v399
        %v401 = vrot.slane %v400, 4
        %v403 = vshll.u32 %v254, 16
        %v405 = vrot.slane %v403, 5
        %v406 = vsel %vm296, %v401, %v405
        %v407 = vshrl.u32 %v254, 16
        %v409 = vrot.slane %v407, 4
        %v410 = vor.u32 %v409, %v405
        %v411 = vrot.slane %v410, 4
        %v413 = vshll.u32 %v282, 16
        %v415 = vrot.slane %v413, 5
        %v416 = vsel %vm296, %v411, %v415
        %v418 = vshrl.u32 %v255, 16
        %v420 = vrot.slane %v418, 4
        %v421 = vshll.u32 %v255, 16
        %v423 = vrot.slane %v421, 5
        %v424 = vor.u32 %v420, %v423
        %v425 = vrot.slane %v424, 4
        %v427 = vshll.u32 %v256, 16
        %v429 = vrot.slane %v427, 5
        %v430 = vsel %vm296, %v425, %v429
        %v431 = vshrl.u32 %v256, 16
        %v433 = vrot.slane %v431, 4
        %v434 = vor.u32 %v433, %v429
        %v435 = vrot.slane %v434, 4
        %v437 = vshll.u32 %v283, 16
        %v439 = vrot.slane %v437, 5
        %v440 = vsel %vm296, %v435, %v439
        %v442 = vshrl.u32 %v257, 16
        %v444 = vrot.slane %v442, 4
        %v445 = vshll.u32 %v257, 16
        %v447 = vrot.slane %v445, 5
        %v448 = vor.u32 %v444, %v447
        %v449 = vrot.slane %v448, 4
        %v451 = vshll.u32 %v258, 16
        %v453 = vrot.slane %v451, 5
        %v454 = vsel %vm296, %v449, %v453
        %v455 = vshrl.u32 %v258, 16
        %v457 = vrot.slane %v455, 4
        %v458 = vor.u32 %v457, %v453
        %v459 = vrot.slane %v458, 4
        %v461 = vshll.u32 %v284, 16
        %v463 = vrot.slane %v461, 5
        %v464 = vsel %vm296, %v459, %v463
        %v466 = vshrl.u32 %v259, 16
        %v468 = vrot.slane %v466, 4
        %v469 = vshll.u32 %v259, 16
        %v471 = vrot.slane %v469, 5
        %v472 = vor.u32 %v468, %v471
        %v473 = vrot.slane %v472, 4
        %v475 = vshll.u32 %v260, 16
        %v477 = vrot.slane %v475, 5
        %v478 = vsel %vm296, %v473, %v477
        %v479 = vshrl.u32 %v260, 16
        %v481 = vrot.slane %v479, 4
        %v482 = vor.u32 %v481, %v477
        %v483 = vrot.slane %v482, 4
        %v485 = vshll.u32 %v285, 16
        %v487 = vrot.slane %v485, 5
        %v488 = vsel %vm296, %v483, %v487
        %v490 = vshrl.u32 %v261, 16
        %v492 = vrot.slane %v490, 4
        %v493 = vshll.u32 %v261, 16
        %v495 = vrot.slane %v493, 5
        %v496 = vor.u32 %v492, %v495
        %v497 = vrot.slane %v496, 4
        %v499 = vshll.u32 %v262, 16
        %v501 = vrot.slane %v499, 5
        %v502 = vsel %vm296, %v497, %v501
        %v503 = vshrl.u32 %v262, 16
        %v505 = vrot.slane %v503, 4
        %v506 = vor.u32 %v505, %v501
        %v507 = vrot.slane %v506, 4
        %v509 = vshll.u32 %v286, 16
        %v511 = vrot.slane %v509, 5
        %v512 = vsel %vm296, %v507, %v511
        %v514 = vshrl.u32 %v263, 16
        %v516 = vrot.slane %v514, 4
        %v517 = vshll.u32 %v263, 16
        %v519 = vrot.slane %v517, 5
        %v520 = vor.u32 %v516, %v519
        %v521 = vrot.slane %v520, 4
        %v523 = vshll.u32 %v264, 16
        %v525 = vrot.slane %v523, 5
        %v526 = vsel %vm296, %v521, %v525
        %v527 = vshrl.u32 %v264, 16
        %v529 = vrot.slane %v527, 4
        %v530 = vor.u32 %v529, %v525
        %v531 = vrot.slane %v530, 4
        %v533 = vshll.u32 %v287, 16
        %v535 = vrot.slane %v533, 5
        %v536 = vsel %vm296, %v531, %v535
        %v538 = vshrl.u32 %v265, 16
        %v540 = vrot.slane %v538, 4
        %v541 = vshll.u32 %v265, 16
        %v543 = vrot.slane %v541, 5
        %v544 = vor.u32 %v540, %v543
        %v545 = vrot.slane %v544, 4
        %v547 = vshll.u32 %v266, 16
        %v549 = vrot.slane %v547, 5
        %v550 = vsel %vm296, %v545, %v549
        %v551 = vshrl.u32 %v266, 16
        %v553 = vrot.slane %v551, 4
        %v554 = vor.u32 %v553, %v549
        %v555 = vrot.slane %v554, 4
        %v557 = vshll.u32 %v288, 16
        %v559 = vrot.slane %v557, 5
        %v560 = vsel %vm296, %v555, %v559
        %v562 = vshrl.u32 %v267, 16
        %v564 = vrot.slane %v562, 4
        %v565 = vshll.u32 %v267, 16
        %v567 = vrot.slane %v565, 5
        %v568 = vor.u32 %v564, %v567
        %v569 = vrot.slane %v568, 4
        %v571 = vshll.u32 %v268, 16
        %v573 = vrot.slane %v571, 5
        %v574 = vsel %vm296, %v569, %v573
        %v575 = vshrl.u32 %v268, 16
        %v577 = vrot.slane %v575, 4
        %v578 = vor.u32 %v577, %v573
        %v579 = vrot.slane %v578, 4
        %v581 = vshll.u32 %v289, 16
        %v583 = vrot.slane %v581, 5
        %v584 = vsel %vm296, %v579, %v583
        %v586 = vshrl.u32 %v269, 16
        %v588 = vrot.slane %v586, 4
        %v589 = vshll.u32 %v269, 16
        %v591 = vrot.slane %v589, 5
        %v592 = vor.u32 %v588, %v591
        %v593 = vrot.slane %v592, 4
        %v595 = vshll.u32 %v270, 16
        %v597 = vrot.slane %v595, 5
        %v598 = vsel %vm296, %v593, %v597
        %v599 = vshrl.u32 %v270, 16
        %v601 = vrot.slane %v599, 4
        %v602 = vor.u32 %v601, %v597
        %v603 = vrot.slane %v602, 4
        %v605 = vshll.u32 %v290, 16
        %v607 = vrot.slane %v605, 5
        %v608 = vsel %vm296, %v603, %v607
        %v610 = vshrl.u32 %v271, 16
        %v612 = vrot.slane %v610, 4
        %v613 = vshll.u32 %v271, 16
        %v615 = vrot.slane %v613, 5
        %v616 = vor.u32 %v612, %v615
        %v617 = vrot.slane %v616, 4
        %v619 = vshll.u32 %v272, 16
        %v621 = vrot.slane %v619, 5
        %v622 = vsel %vm296, %v617, %v621
        %v623 = vshrl.u32 %v272, 16
        %v625 = vrot.slane %v623, 4
        %v626 = vor.u32 %v625, %v621
        %v627 = vrot.slane %v626, 4
        %v629 = vshll.u32 %v291, 16
        %v631 = vrot.slane %v629, 5
        %v632 = vsel %vm296, %v627, %v631
        %v634 = vshrl.u32 %v273, 16
        %v636 = vrot.slane %v634, 4
        %v637 = vshll.u32 %v273, 16
        %v639 = vrot.slane %v637, 5
        %v640 = vor.u32 %v636, %v639
        %v641 = vrot.slane %v640, 4
        %v643 = vshll.u32 %v274, 16
        %v645 = vrot.slane %v643, 5
        %v646 = vsel %vm296, %v641, %v645
        %v647 = vshrl.u32 %v274, 16
        %v649 = vrot.slane %v647, 4
        %v650 = vor.u32 %v649, %v645
        %v651 = vrot.slane %v650, 4
        %v653 = vshll.u32 %v292, 16
        %v655 = vrot.slane %v653, 5
        %v656 = vsel %vm296, %v651, %v655
        %v658 = vshrl.u32 %v275, 16
        %v660 = vrot.slane %v658, 4
        %v661 = vshll.u32 %v275, 16
        %v663 = vrot.slane %v661, 5
        %v664 = vor.u32 %v660, %v663
        %v665 = vrot.slane %v664, 4
        %v667 = vshll.u32 %v276, 16
        %v669 = vrot.slane %v667, 5
        %v670 = vsel %vm296, %v665, %v669
        %v671 = vshrl.u32 %v276, 16
        %v673 = vrot.slane %v671, 4
        %v674 = vor.u32 %v673, %v669
        %v675 = vrot.slane %v674, 4
        %v677 = vshll.u32 %v293, 16
        %v679 = vrot.slane %v677, 5
        %v680 = vsel %vm296, %v675, %v679
        %s681 = scalar_lea.vmem [#allocation5], 4
        %v682 = vld [vmem:[%s681] sm:$0xf]
        %v683 = vunpack.c.l.b16 %v310
        %v684 = vunpack.c.l.b16 %v320
        %v685 = vunpack.c.l.b16 %v334
        %v686 = vunpack.c.l.b16 %v344
        %v687 = vunpack.c.l.b16 %v358
        %v688 = vunpack.c.l.b16 %v368
        %v689 = vunpack.c.l.b16 %v382
        %v690 = vunpack.c.l.b16 %v392
        %v691 = vunpack.c.l.b16 %v406
        %v692 = vunpack.c.l.b16 %v416
        %v693 = vunpack.c.l.b16 %v430
        %v694 = vunpack.c.l.b16 %v440
        %v695 = vunpack.c.l.b16 %v454
        %v696 = vunpack.c.l.b16 %v464
        %v697 = vunpack.c.l.b16 %v478
        %v698 = vunpack.c.l.b16 %v488
        %v699 = vunpack.c.l.b16 %v502
        %v700 = vunpack.c.l.b16 %v512
        %v701 = vunpack.c.l.b16 %v526
        %v702 = vunpack.c.l.b16 %v536
        %v703 = vunpack.c.l.b16 %v550
        %v704 = vunpack.c.l.b16 %v560
        %v705 = vunpack.c.l.b16 %v574
        %v706 = vunpack.c.l.b16 %v584
        %v707 = vunpack.c.l.b16 %v598
        %v708 = vunpack.c.l.b16 %v608
        %v709 = vunpack.c.l.b16 %v622
        %v710 = vunpack.c.l.b16 %v632
        %v711 = vunpack.c.l.b16 %v646
        %v712 = vunpack.c.l.b16 %v656
        %v713 = vunpack.c.l.b16 %v670
        %v714 = vunpack.c.l.b16 %v680
        %v715 = vpack.c.b16 %v684, %v683
        %v716 = vpack.c.b16 %v686, %v685
        %v717 = vpack.c.b16 %v688, %v687
        %v718 = vpack.c.b16 %v690, %v689
        %v719 = vpack.c.b16 %v692, %v691
        %v720 = vpack.c.b16 %v694, %v693
        %v721 = vpack.c.b16 %v696, %v695
        %v722 = vpack.c.b16 %v698, %v697
        %v723 = vpack.c.b16 %v700, %v699
        %v724 = vpack.c.b16 %v702, %v701
        %v725 = vpack.c.b16 %v704, %v703
        %v726 = vpack.c.b16 %v706, %v705
        %v727 = vpack.c.b16 %v708, %v707
        %v728 = vpack.c.b16 %v710, %v709
        %v729 = vpack.c.b16 %v712, %v711
        %v730 = vpack.c.b16 %v714, %v713
        %vm731 = vcmask 64512
        %v733 = vsel %vm731, %v715, 0
        %v736 = vsel %vm731, %v716, 0
        %v739 = vsel %vm731, %v717, 0
        %v742 = vsel %vm731, %v718, 0
        %v745 = vsel %vm731, %v719, 0
        %v748 = vsel %vm731, %v720, 0
        %v751 = vsel %vm731, %v721, 0
        %v754 = vsel %vm731, %v722, 0
        %v757 = vsel %vm731, %v723, 0
        %v760 = vsel %vm731, %v724, 0
        %v763 = vsel %vm731, %v725, 0
        %v766 = vsel %vm731, %v726, 0
        %v769 = vsel %vm731, %v727, 0
        %v772 = vsel %vm731, %v728, 0
        %v775 = vsel %vm731, %v729, 0
        %v778 = vsel %vm731, %v730, 0
        %vm780 = vcmask 1043456
        %v782 = vsel %vm780, %v682, 0
        %784 = vmatprep.subr.bf16.mxu0 0
        %785 = vmatpush1.bf16.msra.mxu0 %v782
        %786 = vmatprep.subr.bf16.mxu0 0
        %787 = vmatpush1.bf16.msra.mxu0 0
        %788 = vmatprep.subr.bf16.mxu0 0
        %789 = vmatpush1.bf16.msra.mxu0 0
        %790 = vmatprep.subr.bf16.mxu0 0
        %791 = vmatpush1.bf16.msra.mxu0 0
        %792 = vmatprep.subr.bf16.mxu0 0
        %793 = vmatpush1.bf16.msra.mxu0 0
        %794 = vmatprep.subr.bf16.mxu0 0
        %795 = vmatpush1.bf16.msra.mxu0 0
        %796 = vmatprep.subr.bf16.mxu0 0
        %797 = vmatpush1.bf16.msra.mxu0 0
        %798 = vmatprep.subr.bf16.mxu0 0
        %799 = vmatpush1.bf16.msra.mxu0 0
        %800 = vmatprep.subr.bf16.mxu0 0
        %801 = vmatpush1.bf16.msra.mxu0 0
        %802 = vmatprep.subr.bf16.mxu0 0
        %803 = vmatpush1.bf16.msra.mxu0 0
        %804 = vmatprep.subr.bf16.mxu0 0
        %805 = vmatpush1.bf16.msra.mxu0 0
        %806 = vmatprep.subr.bf16.mxu0 0
        %807 = vmatpush1.bf16.msra.mxu0 0
        %808 = vmatprep.subr.bf16.mxu0 0
        %809 = vmatpush1.bf16.msra.mxu0 0
        %810 = vmatprep.subr.bf16.mxu0 0
        %811 = vmatpush1.bf16.msra.mxu0 0
        %812 = vmatprep.subr.bf16.mxu0 0
        %813 = vmatpush1.bf16.msra.mxu0 0
        %814 = vmatprep.subr.bf16.mxu0 0
        %815 = vmatpush1.bf16.msra.mxu0 0
        %816 = vmatprep.mubr.bf16.mxu0 0
        %817 = vmatmul.mubr.bf16.gmra.mrb[0].mxu0 %v733
        %v818 = vpop.f32.mrb[0].mxu0
        %v819 = vadd.f32 0.0, %v818
        %v820 = vpop.f32.mrb[0].mxu0
        %v821 = vpop.f32.mrb[0].mxu0
        %v822 = vadd.f32 0.0, %v821
        %v823 = vpop.f32.mrb[0].mxu0
        %824 = vmatprep.mubr.bf16.mxu0 0
        %825 = vmatmul.mubr.bf16.gmra.mrb[0].mxu0 %v736
        %v826 = vpop.f32.mrb[0].mxu0
        %v827 = vadd.f32 0.0, %v826
        %v828 = vpop.f32.mrb[0].mxu0
        %v829 = vpop.f32.mrb[0].mxu0
        %v830 = vadd.f32 0.0, %v829
        %v831 = vpop.f32.mrb[0].mxu0
        %832 = vmatprep.mubr.bf16.mxu0 0
        %833 = vmatmul.mubr.bf16.gmra.mrb[0].mxu0 %v739
        %v834 = vpop.f32.mrb[0].mxu0
        %v835 = vadd.f32 0.0, %v834
        %v836 = vpop.f32.mrb[0].mxu0
        %v837 = vpop.f32.mrb[0].mxu0
        %v838 = vadd.f32 0.0, %v837
        %v839 = vpop.f32.mrb[0].mxu0
        %840 = vmatprep.mubr.bf16.mxu0 0
        %841 = vmatmul.mubr.bf16.gmra.mrb[0].mxu0 %v742
        %v842 = vpop.f32.mrb[0].mxu0
        %v843 = vadd.f32 0.0, %v842
        %v844 = vpop.f32.mrb[0].mxu0
        %v845 = vpop.f32.mrb[0].mxu0
        %v846 = vadd.f32 0.0, %v845
        %v847 = vpop.f32.mrb[0].mxu0
        %848 = vmatprep.mubr.bf16.mxu0 0
        %849 = vmatmul.mubr.bf16.gmra.mrb[0].mxu0 %v745
        %v850 = vpop.f32.mrb[0].mxu0
        %v851 = vadd.f32 0.0, %v850
        %v852 = vpop.f32.mrb[0].mxu0
        %v853 = vpop.f32.mrb[0].mxu0
        %v854 = vadd.f32 0.0, %v853
        %v855 = vpop.f32.mrb[0].mxu0
        %856 = vmatprep.mubr.bf16.mxu0 0
        %857 = vmatmul.mubr.bf16.gmra.mrb[0].mxu0 %v748
        %v858 = vpop.f32.mrb[0].mxu0
        %v859 = vadd.f32 0.0, %v858
        %v860 = vpop.f32.mrb[0].mxu0
        %v861 = vpop.f32.mrb[0].mxu0
        %v862 = vadd.f32 0.0, %v861
        %v863 = vpop.f32.mrb[0].mxu0
        %864 = vmatprep.mubr.bf16.mxu0 0
        %865 = vmatmul.mubr.bf16.gmra.mrb[0].mxu0 %v751
        %v866 = vpop.f32.mrb[0].mxu0
        %v867 = vadd.f32 0.0, %v866
        %v868 = vpop.f32.mrb[0].mxu0
        %v869 = vpop.f32.mrb[0].mxu0
        %v870 = vadd.f32 0.0, %v869
        %v871 = vpop.f32.mrb[0].mxu0
        %872 = vmatprep.mubr.bf16.mxu0 0
        %873 = vmatmul.mubr.bf16.gmra.mrb[0].mxu0 %v754
        %v874 = vpop.f32.mrb[0].mxu0
        %v875 = vadd.f32 0.0, %v874
        %v876 = vpop.f32.mrb[0].mxu0
        %v877 = vpop.f32.mrb[0].mxu0
        %v878 = vadd.f32 0.0, %v877
        %v879 = vpop.f32.mrb[0].mxu0
        %880 = vmatprep.mubr.bf16.mxu0 0
        %881 = vmatmul.mubr.bf16.gmra.mrb[0].mxu0 %v757
        %v882 = vpop.f32.mrb[0].mxu0
        %v883 = vadd.f32 0.0, %v882
        %v884 = vpop.f32.mrb[0].mxu0
        %v885 = vpop.f32.mrb[0].mxu0
        %v886 = vadd.f32 0.0, %v885
        %v887 = vpop.f32.mrb[0].mxu0
        %888 = vmatprep.mubr.bf16.mxu0 0
        %889 = vmatmul.mubr.bf16.gmra.mrb[0].mxu0 %v760
        %v890 = vpop.f32.mrb[0].mxu0
        %v891 = vadd.f32 0.0, %v890
        %v892 = vpop.f32.mrb[0].mxu0
        %v893 = vpop.f32.mrb[0].mxu0
        %v894 = vadd.f32 0.0, %v893
        %v895 = vpop.f32.mrb[0].mxu0
        %896 = vmatprep.mubr.bf16.mxu0 0
        %897 = vmatmul.mubr.bf16.gmra.mrb[0].mxu0 %v763
        %v898 = vpop.f32.mrb[0].mxu0
        %v899 = vadd.f32 0.0, %v898
        %v900 = vpop.f32.mrb[0].mxu0
        %v901 = vpop.f32.mrb[0].mxu0
        %v902 = vadd.f32 0.0, %v901
        %v903 = vpop.f32.mrb[0].mxu0
        %904 = vmatprep.mubr.bf16.mxu0 0
        %905 = vmatmul.mubr.bf16.gmra.mrb[0].mxu0 %v766
        %v906 = vpop.f32.mrb[0].mxu0
        %v907 = vadd.f32 0.0, %v906
        %v908 = vpop.f32.mrb[0].mxu0
        %v909 = vpop.f32.mrb[0].mxu0
        %v910 = vadd.f32 0.0, %v909
        %v911 = vpop.f32.mrb[0].mxu0
        %912 = vmatprep.mubr.bf16.mxu0 0
        %913 = vmatmul.mubr.bf16.gmra.mrb[0].mxu0 %v769
        %v914 = vpop.f32.mrb[0].mxu0
        %v915 = vadd.f32 0.0, %v914
        %v916 = vpop.f32.mrb[0].mxu0
        %v917 = vpop.f32.mrb[0].mxu0
        %v918 = vadd.f32 0.0, %v917
        %v919 = vpop.f32.mrb[0].mxu0
        %920 = vmatprep.mubr.bf16.mxu0 0
        %921 = vmatmul.mubr.bf16.gmra.mrb[0].mxu0 %v772
        %v922 = vpop.f32.mrb[0].mxu0
        %v923 = vadd.f32 0.0, %v922
        %v924 = vpop.f32.mrb[0].mxu0
        %v925 = vpop.f32.mrb[0].mxu0
        %v926 = vadd.f32 0.0, %v925
        %v927 = vpop.f32.mrb[0].mxu0
        %928 = vmatprep.mubr.bf16.mxu0 0
        %929 = vmatmul.mubr.bf16.gmra.mrb[0].mxu0 %v775
        %v930 = vpop.f32.mrb[0].mxu0
        %v931 = vadd.f32 0.0, %v930
        %v932 = vpop.f32.mrb[0].mxu0
        %v933 = vpop.f32.mrb[0].mxu0
        %v934 = vadd.f32 0.0, %v933
        %v935 = vpop.f32.mrb[0].mxu0
        %936 = vmatprep.mubr.bf16.mxu0 0
        %937 = vmatmul.mubr.bf16.gmra.mrb[0].mxu0 %v778
        %v938 = vpop.f32.mrb[0].mxu0
        %v939 = vadd.f32 0.0, %v938
        %v940 = vpop.f32.mrb[0].mxu0
        %v941 = vpop.f32.mrb[0].mxu0
        %v942 = vadd.f32 0.0, %v941
        %v943 = vpop.f32.mrb[0].mxu0
        %944 = vdwg.mxu0
        %v977 = vunpack.c.l.b16 %v245
        %v978 = vunpack.c.l.b16 %v246
        %v979 = vunpack.c.l.b16 %v247
        %v980 = vunpack.c.l.b16 %v248
        %v981 = vunpack.c.l.b16 %v249
        %v982 = vunpack.c.l.b16 %v250
        %v983 = vunpack.c.l.b16 %v251
        %v984 = vunpack.c.l.b16 %v252
        %v985 = vunpack.c.l.b16 %v253
        %v986 = vunpack.c.l.b16 %v254
        %v987 = vunpack.c.l.b16 %v255
        %v988 = vunpack.c.l.b16 %v256
        %v989 = vunpack.c.l.b16 %v257
        %v990 = vunpack.c.l.b16 %v258
        %v991 = vunpack.c.l.b16 %v259
        %v992 = vunpack.c.l.b16 %v260
        %v993 = vunpack.c.l.b16 %v261
        %v994 = vunpack.c.l.b16 %v262
        %v995 = vunpack.c.l.b16 %v263
        %v996 = vunpack.c.l.b16 %v264
        %v997 = vunpack.c.l.b16 %v265
        %v998 = vunpack.c.l.b16 %v266
        %v999 = vunpack.c.l.b16 %v267
        %v1000 = vunpack.c.l.b16 %v268
        %v1001 = vunpack.c.l.b16 %v269
        %v1002 = vunpack.c.l.b16 %v270
        %v1003 = vunpack.c.l.b16 %v271
        %v1004 = vunpack.c.l.b16 %v272
        %v1005 = vunpack.c.l.b16 %v273
        %v1006 = vunpack.c.l.b16 %v274
        %v1007 = vunpack.c.l.b16 %v275
        %v1008 = vunpack.c.l.b16 %v276
        %v1009 = vpack.c.b16 %v978, %v977
        %v1010 = vpack.c.b16 %v980, %v979
        %v1011 = vpack.c.b16 %v982, %v981
        %v1012 = vpack.c.b16 %v984, %v983
        %v1013 = vpack.c.b16 %v986, %v985
        %v1014 = vpack.c.b16 %v988, %v987
        %v1015 = vpack.c.b16 %v990, %v989
        %v1016 = vpack.c.b16 %v992, %v991
        %v1017 = vpack.c.b16 %v994, %v993
        %v1018 = vpack.c.b16 %v996, %v995
        %v1019 = vpack.c.b16 %v998, %v997
        %v1020 = vpack.c.b16 %v1000, %v999
        %v1021 = vpack.c.b16 %v1002, %v1001
        %v1022 = vpack.c.b16 %v1004, %v1003
        %v1023 = vpack.c.b16 %v1006, %v1005
        %v1024 = vpack.c.b16 %v1008, %v1007
        %v1026 = vsel %vm731, %v1009, 0
        %v1029 = vsel %vm731, %v1010, 0
        %v1032 = vsel %vm731, %v1011, 0
        %v1035 = vsel %vm731, %v1012, 0
        %v1038 = vsel %vm731, %v1013, 0
        %v1041 = vsel %vm731, %v1014, 0
        %v1044 = vsel %vm731, %v1015, 0
        %v1047 = vsel %vm731, %v1016, 0
        %v1050 = vsel %vm731, %v1017, 0
        %v1053 = vsel %vm731, %v1018, 0
        %v1056 = vsel %vm731, %v1019, 0
        %v1059 = vsel %vm731, %v1020, 0
        %v1062 = vsel %vm731, %v1021, 0
        %v1065 = vsel %vm731, %v1022, 0
        %v1068 = vsel %vm731, %v1023, 0
        %v1071 = vsel %vm731, %v1024, 0
        %v1074 = vsel %vm780, %v277, 0
        %1076 = vmatprep.subr.bf16.mxu0 0
        %1077 = vmatpush1.bf16.msra.mxu0 %v1074
        %1078 = vmatprep.subr.bf16.mxu0 0
        %1079 = vmatpush1.bf16.msra.mxu0 0
        %1080 = vmatprep.subr.bf16.mxu0 0
        %1081 = vmatpush1.bf16.msra.mxu0 0
        %1082 = vmatprep.subr.bf16.mxu0 0
        %1083 = vmatpush1.bf16.msra.mxu0 0
        %1084 = vmatprep.subr.bf16.mxu0 0
        %1085 = vmatpush1.bf16.msra.mxu0 0
        %1086 = vmatprep.subr.bf16.mxu0 0
        %1087 = vmatpush1.bf16.msra.mxu0 0
        %1088 = vmatprep.subr.bf16.mxu0 0
        %1089 = vmatpush1.bf16.msra.mxu0 0
        %1090 = vmatprep.subr.bf16.mxu0 0
        %1091 = vmatpush1.bf16.msra.mxu0 0
        %1092 = vmatprep.subr.bf16.mxu0 0
        %1093 = vmatpush1.bf16.msra.mxu0 0
        %1094 = vmatprep.subr.bf16.mxu0 0
        %1095 = vmatpush1.bf16.msra.mxu0 0
        %1096 = vmatprep.subr.bf16.mxu0 0
        %1097 = vmatpush1.bf16.msra.mxu0 0
        %1098 = vmatprep.subr.bf16.mxu0 0
        %1099 = vmatpush1.bf16.msra.mxu0 0
        %1100 = vmatprep.subr.bf16.mxu0 0
        %1101 = vmatpush1.bf16.msra.mxu0 0
        %1102 = vmatprep.subr.bf16.mxu0 0
        %1103 = vmatpush1.bf16.msra.mxu0 0
        %1104 = vmatprep.subr.bf16.mxu0 0
        %1105 = vmatpush1.bf16.msra.mxu0 0
        %1106 = vmatprep.subr.bf16.mxu0 0
        %1107 = vmatpush1.bf16.msra.mxu0 0
        %1108 = vmatprep.mubr.bf16.mxu0 0
        %1109 = vmatmul.mubr.bf16.gmra.mrb[0].mxu0 %v1026
        %v1110 = vpop.f32.mrb[0].mxu0
        %v1111 = vadd.f32 %v819, %v1110
        %v1112 = vpop.f32.mrb[0].mxu0
        %v1113 = vpop.f32.mrb[0].mxu0
        %v1114 = vadd.f32 %v822, %v1113
        %v1115 = vpop.f32.mrb[0].mxu0
        %1116 = vmatprep.mubr.bf16.mxu0 0
        %1117 = vmatmul.mubr.bf16.gmra.mrb[0].mxu0 %v1029
        %v1118 = vpop.f32.mrb[0].mxu0
        %v1119 = vadd.f32 %v827, %v1118
        %v1120 = vpop.f32.mrb[0].mxu0
        %v1121 = vpop.f32.mrb[0].mxu0
        %v1122 = vadd.f32 %v830, %v1121
        %v1123 = vpop.f32.mrb[0].mxu0
        %1124 = vmatprep.mubr.bf16.mxu0 0
        %1125 = vmatmul.mubr.bf16.gmra.mrb[0].mxu0 %v1032
        %v1126 = vpop.f32.mrb[0].mxu0
        %v1127 = vadd.f32 %v835, %v1126
        %v1128 = vpop.f32.mrb[0].mxu0
        %v1129 = vpop.f32.mrb[0].mxu0
        %v1130 = vadd.f32 %v838, %v1129
        %v1131 = vpop.f32.mrb[0].mxu0
        %1132 = vmatprep.mubr.bf16.mxu0 0
        %1133 = vmatmul.mubr.bf16.gmra.mrb[0].mxu0 %v1035
        %v1134 = vpop.f32.mrb[0].mxu0
        %v1135 = vadd.f32 %v843, %v1134
        %v1136 = vpop.f32.mrb[0].mxu0
        %v1137 = vpop.f32.mrb[0].mxu0
        %v1138 = vadd.f32 %v846, %v1137
        %v1139 = vpop.f32.mrb[0].mxu0
        %1140 = vmatprep.mubr.bf16.mxu0 0
        %1141 = vmatmul.mubr.bf16.gmra.mrb[0].mxu0 %v1038
        %v1142 = vpop.f32.mrb[0].mxu0
        %v1143 = vadd.f32 %v851, %v1142
        %v1144 = vpop.f32.mrb[0].mxu0
        %v1145 = vpop.f32.mrb[0].mxu0
        %v1146 = vadd.f32 %v854, %v1145
        %v1147 = vpop.f32.mrb[0].mxu0
        %1148 = vmatprep.mubr.bf16.mxu0 0
        %1149 = vmatmul.mubr.bf16.gmra.mrb[0].mxu0 %v1041
        %v1150 = vpop.f32.mrb[0].mxu0
        %v1151 = vadd.f32 %v859, %v1150
        %v1152 = vpop.f32.mrb[0].mxu0
        %v1153 = vpop.f32.mrb[0].mxu0
        %v1154 = vadd.f32 %v862, %v1153
        %v1155 = vpop.f32.mrb[0].mxu0
        %1156 = vmatprep.mubr.bf16.mxu0 0
        %1157 = vmatmul.mubr.bf16.gmra.mrb[0].mxu0 %v1044
        %v1158 = vpop.f32.mrb[0].mxu0
        %v1159 = vadd.f32 %v867, %v1158
        %v1160 = vpop.f32.mrb[0].mxu0
        %v1161 = vpop.f32.mrb[0].mxu0
        %v1162 = vadd.f32 %v870, %v1161
        %v1163 = vpop.f32.mrb[0].mxu0
        %1164 = vmatprep.mubr.bf16.mxu0 0
        %1165 = vmatmul.mubr.bf16.gmra.mrb[0].mxu0 %v1047
        %v1166 = vpop.f32.mrb[0].mxu0
        %v1167 = vadd.f32 %v875, %v1166
        %v1168 = vpop.f32.mrb[0].mxu0
        %v1169 = vpop.f32.mrb[0].mxu0
        %v1170 = vadd.f32 %v878, %v1169
        %v1171 = vpop.f32.mrb[0].mxu0
        %1172 = vmatprep.mubr.bf16.mxu0 0
        %1173 = vmatmul.mubr.bf16.gmra.mrb[0].mxu0 %v1050
        %v1174 = vpop.f32.mrb[0].mxu0
        %v1175 = vadd.f32 %v883, %v1174
        %v1176 = vpop.f32.mrb[0].mxu0
        %v1177 = vpop.f32.mrb[0].mxu0
        %v1178 = vadd.f32 %v886, %v1177
        %v1179 = vpop.f32.mrb[0].mxu0
        %1180 = vmatprep.mubr.bf16.mxu0 0
        %1181 = vmatmul.mubr.bf16.gmra.mrb[0].mxu0 %v1053
        %v1182 = vpop.f32.mrb[0].mxu0
        %v1183 = vadd.f32 %v891, %v1182
        %v1184 = vpop.f32.mrb[0].mxu0
        %v1185 = vpop.f32.mrb[0].mxu0
        %v1186 = vadd.f32 %v894, %v1185
        %v1187 = vpop.f32.mrb[0].mxu0
        %1188 = vmatprep.mubr.bf16.mxu0 0
        %1189 = vmatmul.mubr.bf16.gmra.mrb[0].mxu0 %v1056
        %v1190 = vpop.f32.mrb[0].mxu0
        %v1191 = vadd.f32 %v899, %v1190
        %v1192 = vpop.f32.mrb[0].mxu0
        %v1193 = vpop.f32.mrb[0].mxu0
        %v1194 = vadd.f32 %v902, %v1193
        %v1195 = vpop.f32.mrb[0].mxu0
        %1196 = vmatprep.mubr.bf16.mxu0 0
        %1197 = vmatmul.mubr.bf16.gmra.mrb[0].mxu0 %v1059
        %v1198 = vpop.f32.mrb[0].mxu0
        %v1199 = vadd.f32 %v907, %v1198
        %v1200 = vpop.f32.mrb[0].mxu0
        %v1201 = vpop.f32.mrb[0].mxu0
        %v1202 = vadd.f32 %v910, %v1201
        %v1203 = vpop.f32.mrb[0].mxu0
        %1204 = vmatprep.mubr.bf16.mxu0 0
        %1205 = vmatmul.mubr.bf16.gmra.mrb[0].mxu0 %v1062
        %v1206 = vpop.f32.mrb[0].mxu0
        %v1207 = vadd.f32 %v915, %v1206
        %v1208 = vpop.f32.mrb[0].mxu0
        %v1209 = vpop.f32.mrb[0].mxu0
        %v1210 = vadd.f32 %v918, %v1209
        %v1211 = vpop.f32.mrb[0].mxu0
        %1212 = vmatprep.mubr.bf16.mxu0 0
        %1213 = vmatmul.mubr.bf16.gmra.mrb[0].mxu0 %v1065
        %v1214 = vpop.f32.mrb[0].mxu0
        %v1215 = vadd.f32 %v923, %v1214
        %v1216 = vpop.f32.mrb[0].mxu0
        %v1217 = vpop.f32.mrb[0].mxu0
        %v1218 = vadd.f32 %v926, %v1217
        %v1219 = vpop.f32.mrb[0].mxu0
        %1220 = vmatprep.mubr.bf16.mxu0 0
        %1221 = vmatmul.mubr.bf16.gmra.mrb[0].mxu0 %v1068
        %v1222 = vpop.f32.mrb[0].mxu0
        %v1223 = vadd.f32 %v931, %v1222
        %v1224 = vpop.f32.mrb[0].mxu0
        %v1225 = vpop.f32.mrb[0].mxu0
        %v1226 = vadd.f32 %v934, %v1225
        %v1227 = vpop.f32.mrb[0].mxu0
        %1228 = vmatprep.mubr.bf16.mxu0 0
        %1229 = vmatmul.mubr.bf16.gmra.mrb[0].mxu0 %v1071
        %v1230 = vpop.f32.mrb[0].mxu0
        %v1231 = vadd.f32 %v939, %v1230
        %v1232 = vpop.f32.mrb[0].mxu0
        %v1233 = vpop.f32.mrb[0].mxu0
        %v1234 = vadd.f32 %v942, %v1233
        %v1235 = vpop.f32.mrb[0].mxu0
        %1236 = vdwg.mxu0
        %v1237 = vld [vmem:[%s213] sm:$0xe]
        %v1238 = vld [vmem:[%s213 + $0xc] sm:$0xe]
        %v1239 = vld [vmem:[%s213 + $0x18] sm:$0xe]
        %v1240 = vld [vmem:[%s213 + $0x24] sm:$0xe]
        %v1241 = vld [vmem:[%s213 + $0x30] sm:$0xe]
        %v1242 = vld [vmem:[%s213 + $0x3c] sm:$0xe]
        %v1243 = vld [vmem:[%s213 + $0x48] sm:$0xe]
        %v1244 = vld [vmem:[%s213 + $0x54] sm:$0xe]
        %v1245 = vld [vmem:[%s213 + $0x60] sm:$0xe]
        %v1246 = vld [vmem:[%s213 + $0x6c] sm:$0xe]
        %v1247 = vld [vmem:[%s213 + $0x78] sm:$0xe]
        %v1248 = vld [vmem:[%s213 + $0x84] sm:$0xe]
        %v1249 = vld [vmem:[%s213 + $0x90] sm:$0xe]
        %v1250 = vld [vmem:[%s213 + $0x9c] sm:$0xe]
        %v1251 = vld [vmem:[%s213 + $0xa8] sm:$0xe]
        %v1252 = vld [vmem:[%s213 + $0xb4] sm:$0xe]
        %vm1285 = vcmask 1042432
        %vm1286 = vcmask 1046532
        %vm1287 = vmor %vm1285, %vm1286
        %v1288 = vrot.slane %v1237, 5
        %v1289 = vrot.slane %v1288, 4
        %v1290 = vrot.slane %v246, 5
        %v1291 = vsel %vm1287, %v1289, %v1290
        %v1292 = vrot.slane %v1290, 4
        %v1293 = vrot.slane %v278, 5
        %v1294 = vsel %vm1287, %v1292, %v1293
        %v1295 = vrot.slane %v1238, 5
        %v1296 = vrot.slane %v1295, 4
        %v1297 = vrot.slane %v248, 5
        %v1298 = vsel %vm1287, %v1296, %v1297
        %v1299 = vrot.slane %v1297, 4
        %v1300 = vrot.slane %v279, 5
        %v1301 = vsel %vm1287, %v1299, %v1300
        %v1302 = vrot.slane %v1239, 5
        %v1303 = vrot.slane %v1302, 4
        %v1304 = vrot.slane %v250, 5
        %v1305 = vsel %vm1287, %v1303, %v1304
        %v1306 = vrot.slane %v1304, 4
        %v1307 = vrot.slane %v280, 5
        %v1308 = vsel %vm1287, %v1306, %v1307
        %v1309 = vrot.slane %v1240, 5
        %v1310 = vrot.slane %v1309, 4
        %v1311 = vrot.slane %v252, 5
        %v1312 = vsel %vm1287, %v1310, %v1311
        %v1313 = vrot.slane %v1311, 4
        %v1314 = vrot.slane %v281, 5
        %v1315 = vsel %vm1287, %v1313, %v1314
        %v1316 = vrot.slane %v1241, 5
        %v1317 = vrot.slane %v1316, 4
        %v1318 = vrot.slane %v254, 5
        %v1319 = vsel %vm1287, %v1317, %v1318
        %v1320 = vrot.slane %v1318, 4
        %v1321 = vrot.slane %v282, 5
        %v1322 = vsel %vm1287, %v1320, %v1321
        %v1323 = vrot.slane %v1242, 5
        %v1324 = vrot.slane %v1323, 4
        %v1325 = vrot.slane %v256, 5
        %v1326 = vsel %vm1287, %v1324, %v1325
        %v1327 = vrot.slane %v1325, 4
        %v1328 = vrot.slane %v283, 5
        %v1329 = vsel %vm1287, %v1327, %v1328
        %v1330 = vrot.slane %v1243, 5
        %v1331 = vrot.slane %v1330, 4
        %v1332 = vrot.slane %v258, 5
        %v1333 = vsel %vm1287, %v1331, %v1332
        %v1334 = vrot.slane %v1332, 4
        %v1335 = vrot.slane %v284, 5
        %v1336 = vsel %vm1287, %v1334, %v1335
        %v1337 = vrot.slane %v1244, 5
        %v1338 = vrot.slane %v1337, 4
        %v1339 = vrot.slane %v260, 5
        %v1340 = vsel %vm1287, %v1338, %v1339
        %v1341 = vrot.slane %v1339, 4
        %v1342 = vrot.slane %v285, 5
        %v1343 = vsel %vm1287, %v1341, %v1342
        %v1344 = vrot.slane %v1245, 5
        %v1345 = vrot.slane %v1344, 4
        %v1346 = vrot.slane %v262, 5
        %v1347 = vsel %vm1287, %v1345, %v1346
        %v1348 = vrot.slane %v1346, 4
        %v1349 = vrot.slane %v286, 5
        %v1350 = vsel %vm1287, %v1348, %v1349
        %v1351 = vrot.slane %v1246, 5
        %v1352 = vrot.slane %v1351, 4
        %v1353 = vrot.slane %v264, 5
        %v1354 = vsel %vm1287, %v1352, %v1353
        %v1355 = vrot.slane %v1353, 4
        %v1356 = vrot.slane %v287, 5
        %v1357 = vsel %vm1287, %v1355, %v1356
        %v1358 = vrot.slane %v1247, 5
        %v1359 = vrot.slane %v1358, 4
        %v1360 = vrot.slane %v266, 5
        %v1361 = vsel %vm1287, %v1359, %v1360
        %v1362 = vrot.slane %v1360, 4
        %v1363 = vrot.slane %v288, 5
        %v1364 = vsel %vm1287, %v1362, %v1363
        %v1365 = vrot.slane %v1248, 5
        %v1366 = vrot.slane %v1365, 4
        %v1367 = vrot.slane %v268, 5
        %v1368 = vsel %vm1287, %v1366, %v1367
        %v1369 = vrot.slane %v1367, 4
        %v1370 = vrot.slane %v289, 5
        %v1371 = vsel %vm1287, %v1369, %v1370
        %v1372 = vrot.slane %v1249, 5
        %v1373 = vrot.slane %v1372, 4
        %v1374 = vrot.slane %v270, 5
        %v1375 = vsel %vm1287, %v1373, %v1374
        %v1376 = vrot.slane %v1374, 4
        %v1377 = vrot.slane %v290, 5
        %v1378 = vsel %vm1287, %v1376, %v1377
        %v1379 = vrot.slane %v1250, 5
        %v1380 = vrot.slane %v1379, 4
        %v1381 = vrot.slane %v272, 5
        %v1382 = vsel %vm1287, %v1380, %v1381
        %v1383 = vrot.slane %v1381, 4
        %v1384 = vrot.slane %v291, 5
        %v1385 = vsel %vm1287, %v1383, %v1384
        %v1386 = vrot.slane %v1251, 5
        %v1387 = vrot.slane %v1386, 4
        %v1388 = vrot.slane %v274, 5
        %v1389 = vsel %vm1287, %v1387, %v1388
        %v1390 = vrot.slane %v1388, 4
        %v1391 = vrot.slane %v292, 5
        %v1392 = vsel %vm1287, %v1390, %v1391
        %v1393 = vrot.slane %v1252, 5
        %v1394 = vrot.slane %v1393, 4
        %v1395 = vrot.slane %v276, 5
        %v1396 = vsel %vm1287, %v1394, %v1395
        %v1397 = vrot.slane %v1395, 4
        %v1398 = vrot.slane %v293, 5
        %v1399 = vsel %vm1287, %v1397, %v1398
        %s1400 = scalar_lea.vmem [#allocation5], 8
        %v1401 = vld [vmem:[%s1400] sm:$0xf]
        %v1402 = vunpack.c.l.b16 %v1291
        %v1403 = vunpack.c.l.b16 %v1294
        %v1404 = vunpack.c.l.b16 %v1298
        %v1405 = vunpack.c.l.b16 %v1301
        %v1406 = vunpack.c.l.b16 %v1305
        %v1407 = vunpack.c.l.b16 %v1308
        %v1408 = vunpack.c.l.b16 %v1312
        %v1409 = vunpack.c.l.b16 %v1315
        %v1410 = vunpack.c.l.b16 %v1319
        %v1411 = vunpack.c.l.b16 %v1322
        %v1412 = vunpack.c.l.b16 %v1326
        %v1413 = vunpack.c.l.b16 %v1329
        %v1414 = vunpack.c.l.b16 %v1333
        %v1415 = vunpack.c.l.b16 %v1336
        %v1416 = vunpack.c.l.b16 %v1340
        %v1417 = vunpack.c.l.b16 %v1343
        %v1418 = vunpack.c.l.b16 %v1347
        %v1419 = vunpack.c.l.b16 %v1350
        %v1420 = vunpack.c.l.b16 %v1354
        %v1421 = vunpack.c.l.b16 %v1357
        %v1422 = vunpack.c.l.b16 %v1361
        %v1423 = vunpack.c.l.b16 %v1364
        %v1424 = vunpack.c.l.b16 %v1368
        %v1425 = vunpack.c.l.b16 %v1371
        %v1426 = vunpack.c.l.b16 %v1375
        %v1427 = vunpack.c.l.b16 %v1378
        %v1428 = vunpack.c.l.b16 %v1382
        %v1429 = vunpack.c.l.b16 %v1385
        %v1430 = vunpack.c.l.b16 %v1389
        %v1431 = vunpack.c.l.b16 %v1392
        %v1432 = vunpack.c.l.b16 %v1396
        %v1433 = vunpack.c.l.b16 %v1399
        %v1434 = vpack.c.b16 %v1403, %v1402
        %v1435 = vpack.c.b16 %v1405, %v1404
        %v1436 = vpack.c.b16 %v1407, %v1406
        %v1437 = vpack.c.b16 %v1409, %v1408
        %v1438 = vpack.c.b16 %v1411, %v1410
        %v1439 = vpack.c.b16 %v1413, %v1412
        %v1440 = vpack.c.b16 %v1415, %v1414
        %v1441 = vpack.c.b16 %v1417, %v1416
        %v1442 = vpack.c.b16 %v1419, %v1418
        %v1443 = vpack.c.b16 %v1421, %v1420
        %v1444 = vpack.c.b16 %v1423, %v1422
        %v1445 = vpack.c.b16 %v1425, %v1424
        %v1446 = vpack.c.b16 %v1427, %v1426
        %v1447 = vpack.c.b16 %v1429, %v1428
        %v1448 = vpack.c.b16 %v1431, %v1430
        %v1449 = vpack.c.b16 %v1433, %v1432
        %v1451 = vsel %vm731, %v1434, 0
        %v1454 = vsel %vm731, %v1435, 0
        %v1457 = vsel %vm731, %v1436, 0
        %v1460 = vsel %vm731, %v1437, 0
        %v1463 = vsel %vm731, %v1438, 0
        %v1466 = vsel %vm731, %v1439, 0
        %v1469 = vsel %vm731, %v1440, 0
        %v1472 = vsel %vm731, %v1441, 0
        %v1475 = vsel %vm731, %v1442, 0
        %v1478 = vsel %vm731, %v1443, 0
        %v1481 = vsel %vm731, %v1444, 0
        %v1484 = vsel %vm731, %v1445, 0
        %v1487 = vsel %vm731, %v1446, 0
        %v1490 = vsel %vm731, %v1447, 0
        %v1493 = vsel %vm731, %v1448, 0
        %v1496 = vsel %vm731, %v1449, 0
        %v1499 = vsel %vm780, %v1401, 0
        %1501 = vmatprep.subr.bf16.mxu0 0
        %1502 = vmatpush1.bf16.msra.mxu0 %v1499
        %1503 = vmatprep.subr.bf16.mxu0 0
        %1504 = vmatpush1.bf16.msra.mxu0 0
        %1505 = vmatprep.subr.bf16.mxu0 0
        %1506 = vmatpush1.bf16.msra.mxu0 0
        %1507 = vmatprep.subr.bf16.mxu0 0
        %1508 = vmatpush1.bf16.msra.mxu0 0
        %1509 = vmatprep.subr.bf16.mxu0 0
        %1510 = vmatpush1.bf16.msra.mxu0 0
        %1511 = vmatprep.subr.bf16.mxu0 0
        %1512 = vmatpush1.bf16.msra.mxu0 0
        %1513 = vmatprep.subr.bf16.mxu0 0
        %1514 = vmatpush1.bf16.msra.mxu0 0
        %1515 = vmatprep.subr.bf16.mxu0 0
        %1516 = vmatpush1.bf16.msra.mxu0 0
        %1517 = vmatprep.subr.bf16.mxu0 0
        %1518 = vmatpush1.bf16.msra.mxu0 0
        %1519 = vmatprep.subr.bf16.mxu0 0
        %1520 = vmatpush1.bf16.msra.mxu0 0
        %1521 = vmatprep.subr.bf16.mxu0 0
        %1522 = vmatpush1.bf16.msra.mxu0 0
        %1523 = vmatprep.subr.bf16.mxu0 0
        %1524 = vmatpush1.bf16.msra.mxu0 0
        %1525 = vmatprep.subr.bf16.mxu0 0
        %1526 = vmatpush1.bf16.msra.mxu0 0
        %1527 = vmatprep.subr.bf16.mxu0 0
        %1528 = vmatpush1.bf16.msra.mxu0 0
        %1529 = vmatprep.subr.bf16.mxu0 0
        %1530 = vmatpush1.bf16.msra.mxu0 0
        %1531 = vmatprep.subr.bf16.mxu0 0
        %1532 = vmatpush1.bf16.msra.mxu0 0
        %1533 = vmatprep.mubr.bf16.mxu0 0
        %1534 = vmatmul.mubr.bf16.gmra.mrb[0].mxu0 %v1451
        %v1535 = vpop.f32.mrb[0].mxu0
        %v1536 = vadd.f32 0.0, %v1535
        %v1537 = vpop.f32.mrb[0].mxu0
        %v1538 = vpop.f32.mrb[0].mxu0
        %v1539 = vadd.f32 0.0, %v1538
        %v1540 = vpop.f32.mrb[0].mxu0
        %1541 = vmatprep.mubr.bf16.mxu0 0
        %1542 = vmatmul.mubr.bf16.gmra.mrb[0].mxu0 %v1454
        %v1543 = vpop.f32.mrb[0].mxu0
        %v1544 = vadd.f32 0.0, %v1543
        %v1545 = vpop.f32.mrb[0].mxu0
        %v1546 = vpop.f32.mrb[0].mxu0
        %v1547 = vadd.f32 0.0, %v1546
        %v1548 = vpop.f32.mrb[0].mxu0
        %1549 = vmatprep.mubr.bf16.mxu0 0
        %1550 = vmatmul.mubr.bf16.gmra.mrb[0].mxu0 %v1457
        %v1551 = vpop.f32.mrb[0].mxu0
        %v1552 = vadd.f32 0.0, %v1551
        %v1553 = vpop.f32.mrb[0].mxu0
        %v1554 = vpop.f32.mrb[0].mxu0
        %v1555 = vadd.f32 0.0, %v1554
        %v1556 = vpop.f32.mrb[0].mxu0
        %1557 = vmatprep.mubr.bf16.mxu0 0
        %1558 = vmatmul.mubr.bf16.gmra.mrb[0].mxu0 %v1460
        %v1559 = vpop.f32.mrb[0].mxu0
        %v1560 = vadd.f32 0.0, %v1559
        %v1561 = vpop.f32.mrb[0].mxu0
        %v1562 = vpop.f32.mrb[0].mxu0
        %v1563 = vadd.f32 0.0, %v1562
        %v1564 = vpop.f32.mrb[0].mxu0
        %1565 = vmatprep.mubr.bf16.mxu0 0
        %1566 = vmatmul.mubr.bf16.gmra.mrb[0].mxu0 %v1463
        %v1567 = vpop.f32.mrb[0].mxu0
        %v1568 = vadd.f32 0.0, %v1567
        %v1569 = vpop.f32.mrb[0].mxu0
        %v1570 = vpop.f32.mrb[0].mxu0
        %v1571 = vadd.f32 0.0, %v1570
        %v1572 = vpop.f32.mrb[0].mxu0
        %1573 = vmatprep.mubr.bf16.mxu0 0
        %1574 = vmatmul.mubr.bf16.gmra.mrb[0].mxu0 %v1466
        %v1575 = vpop.f32.mrb[0].mxu0
        %v1576 = vadd.f32 0.0, %v1575
        %v1577 = vpop.f32.mrb[0].mxu0
        %v1578 = vpop.f32.mrb[0].mxu0
        %v1579 = vadd.f32 0.0, %v1578
        %v1580 = vpop.f32.mrb[0].mxu0
        %1581 = vmatprep.mubr.bf16.mxu0 0
        %1582 = vmatmul.mubr.bf16.gmra.mrb[0].mxu0 %v1469
        %v1583 = vpop.f32.mrb[0].mxu0
        %v1584 = vadd.f32 0.0, %v1583
        %v1585 = vpop.f32.mrb[0].mxu0
        %v1586 = vpop.f32.mrb[0].mxu0
        %v1587 = vadd.f32 0.0, %v1586
        %v1588 = vpop.f32.mrb[0].mxu0
        %1589 = vmatprep.mubr.bf16.mxu0 0
        %1590 = vmatmul.mubr.bf16.gmra.mrb[0].mxu0 %v1472
        %v1591 = vpop.f32.mrb[0].mxu0
        %v1592 = vadd.f32 0.0, %v1591
        %v1593 = vpop.f32.mrb[0].mxu0
        %v1594 = vpop.f32.mrb[0].mxu0
        %v1595 = vadd.f32 0.0, %v1594
        %v1596 = vpop.f32.mrb[0].mxu0
        %1597 = vmatprep.mubr.bf16.mxu0 0
        %1598 = vmatmul.mubr.bf16.gmra.mrb[0].mxu0 %v1475
        %v1599 = vpop.f32.mrb[0].mxu0
        %v1600 = vadd.f32 0.0, %v1599
        %v1601 = vpop.f32.mrb[0].mxu0
        %v1602 = vpop.f32.mrb[0].mxu0
        %v1603 = vadd.f32 0.0, %v1602
        %v1604 = vpop.f32.mrb[0].mxu0
        %1605 = vmatprep.mubr.bf16.mxu0 0
        %1606 = vmatmul.mubr.bf16.gmra.mrb[0].mxu0 %v1478
        %v1607 = vpop.f32.mrb[0].mxu0
        %v1608 = vadd.f32 0.0, %v1607
        %v1609 = vpop.f32.mrb[0].mxu0
        %v1610 = vpop.f32.mrb[0].mxu0
        %v1611 = vadd.f32 0.0, %v1610
        %v1612 = vpop.f32.mrb[0].mxu0
        %1613 = vmatprep.mubr.bf16.mxu0 0
        %1614 = vmatmul.mubr.bf16.gmra.mrb[0].mxu0 %v1481
        %v1615 = vpop.f32.mrb[0].mxu0
        %v1616 = vadd.f32 0.0, %v1615
        %v1617 = vpop.f32.mrb[0].mxu0
        %v1618 = vpop.f32.mrb[0].mxu0
        %v1619 = vadd.f32 0.0, %v1618
        %v1620 = vpop.f32.mrb[0].mxu0
        %1621 = vmatprep.mubr.bf16.mxu0 0
        %1622 = vmatmul.mubr.bf16.gmra.mrb[0].mxu0 %v1484
        %v1623 = vpop.f32.mrb[0].mxu0
        %v1624 = vadd.f32 0.0, %v1623
        %v1625 = vpop.f32.mrb[0].mxu0
        %v1626 = vpop.f32.mrb[0].mxu0
        %v1627 = vadd.f32 0.0, %v1626
        %v1628 = vpop.f32.mrb[0].mxu0
        %1629 = vmatprep.mubr.bf16.mxu0 0
        %1630 = vmatmul.mubr.bf16.gmra.mrb[0].mxu0 %v1487
        %v1631 = vpop.f32.mrb[0].mxu0
        %v1632 = vadd.f32 0.0, %v1631
        %v1633 = vpop.f32.mrb[0].mxu0
        %v1634 = vpop.f32.mrb[0].mxu0
        %v1635 = vadd.f32 0.0, %v1634
        %v1636 = vpop.f32.mrb[0].mxu0
        %1637 = vmatprep.mubr.bf16.mxu0 0
        %1638 = vmatmul.mubr.bf16.gmra.mrb[0].mxu0 %v1490
        %v1639 = vpop.f32.mrb[0].mxu0
        %v1640 = vadd.f32 0.0, %v1639
        %v1641 = vpop.f32.mrb[0].mxu0
        %v1642 = vpop.f32.mrb[0].mxu0
        %v1643 = vadd.f32 0.0, %v1642
        %v1644 = vpop.f32.mrb[0].mxu0
        %1645 = vmatprep.mubr.bf16.mxu0 0
        %1646 = vmatmul.mubr.bf16.gmra.mrb[0].mxu0 %v1493
        %v1647 = vpop.f32.mrb[0].mxu0
        %v1648 = vadd.f32 0.0, %v1647
        %v1649 = vpop.f32.mrb[0].mxu0
        %v1650 = vpop.f32.mrb[0].mxu0
        %v1651 = vadd.f32 0.0, %v1650
        %v1652 = vpop.f32.mrb[0].mxu0
        %1653 = vmatprep.mubr.bf16.mxu0 0
        %1654 = vmatmul.mubr.bf16.gmra.mrb[0].mxu0 %v1496
        %v1655 = vpop.f32.mrb[0].mxu0
        %v1656 = vadd.f32 0.0, %v1655
        %v1657 = vpop.f32.mrb[0].mxu0
        %v1658 = vpop.f32.mrb[0].mxu0
        %v1659 = vadd.f32 0.0, %v1658
        %v1660 = vpop.f32.mrb[0].mxu0
        %1661 = vdwg.mxu0
        %v1662 = vadd.f32 %v1111, %v1536
        %v1663 = vadd.f32 %v1114, %v1539
        %v1664 = vadd.f32 %v1119, %v1544
        %v1665 = vadd.f32 %v1122, %v1547
        %v1666 = vadd.f32 %v1127, %v1552
        %v1667 = vadd.f32 %v1130, %v1555
        %v1668 = vadd.f32 %v1135, %v1560
        %v1669 = vadd.f32 %v1138, %v1563
        %v1670 = vadd.f32 %v1143, %v1568
        %v1671 = vadd.f32 %v1146, %v1571
        %v1672 = vadd.f32 %v1151, %v1576
        %v1673 = vadd.f32 %v1154, %v1579
        %v1674 = vadd.f32 %v1159, %v1584
        %v1675 = vadd.f32 %v1162, %v1587
        %v1676 = vadd.f32 %v1167, %v1592
        %v1677 = vadd.f32 %v1170, %v1595
        %v1678 = vadd.f32 %v1175, %v1600
        %v1679 = vadd.f32 %v1178, %v1603
        %v1680 = vadd.f32 %v1183, %v1608
        %v1681 = vadd.f32 %v1186, %v1611
        %v1682 = vadd.f32 %v1191, %v1616
        %v1683 = vadd.f32 %v1194, %v1619
        %v1684 = vadd.f32 %v1199, %v1624
        %v1685 = vadd.f32 %v1202, %v1627
        %v1686 = vadd.f32 %v1207, %v1632
        %v1687 = vadd.f32 %v1210, %v1635
        %v1688 = vadd.f32 %v1215, %v1640
        %v1689 = vadd.f32 %v1218, %v1643
        %v1690 = vadd.f32 %v1223, %v1648
        %v1691 = vadd.f32 %v1226, %v1651
        %v1692 = vadd.f32 %v1231, %v1656
        %v1693 = vadd.f32 %v1234, %v1659
        %s1694 = scalar_lea.vmem %s213, 12 [#allocation2]
        %v1695 = vld [vmem:[%s1694] sm:$0xf]
        %v1696 = vld [vmem:[%s1694 + $0x4] sm:$0xf]
        %v1697 = vld [vmem:[%s1694 + $0xc] sm:$0xf]
        %v1698 = vld [vmem:[%s1694 + $0x10] sm:$0xf]
        %v1699 = vld [vmem:[%s1694 + $0x18] sm:$0xf]
        %v1700 = vld [vmem:[%s1694 + $0x1c] sm:$0xf]
        %v1701 = vld [vmem:[%s1694 + $0x24] sm:$0xf]
        %v1702 = vld [vmem:[%s1694 + $0x28] sm:$0xf]
        %v1703 = vld [vmem:[%s1694 + $0x30] sm:$0xf]
        %v1704 = vld [vmem:[%s1694 + $0x34] sm:$0xf]
        %v1705 = vld [vmem:[%s1694 + $0x3c] sm:$0xf]
        %v1706 = vld [vmem:[%s1694 + $0x40] sm:$0xf]
        %v1707 = vld [vmem:[%s1694 + $0x48] sm:$0xf]
        %v1708 = vld [vmem:[%s1694 + $0x4c] sm:$0xf]
        %v1709 = vld [vmem:[%s1694 + $0x54] sm:$0xf]
        %v1710 = vld [vmem:[%s1694 + $0x58] sm:$0xf]
        %v1711 = vld [vmem:[%s1694 + $0x60] sm:$0xf]
        %v1712 = vld [vmem:[%s1694 + $0x64] sm:$0xf]
        %v1713 = vld [vmem:[%s1694 + $0x6c] sm:$0xf]
        %v1714 = vld [vmem:[%s1694 + $0x70] sm:$0xf]
        %v1715 = vld [vmem:[%s1694 + $0x78] sm:$0xf]
        %v1716 = vld [vmem:[%s1694 + $0x7c] sm:$0xf]
        %v1717 = vld [vmem:[%s1694 + $0x84] sm:$0xf]
        %v1718 = vld [vmem:[%s1694 + $0x88] sm:$0xf]
        %v1719 = vld [vmem:[%s1694 + $0x90] sm:$0xf]
        %v1720 = vld [vmem:[%s1694 + $0x94] sm:$0xf]
        %v1721 = vld [vmem:[%s1694 + $0x9c] sm:$0xf]
        %v1722 = vld [vmem:[%s1694 + $0xa0] sm:$0xf]
        %v1723 = vld [vmem:[%s1694 + $0xa8] sm:$0xf]
        %v1724 = vld [vmem:[%s1694 + $0xac] sm:$0xf]
        %v1725 = vld [vmem:[%s1694 + $0xb4] sm:$0xf]
        %v1726 = vld [vmem:[%s1694 + $0xb8] sm:$0xf]
        %s1727 = scalar_lea.vmem [#allocation5], 12
        %v1728 = vld [vmem:[%s1727] sm:$0xf]
        %v1761 = vunpack.c.l.b16 %v1695
        %v1762 = vunpack.c.l.b16 %v1696
        %v1763 = vunpack.c.l.b16 %v1697
        %v1764 = vunpack.c.l.b16 %v1698
        %v1765 = vunpack.c.l.b16 %v1699
        %v1766 = vunpack.c.l.b16 %v1700
        %v1767 = vunpack.c.l.b16 %v1701
        %v1768 = vunpack.c.l.b16 %v1702
        %v1769 = vunpack.c.l.b16 %v1703
        %v1770 = vunpack.c.l.b16 %v1704
        %v1771 = vunpack.c.l.b16 %v1705
        %v1772 = vunpack.c.l.b16 %v1706
        %v1773 = vunpack.c.l.b16 %v1707
        %v1774 = vunpack.c.l.b16 %v1708
        %v1775 = vunpack.c.l.b16 %v1709
        %v1776 = vunpack.c.l.b16 %v1710
        %v1777 = vunpack.c.l.b16 %v1711
        %v1778 = vunpack.c.l.b16 %v1712
        %v1779 = vunpack.c.l.b16 %v1713
        %v1780 = vunpack.c.l.b16 %v1714
        %v1781 = vunpack.c.l.b16 %v1715
        %v1782 = vunpack.c.l.b16 %v1716
        %v1783 = vunpack.c.l.b16 %v1717
        %v1784 = vunpack.c.l.b16 %v1718
        %v1785 = vunpack.c.l.b16 %v1719
        %v1786 = vunpack.c.l.b16 %v1720
        %v1787 = vunpack.c.l.b16 %v1721
        %v1788 = vunpack.c.l.b16 %v1722
        %v1789 = vunpack.c.l.b16 %v1723
        %v1790 = vunpack.c.l.b16 %v1724
        %v1791 = vunpack.c.l.b16 %v1725
        %v1792 = vunpack.c.l.b16 %v1726
        %v1793 = vpack.c.b16 %v1762, %v1761
        %v1794 = vpack.c.b16 %v1764, %v1763
        %v1795 = vpack.c.b16 %v1766, %v1765
        %v1796 = vpack.c.b16 %v1768, %v1767
        %v1797 = vpack.c.b16 %v1770, %v1769
        %v1798 = vpack.c.b16 %v1772, %v1771
        %v1799 = vpack.c.b16 %v1774, %v1773
        %v1800 = vpack.c.b16 %v1776, %v1775
        %v1801 = vpack.c.b16 %v1778, %v1777
        %v1802 = vpack.c.b16 %v1780, %v1779
        %v1803 = vpack.c.b16 %v1782, %v1781
        %v1804 = vpack.c.b16 %v1784, %v1783
        %v1805 = vpack.c.b16 %v1786, %v1785
        %v1806 = vpack.c.b16 %v1788, %v1787
        %v1807 = vpack.c.b16 %v1790, %v1789
        %v1808 = vpack.c.b16 %v1792, %v1791
        %v1810 = vsel %vm731, %v1793, 0
        %v1813 = vsel %vm731, %v1794, 0
        %v1816 = vsel %vm731, %v1795, 0
        %v1819 = vsel %vm731, %v1796, 0
        %v1822 = vsel %vm731, %v1797, 0
        %v1825 = vsel %vm731, %v1798, 0
        %v1828 = vsel %vm731, %v1799, 0
        %v1831 = vsel %vm731, %v1800, 0
        %v1834 = vsel %vm731, %v1801, 0
        %v1837 = vsel %vm731, %v1802, 0
        %v1840 = vsel %vm731, %v1803, 0
        %v1843 = vsel %vm731, %v1804, 0
        %v1846 = vsel %vm731, %v1805, 0
        %v1849 = vsel %vm731, %v1806, 0
        %v1852 = vsel %vm731, %v1807, 0
        %v1855 = vsel %vm731, %v1808, 0
        %v1858 = vsel %vm780, %v1728, 0
        %1860 = vmatprep.subr.bf16.mxu0 0
        %1861 = vmatpush1.bf16.msra.mxu0 %v1858
        %1862 = vmatprep.subr.bf16.mxu0 0
        %1863 = vmatpush1.bf16.msra.mxu0 0
        %1864 = vmatprep.subr.bf16.mxu0 0
        %1865 = vmatpush1.bf16.msra.mxu0 0
        %1866 = vmatprep.subr.bf16.mxu0 0
        %1867 = vmatpush1.bf16.msra.mxu0 0
        %1868 = vmatprep.subr.bf16.mxu0 0
        %1869 = vmatpush1.bf16.msra.mxu0 0
        %1870 = vmatprep.subr.bf16.mxu0 0
        %1871 = vmatpush1.bf16.msra.mxu0 0
        %1872 = vmatprep.subr.bf16.mxu0 0
        %1873 = vmatpush1.bf16.msra.mxu0 0
        %1874 = vmatprep.subr.bf16.mxu0 0
        %1875 = vmatpush1.bf16.msra.mxu0 0
        %1876 = vmatprep.subr.bf16.mxu0 0
        %1877 = vmatpush1.bf16.msra.mxu0 0
        %1878 = vmatprep.subr.bf16.mxu0 0
        %1879 = vmatpush1.bf16.msra.mxu0 0
        %1880 = vmatprep.subr.bf16.mxu0 0
        %1881 = vmatpush1.bf16.msra.mxu0 0
        %1882 = vmatprep.subr.bf16.mxu0 0
        %1883 = vmatpush1.bf16.msra.mxu0 0
        %1884 = vmatprep.subr.bf16.mxu0 0
        %1885 = vmatpush1.bf16.msra.mxu0 0
        %1886 = vmatprep.subr.bf16.mxu0 0
        %1887 = vmatpush1.bf16.msra.mxu0 0
        %1888 = vmatprep.subr.bf16.mxu0 0
        %1889 = vmatpush1.bf16.msra.mxu0 0
        %1890 = vmatprep.subr.bf16.mxu0 0
        %1891 = vmatpush1.bf16.msra.mxu0 0
        %1892 = vmatprep.mubr.bf16.mxu0 0
        %1893 = vmatmul.mubr.bf16.gmra.mrb[0].mxu0 %v1810
        %v1894 = vpop.f32.mrb[0].mxu0
        %v1895 = vadd.f32 0.0, %v1894
        %v1896 = vpop.f32.mrb[0].mxu0
        %v1897 = vpop.f32.mrb[0].mxu0
        %v1898 = vadd.f32 0.0, %v1897
        %v1899 = vpop.f32.mrb[0].mxu0
        %1900 = vmatprep.mubr.bf16.mxu0 0
        %1901 = vmatmul.mubr.bf16.gmra.mrb[0].mxu0 %v1813
        %v1902 = vpop.f32.mrb[0].mxu0
        %v1903 = vadd.f32 0.0, %v1902
        %v1904 = vpop.f32.mrb[0].mxu0
        %v1905 = vpop.f32.mrb[0].mxu0
        %v1906 = vadd.f32 0.0, %v1905
        %v1907 = vpop.f32.mrb[0].mxu0
        %1908 = vmatprep.mubr.bf16.mxu0 0
        %1909 = vmatmul.mubr.bf16.gmra.mrb[0].mxu0 %v1816
        %v1910 = vpop.f32.mrb[0].mxu0
        %v1911 = vadd.f32 0.0, %v1910
        %v1912 = vpop.f32.mrb[0].mxu0
        %v1913 = vpop.f32.mrb[0].mxu0
        %v1914 = vadd.f32 0.0, %v1913
        %v1915 = vpop.f32.mrb[0].mxu0
        %1916 = vmatprep.mubr.bf16.mxu0 0
        %1917 = vmatmul.mubr.bf16.gmra.mrb[0].mxu0 %v1819
        %v1918 = vpop.f32.mrb[0].mxu0
        %v1919 = vadd.f32 0.0, %v1918
        %v1920 = vpop.f32.mrb[0].mxu0
        %v1921 = vpop.f32.mrb[0].mxu0
        %v1922 = vadd.f32 0.0, %v1921
        %v1923 = vpop.f32.mrb[0].mxu0
        %1924 = vmatprep.mubr.bf16.mxu0 0
        %1925 = vmatmul.mubr.bf16.gmra.mrb[0].mxu0 %v1822
        %v1926 = vpop.f32.mrb[0].mxu0
        %v1927 = vadd.f32 0.0, %v1926
        %v1928 = vpop.f32.mrb[0].mxu0
        %v1929 = vpop.f32.mrb[0].mxu0
        %v1930 = vadd.f32 0.0, %v1929
        %v1931 = vpop.f32.mrb[0].mxu0
        %1932 = vmatprep.mubr.bf16.mxu0 0
        %1933 = vmatmul.mubr.bf16.gmra.mrb[0].mxu0 %v1825
        %v1934 = vpop.f32.mrb[0].mxu0
        %v1935 = vadd.f32 0.0, %v1934
        %v1936 = vpop.f32.mrb[0].mxu0
        %v1937 = vpop.f32.mrb[0].mxu0
        %v1938 = vadd.f32 0.0, %v1937
        %v1939 = vpop.f32.mrb[0].mxu0
        %1940 = vmatprep.mubr.bf16.mxu0 0
        %1941 = vmatmul.mubr.bf16.gmra.mrb[0].mxu0 %v1828
        %v1942 = vpop.f32.mrb[0].mxu0
        %v1943 = vadd.f32 0.0, %v1942
        %v1944 = vpop.f32.mrb[0].mxu0
        %v1945 = vpop.f32.mrb[0].mxu0
        %v1946 = vadd.f32 0.0, %v1945
        %v1947 = vpop.f32.mrb[0].mxu0
        %1948 = vmatprep.mubr.bf16.mxu0 0
        %1949 = vmatmul.mubr.bf16.gmra.mrb[0].mxu0 %v1831
        %v1950 = vpop.f32.mrb[0].mxu0
        %v1951 = vadd.f32 0.0, %v1950
        %v1952 = vpop.f32.mrb[0].mxu0
        %v1953 = vpop.f32.mrb[0].mxu0
        %v1954 = vadd.f32 0.0, %v1953
        %v1955 = vpop.f32.mrb[0].mxu0
        %1956 = vmatprep.mubr.bf16.mxu0 0
        %1957 = vmatmul.mubr.bf16.gmra.mrb[0].mxu0 %v1834
        %v1958 = vpop.f32.mrb[0].mxu0
        %v1959 = vadd.f32 0.0, %v1958
        %v1960 = vpop.f32.mrb[0].mxu0
        %v1961 = vpop.f32.mrb[0].mxu0
        %v1962 = vadd.f32 0.0, %v1961
        %v1963 = vpop.f32.mrb[0].mxu0
        %1964 = vmatprep.mubr.bf16.mxu0 0
        %1965 = vmatmul.mubr.bf16.gmra.mrb[0].mxu0 %v1837
        %v1966 = vpop.f32.mrb[0].mxu0
        %v1967 = vadd.f32 0.0, %v1966
        %v1968 = vpop.f32.mrb[0].mxu0
        %v1969 = vpop.f32.mrb[0].mxu0
        %v1970 = vadd.f32 0.0, %v1969
        %v1971 = vpop.f32.mrb[0].mxu0
        %1972 = vmatprep.mubr.bf16.mxu0 0
        %1973 = vmatmul.mubr.bf16.gmra.mrb[0].mxu0 %v1840
        %v1974 = vpop.f32.mrb[0].mxu0
        %v1975 = vadd.f32 0.0, %v1974
        %v1976 = vpop.f32.mrb[0].mxu0
        %v1977 = vpop.f32.mrb[0].mxu0
        %v1978 = vadd.f32 0.0, %v1977
        %v1979 = vpop.f32.mrb[0].mxu0
        %1980 = vmatprep.mubr.bf16.mxu0 0
        %1981 = vmatmul.mubr.bf16.gmra.mrb[0].mxu0 %v1843
        %v1982 = vpop.f32.mrb[0].mxu0
        %v1983 = vadd.f32 0.0, %v1982
        %v1984 = vpop.f32.mrb[0].mxu0
        %v1985 = vpop.f32.mrb[0].mxu0
        %v1986 = vadd.f32 0.0, %v1985
        %v1987 = vpop.f32.mrb[0].mxu0
        %1988 = vmatprep.mubr.bf16.mxu0 0
        %1989 = vmatmul.mubr.bf16.gmra.mrb[0].mxu0 %v1846
        %v1990 = vpop.f32.mrb[0].mxu0
        %v1991 = vadd.f32 0.0, %v1990
        %v1992 = vpop.f32.mrb[0].mxu0
        %v1993 = vpop.f32.mrb[0].mxu0
        %v1994 = vadd.f32 0.0, %v1993
        %v1995 = vpop.f32.mrb[0].mxu0
        %1996 = vmatprep.mubr.bf16.mxu0 0
        %1997 = vmatmul.mubr.bf16.gmra.mrb[0].mxu0 %v1849
        %v1998 = vpop.f32.mrb[0].mxu0
        %v1999 = vadd.f32 0.0, %v1998
        %v2000 = vpop.f32.mrb[0].mxu0
        %v2001 = vpop.f32.mrb[0].mxu0
        %v2002 = vadd.f32 0.0, %v2001
        %v2003 = vpop.f32.mrb[0].mxu0
        %2004 = vmatprep.mubr.bf16.mxu0 0
        %2005 = vmatmul.mubr.bf16.gmra.mrb[0].mxu0 %v1852
        %v2006 = vpop.f32.mrb[0].mxu0
        %v2007 = vadd.f32 0.0, %v2006
        %v2008 = vpop.f32.mrb[0].mxu0
        %v2009 = vpop.f32.mrb[0].mxu0
        %v2010 = vadd.f32 0.0, %v2009
        %v2011 = vpop.f32.mrb[0].mxu0
        %2012 = vmatprep.mubr.bf16.mxu0 0
        %2013 = vmatmul.mubr.bf16.gmra.mrb[0].mxu0 %v1855
        %v2014 = vpop.f32.mrb[0].mxu0
        %v2015 = vadd.f32 0.0, %v2014
        %v2016 = vpop.f32.mrb[0].mxu0
        %v2017 = vpop.f32.mrb[0].mxu0
        %v2018 = vadd.f32 0.0, %v2017
        %v2019 = vpop.f32.mrb[0].mxu0
        %2020 = vdwg.mxu0
        %v2021 = vadd.f32 %v1662, %v1895
        %v2022 = vadd.f32 %v1663, %v1898
        %v2023 = vadd.f32 %v1664, %v1903
        %v2024 = vadd.f32 %v1665, %v1906
        %v2025 = vadd.f32 %v1666, %v1911
        %v2026 = vadd.f32 %v1667, %v1914
        %v2027 = vadd.f32 %v1668, %v1919
        %v2028 = vadd.f32 %v1669, %v1922
        %v2029 = vadd.f32 %v1670, %v1927
        %v2030 = vadd.f32 %v1671, %v1930
        %v2031 = vadd.f32 %v1672, %v1935
        %v2032 = vadd.f32 %v1673, %v1938
        %v2033 = vadd.f32 %v1674, %v1943
        %v2034 = vadd.f32 %v1675, %v1946
        %v2035 = vadd.f32 %v1676, %v1951
        %v2036 = vadd.f32 %v1677, %v1954
        %v2037 = vadd.f32 %v1678, %v1959
        %v2038 = vadd.f32 %v1679, %v1962
        %v2039 = vadd.f32 %v1680, %v1967
        %v2040 = vadd.f32 %v1681, %v1970
        %v2041 = vadd.f32 %v1682, %v1975
        %v2042 = vadd.f32 %v1683, %v1978
        %v2043 = vadd.f32 %v1684, %v1983
        %v2044 = vadd.f32 %v1685, %v1986
        %v2045 = vadd.f32 %v1686, %v1991
        %v2046 = vadd.f32 %v1687, %v1994
        %v2047 = vadd.f32 %v1688, %v1999
        %v2048 = vadd.f32 %v1689, %v2002
        %v2049 = vadd.f32 %v1690, %v2007
        %v2050 = vadd.f32 %v1691, %v2010
        %v2051 = vadd.f32 %v1692, %v2015
        %v2052 = vadd.f32 %v1693, %v2018
        %v2053 = vld [vmem:[%s1694] sm:$0xf]
        %v2054 = vld [vmem:[%s1694 + $0x4] sm:$0xf]
        %v2055 = vld [vmem:[%s1694 + $0x8] sm:$0x1]
        %v2056 = vld [vmem:[%s1694 + $0xc] sm:$0xf]
        %v2057 = vld [vmem:[%s1694 + $0x10] sm:$0xf]
        %v2058 = vld [vmem:[%s1694 + $0x14] sm:$0x1]
        %v2059 = vld [vmem:[%s1694 + $0x18] sm:$0xf]
        %v2060 = vld [vmem:[%s1694 + $0x1c] sm:$0xf]
        %v2061 = vld [vmem:[%s1694 + $0x20] sm:$0x1]
        %v2062 = vld [vmem:[%s1694 + $0x24] sm:$0xf]
        %v2063 = vld [vmem:[%s1694 + $0x28] sm:$0xf]
        %v2064 = vld [vmem:[%s1694 + $0x2c] sm:$0x1]
        %v2065 = vld [vmem:[%s1694 + $0x30] sm:$0xf]
        %v2066 = vld [vmem:[%s1694 + $0x34] sm:$0xf]
        %v2067 = vld [vmem:[%s1694 + $0x38] sm:$0x1]
        %v2068 = vld [vmem:[%s1694 + $0x3c] sm:$0xf]
        %v2069 = vld [vmem:[%s1694 + $0x40] sm:$0xf]
        %v2070 = vld [vmem:[%s1694 + $0x44] sm:$0x1]
        %v2071 = vld [vmem:[%s1694 + $0x48] sm:$0xf]
        %v2072 = vld [vmem:[%s1694 + $0x4c] sm:$0xf]
        %v2073 = vld [vmem:[%s1694 + $0x50] sm:$0x1]
        %v2074 = vld [vmem:[%s1694 + $0x54] sm:$0xf]
        %v2075 = vld [vmem:[%s1694 + $0x58] sm:$0xf]
        %v2076 = vld [vmem:[%s1694 + $0x5c] sm:$0x1]
        %v2077 = vld [vmem:[%s1694 + $0x60] sm:$0xf]
        %v2078 = vld [vmem:[%s1694 + $0x64] sm:$0xf]
        %v2079 = vld [vmem:[%s1694 + $0x68] sm:$0x1]
        %v2080 = vld [vmem:[%s1694 + $0x6c] sm:$0xf]
        %v2081 = vld [vmem:[%s1694 + $0x70] sm:$0xf]
        %v2082 = vld [vmem:[%s1694 + $0x74] sm:$0x1]
        %v2083 = vld [vmem:[%s1694 + $0x78] sm:$0xf]
        %v2084 = vld [vmem:[%s1694 + $0x7c] sm:$0xf]
        %v2085 = vld [vmem:[%s1694 + $0x80] sm:$0x1]
        %v2086 = vld [vmem:[%s1694 + $0x84] sm:$0xf]
        %v2087 = vld [vmem:[%s1694 + $0x88] sm:$0xf]
        %v2088 = vld [vmem:[%s1694 + $0x8c] sm:$0x1]
        %v2089 = vld [vmem:[%s1694 + $0x90] sm:$0xf]
        %v2090 = vld [vmem:[%s1694 + $0x94] sm:$0xf]
        %v2091 = vld [vmem:[%s1694 + $0x98] sm:$0x1]
        %v2092 = vld [vmem:[%s1694 + $0x9c] sm:$0xf]
        %v2093 = vld [vmem:[%s1694 + $0xa0] sm:$0xf]
        %v2094 = vld [vmem:[%s1694 + $0xa4] sm:$0x1]
        %v2095 = vld [vmem:[%s1694 + $0xa8] sm:$0xf]
        %v2096 = vld [vmem:[%s1694 + $0xac] sm:$0xf]
        %v2097 = vld [vmem:[%s1694 + $0xb0] sm:$0x1]
        %v2098 = vld [vmem:[%s1694 + $0xb4] sm:$0xf]
        %v2099 = vld [vmem:[%s1694 + $0xb8] sm:$0xf]
        %v2100 = vld [vmem:[%s1694 + $0xbc] sm:$0x1]
        %v2102 = vshrl.u32 %v2053, 16
        %v2104 = vrot.slane %v2102, 4
        %v2105 = vshll.u32 %v2053, 16
        %v2107 = vrot.slane %v2105, 5
        %v2108 = vor.u32 %v2104, %v2107
        %v2109 = vrot.slane %v2108, 4
        %v2111 = vshll.u32 %v2054, 16
        %v2113 = vrot.slane %v2111, 5
        %v2114 = vsel %vm296, %v2109, %v2113
        %v2115 = vshrl.u32 %v2054, 16
        %v2117 = vrot.slane %v2115, 4
        %v2118 = vor.u32 %v2117, %v2113
        %v2119 = vrot.slane %v2118, 4
        %v2121 = vshll.u32 %v2055, 16
        %v2123 = vrot.slane %v2121, 5
        %v2124 = vsel %vm296, %v2119, %v2123
        %v2126 = vshrl.u32 %v2056, 16
        %v2128 = vrot.slane %v2126, 4
        %v2129 = vshll.u32 %v2056, 16
        %v2131 = vrot.slane %v2129, 5
        %v2132 = vor.u32 %v2128, %v2131
        %v2133 = vrot.slane %v2132, 4
        %v2135 = vshll.u32 %v2057, 16
        %v2137 = vrot.slane %v2135, 5
        %v2138 = vsel %vm296, %v2133, %v2137
        %v2139 = vshrl.u32 %v2057, 16
        %v2141 = vrot.slane %v2139, 4
        %v2142 = vor.u32 %v2141, %v2137
        %v2143 = vrot.slane %v2142, 4
        %v2145 = vshll.u32 %v2058, 16
        %v2147 = vrot.slane %v2145, 5
        %v2148 = vsel %vm296, %v2143, %v2147
        %v2150 = vshrl.u32 %v2059, 16
        %v2152 = vrot.slane %v2150, 4
        %v2153 = vshll.u32 %v2059, 16
        %v2155 = vrot.slane %v2153, 5
        %v2156 = vor.u32 %v2152, %v2155
        %v2157 = vrot.slane %v2156, 4
        %v2159 = vshll.u32 %v2060, 16
        %v2161 = vrot.slane %v2159, 5
        %v2162 = vsel %vm296, %v2157, %v2161
        %v2163 = vshrl.u32 %v2060, 16
        %v2165 = vrot.slane %v2163, 4
        %v2166 = vor.u32 %v2165, %v2161
        %v2167 = vrot.slane %v2166, 4
        %v2169 = vshll.u32 %v2061, 16
        %v2171 = vrot.slane %v2169, 5
        %v2172 = vsel %vm296, %v2167, %v2171
        %v2174 = vshrl.u32 %v2062, 16
        %v2176 = vrot.slane %v2174, 4
        %v2177 = vshll.u32 %v2062, 16
        %v2179 = vrot.slane %v2177, 5
        %v2180 = vor.u32 %v2176, %v2179
        %v2181 = vrot.slane %v2180, 4
        %v2183 = vshll.u32 %v2063, 16
        %v2185 = vrot.slane %v2183, 5
        %v2186 = vsel %vm296, %v2181, %v2185
        %v2187 = vshrl.u32 %v2063, 16
        %v2189 = vrot.slane %v2187, 4
        %v2190 = vor.u32 %v2189, %v2185
        %v2191 = vrot.slane %v2190, 4
        %v2193 = vshll.u32 %v2064, 16
        %v2195 = vrot.slane %v2193, 5
        %v2196 = vsel %vm296, %v2191, %v2195
        %v2198 = vshrl.u32 %v2065, 16
        %v2200 = vrot.slane %v2198, 4
        %v2201 = vshll.u32 %v2065, 16
        %v2203 = vrot.slane %v2201, 5
        %v2204 = vor.u32 %v2200, %v2203
        %v2205 = vrot.slane %v2204, 4
        %v2207 = vshll.u32 %v2066, 16
        %v2209 = vrot.slane %v2207, 5
        %v2210 = vsel %vm296, %v2205, %v2209
        %v2211 = vshrl.u32 %v2066, 16
        %v2213 = vrot.slane %v2211, 4
        %v2214 = vor.u32 %v2213, %v2209
        %v2215 = vrot.slane %v2214, 4
        %v2217 = vshll.u32 %v2067, 16
        %v2219 = vrot.slane %v2217, 5
        %v2220 = vsel %vm296, %v2215, %v2219
        %v2222 = vshrl.u32 %v2068, 16
        %v2224 = vrot.slane %v2222, 4
        %v2225 = vshll.u32 %v2068, 16
        %v2227 = vrot.slane %v2225, 5
        %v2228 = vor.u32 %v2224, %v2227
        %v2229 = vrot.slane %v2228, 4
        %v2231 = vshll.u32 %v2069, 16
        %v2233 = vrot.slane %v2231, 5
        %v2234 = vsel %vm296, %v2229, %v2233
        %v2235 = vshrl.u32 %v2069, 16
        %v2237 = vrot.slane %v2235, 4
        %v2238 = vor.u32 %v2237, %v2233
        %v2239 = vrot.slane %v2238, 4
        %v2241 = vshll.u32 %v2070, 16
        %v2243 = vrot.slane %v2241, 5
        %v2244 = vsel %vm296, %v2239, %v2243
        %v2246 = vshrl.u32 %v2071, 16
        %v2248 = vrot.slane %v2246, 4
        %v2249 = vshll.u32 %v2071, 16
        %v2251 = vrot.slane %v2249, 5
        %v2252 = vor.u32 %v2248, %v2251
        %v2253 = vrot.slane %v2252, 4
        %v2255 = vshll.u32 %v2072, 16
        %v2257 = vrot.slane %v2255, 5
        %v2258 = vsel %vm296, %v2253, %v2257
        %v2259 = vshrl.u32 %v2072, 16
        %v2261 = vrot.slane %v2259, 4
        %v2262 = vor.u32 %v2261, %v2257
        %v2263 = vrot.slane %v2262, 4
        %v2265 = vshll.u32 %v2073, 16
        %v2267 = vrot.slane %v2265, 5
        %v2268 = vsel %vm296, %v2263, %v2267
        %v2270 = vshrl.u32 %v2074, 16
        %v2272 = vrot.slane %v2270, 4
        %v2273 = vshll.u32 %v2074, 16
        %v2275 = vrot.slane %v2273, 5
        %v2276 = vor.u32 %v2272, %v2275
        %v2277 = vrot.slane %v2276, 4
        %v2279 = vshll.u32 %v2075, 16
        %v2281 = vrot.slane %v2279, 5
        %v2282 = vsel %vm296, %v2277, %v2281
        %v2283 = vshrl.u32 %v2075, 16
        %v2285 = vrot.slane %v2283, 4
        %v2286 = vor.u32 %v2285, %v2281
        %v2287 = vrot.slane %v2286, 4
        %v2289 = vshll.u32 %v2076, 16
        %v2291 = vrot.slane %v2289, 5
        %v2292 = vsel %vm296, %v2287, %v2291
        %v2294 = vshrl.u32 %v2077, 16
        %v2296 = vrot.slane %v2294, 4
        %v2297 = vshll.u32 %v2077, 16
        %v2299 = vrot.slane %v2297, 5
        %v2300 = vor.u32 %v2296, %v2299
        %v2301 = vrot.slane %v2300, 4
        %v2303 = vshll.u32 %v2078, 16
        %v2305 = vrot.slane %v2303, 5
        %v2306 = vsel %vm296, %v2301, %v2305
        %v2307 = vshrl.u32 %v2078, 16
        %v2309 = vrot.slane %v2307, 4
        %v2310 = vor.u32 %v2309, %v2305
        %v2311 = vrot.slane %v2310, 4
        %v2313 = vshll.u32 %v2079, 16
        %v2315 = vrot.slane %v2313, 5
        %v2316 = vsel %vm296, %v2311, %v2315
        %v2318 = vshrl.u32 %v2080, 16
        %v2320 = vrot.slane %v2318, 4
        %v2321 = vshll.u32 %v2080, 16
        %v2323 = vrot.slane %v2321, 5
        %v2324 = vor.u32 %v2320, %v2323
        %v2325 = vrot.slane %v2324, 4
        %v2327 = vshll.u32 %v2081, 16
        %v2329 = vrot.slane %v2327, 5
        %v2330 = vsel %vm296, %v2325, %v2329
        %v2331 = vshrl.u32 %v2081, 16
        %v2333 = vrot.slane %v2331, 4
        %v2334 = vor.u32 %v2333, %v2329
        %v2335 = vrot.slane %v2334, 4
        %v2337 = vshll.u32 %v2082, 16
        %v2339 = vrot.slane %v2337, 5
        %v2340 = vsel %vm296, %v2335, %v2339
        %v2342 = vshrl.u32 %v2083, 16
        %v2344 = vrot.slane %v2342, 4
        %v2345 = vshll.u32 %v2083, 16
        %v2347 = vrot.slane %v2345, 5
        %v2348 = vor.u32 %v2344, %v2347
        %v2349 = vrot.slane %v2348, 4
        %v2351 = vshll.u32 %v2084, 16
        %v2353 = vrot.slane %v2351, 5
        %v2354 = vsel %vm296, %v2349, %v2353
        %v2355 = vshrl.u32 %v2084, 16
        %v2357 = vrot.slane %v2355, 4
        %v2358 = vor.u32 %v2357, %v2353
        %v2359 = vrot.slane %v2358, 4
        %v2361 = vshll.u32 %v2085, 16
        %v2363 = vrot.slane %v2361, 5
        %v2364 = vsel %vm296, %v2359, %v2363
        %v2366 = vshrl.u32 %v2086, 16
        %v2368 = vrot.slane %v2366, 4
        %v2369 = vshll.u32 %v2086, 16
        %v2371 = vrot.slane %v2369, 5
        %v2372 = vor.u32 %v2368, %v2371
        %v2373 = vrot.slane %v2372, 4
        %v2375 = vshll.u32 %v2087, 16
        %v2377 = vrot.slane %v2375, 5
        %v2378 = vsel %vm296, %v2373, %v2377
        %v2379 = vshrl.u32 %v2087, 16
        %v2381 = vrot.slane %v2379, 4
        %v2382 = vor.u32 %v2381, %v2377
        %v2383 = vrot.slane %v2382, 4
        %v2385 = vshll.u32 %v2088, 16
        %v2387 = vrot.slane %v2385, 5
        %v2388 = vsel %vm296, %v2383, %v2387
        %v2390 = vshrl.u32 %v2089, 16
        %v2392 = vrot.slane %v2390, 4
        %v2393 = vshll.u32 %v2089, 16
        %v2395 = vrot.slane %v2393, 5
        %v2396 = vor.u32 %v2392, %v2395
        %v2397 = vrot.slane %v2396, 4
        %v2399 = vshll.u32 %v2090, 16
        %v2401 = vrot.slane %v2399, 5
        %v2402 = vsel %vm296, %v2397, %v2401
        %v2403 = vshrl.u32 %v2090, 16
        %v2405 = vrot.slane %v2403, 4
        %v2406 = vor.u32 %v2405, %v2401
        %v2407 = vrot.slane %v2406, 4
        %v2409 = vshll.u32 %v2091, 16
        %v2411 = vrot.slane %v2409, 5
        %v2412 = vsel %vm296, %v2407, %v2411
        %v2414 = vshrl.u32 %v2092, 16
        %v2416 = vrot.slane %v2414, 4
        %v2417 = vshll.u32 %v2092, 16
        %v2419 = vrot.slane %v2417, 5
        %v2420 = vor.u32 %v2416, %v2419
        %v2421 = vrot.slane %v2420, 4
        %v2423 = vshll.u32 %v2093, 16
        %v2425 = vrot.slane %v2423, 5
        %v2426 = vsel %vm296, %v2421, %v2425
        %v2427 = vshrl.u32 %v2093, 16
        %v2429 = vrot.slane %v2427, 4
        %v2430 = vor.u32 %v2429, %v2425
        %v2431 = vrot.slane %v2430, 4
        %v2433 = vshll.u32 %v2094, 16
        %v2435 = vrot.slane %v2433, 5
        %v2436 = vsel %vm296, %v2431, %v2435
        %v2438 = vshrl.u32 %v2095, 16
        %v2440 = vrot.slane %v2438, 4
        %v2441 = vshll.u32 %v2095, 16
        %v2443 = vrot.slane %v2441, 5
        %v2444 = vor.u32 %v2440, %v2443
        %v2445 = vrot.slane %v2444, 4
        %v2447 = vshll.u32 %v2096, 16
        %v2449 = vrot.slane %v2447, 5
        %v2450 = vsel %vm296, %v2445, %v2449
        %v2451 = vshrl.u32 %v2096, 16
        %v2453 = vrot.slane %v2451, 4
        %v2454 = vor.u32 %v2453, %v2449
        %v2455 = vrot.slane %v2454, 4
        %v2457 = vshll.u32 %v2097, 16
        %v2459 = vrot.slane %v2457, 5
        %v2460 = vsel %vm296, %v2455, %v2459
        %v2462 = vshrl.u32 %v2098, 16
        %v2464 = vrot.slane %v2462, 4
        %v2465 = vshll.u32 %v2098, 16
        %v2467 = vrot.slane %v2465, 5
        %v2468 = vor.u32 %v2464, %v2467
        %v2469 = vrot.slane %v2468, 4
        %v2471 = vshll.u32 %v2099, 16
        %v2473 = vrot.slane %v2471, 5
        %v2474 = vsel %vm296, %v2469, %v2473
        %v2475 = vshrl.u32 %v2099, 16
        %v2477 = vrot.slane %v2475, 4
        %v2478 = vor.u32 %v2477, %v2473
        %v2479 = vrot.slane %v2478, 4
        %v2481 = vshll.u32 %v2100, 16
        %v2483 = vrot.slane %v2481, 5
        %v2484 = vsel %vm296, %v2479, %v2483
        %s2485 = scalar_lea.vmem [#allocation5], 16
        %v2486 = vld [vmem:[%s2485] sm:$0xf]
        %v2487 = vunpack.c.l.b16 %v2114
        %v2488 = vunpack.c.l.b16 %v2124
        %v2489 = vunpack.c.l.b16 %v2138
        %v2490 = vunpack.c.l.b16 %v2148
        %v2491 = vunpack.c.l.b16 %v2162
        %v2492 = vunpack.c.l.b16 %v2172
        %v2493 = vunpack.c.l.b16 %v2186
        %v2494 = vunpack.c.l.b16 %v2196
        %v2495 = vunpack.c.l.b16 %v2210
        %v2496 = vunpack.c.l.b16 %v2220
        %v2497 = vunpack.c.l.b16 %v2234
        %v2498 = vunpack.c.l.b16 %v2244
        %v2499 = vunpack.c.l.b16 %v2258
        %v2500 = vunpack.c.l.b16 %v2268
        %v2501 = vunpack.c.l.b16 %v2282
        %v2502 = vunpack.c.l.b16 %v2292
        %v2503 = vunpack.c.l.b16 %v2306
        %v2504 = vunpack.c.l.b16 %v2316
        %v2505 = vunpack.c.l.b16 %v2330
        %v2506 = vunpack.c.l.b16 %v2340
        %v2507 = vunpack.c.l.b16 %v2354
        %v2508 = vunpack.c.l.b16 %v2364
        %v2509 = vunpack.c.l.b16 %v2378
        %v2510 = vunpack.c.l.b16 %v2388
        %v2511 = vunpack.c.l.b16 %v2402
        %v2512 = vunpack.c.l.b16 %v2412
        %v2513 = vunpack.c.l.b16 %v2426
        %v2514 = vunpack.c.l.b16 %v2436
        %v2515 = vunpack.c.l.b16 %v2450
        %v2516 = vunpack.c.l.b16 %v2460
        %v2517 = vunpack.c.l.b16 %v2474
        %v2518 = vunpack.c.l.b16 %v2484
        %v2519 = vpack.c.b16 %v2488, %v2487
        %v2520 = vpack.c.b16 %v2490, %v2489
        %v2521 = vpack.c.b16 %v2492, %v2491
        %v2522 = vpack.c.b16 %v2494, %v2493
        %v2523 = vpack.c.b16 %v2496, %v2495
        %v2524 = vpack.c.b16 %v2498, %v2497
        %v2525 = vpack.c.b16 %v2500, %v2499
        %v2526 = vpack.c.b16 %v2502, %v2501
        %v2527 = vpack.c.b16 %v2504, %v2503
        %v2528 = vpack.c.b16 %v2506, %v2505
        %v2529 = vpack.c.b16 %v2508, %v2507
        %v2530 = vpack.c.b16 %v2510, %v2509
        %v2531 = vpack.c.b16 %v2512, %v2511
        %v2532 = vpack.c.b16 %v2514, %v2513
        %v2533 = vpack.c.b16 %v2516, %v2515
        %v2534 = vpack.c.b16 %v2518, %v2517
        %v2536 = vsel %vm731, %v2519, 0
        %v2539 = vsel %vm731, %v2520, 0
        %v2542 = vsel %vm731, %v2521, 0
        %v2545 = vsel %vm731, %v2522, 0
        %v2548 = vsel %vm731, %v2523, 0
        %v2551 = vsel %vm731, %v2524, 0
        %v2554 = vsel %vm731, %v2525, 0
        %v2557 = vsel %vm731, %v2526, 0
        %v2560 = vsel %vm731, %v2527, 0
        %v2563 = vsel %vm731, %v2528, 0
        %v2566 = vsel %vm731, %v2529, 0
        %v2569 = vsel %vm731, %v2530, 0
        %v2572 = vsel %vm731, %v2531, 0
        %v2575 = vsel %vm731, %v2532, 0
        %v2578 = vsel %vm731, %v2533, 0
        %v2581 = vsel %vm731, %v2534, 0
        %v2584 = vsel %vm780, %v2486, 0
        %2586 = vmatprep.subr.bf16.mxu0 0
        %2587 = vmatpush1.bf16.msra.mxu0 %v2584
        %2588 = vmatprep.subr.bf16.mxu0 0
        %2589 = vmatpush1.bf16.msra.mxu0 0
        %2590 = vmatprep.subr.bf16.mxu0 0
        %2591 = vmatpush1.bf16.msra.mxu0 0
        %2592 = vmatprep.subr.bf16.mxu0 0
        %2593 = vmatpush1.bf16.msra.mxu0 0
        %2594 = vmatprep.subr.bf16.mxu0 0
        %2595 = vmatpush1.bf16.msra.mxu0 0
        %2596 = vmatprep.subr.bf16.mxu0 0
        %2597 = vmatpush1.bf16.msra.mxu0 0
        %2598 = vmatprep.subr.bf16.mxu0 0
        %2599 = vmatpush1.bf16.msra.mxu0 0
        %2600 = vmatprep.subr.bf16.mxu0 0
        %2601 = vmatpush1.bf16.msra.mxu0 0
        %2602 = vmatprep.subr.bf16.mxu0 0
        %2603 = vmatpush1.bf16.msra.mxu0 0
        %2604 = vmatprep.subr.bf16.mxu0 0
        %2605 = vmatpush1.bf16.msra.mxu0 0
        %2606 = vmatprep.subr.bf16.mxu0 0
        %2607 = vmatpush1.bf16.msra.mxu0 0
        %2608 = vmatprep.subr.bf16.mxu0 0
        %2609 = vmatpush1.bf16.msra.mxu0 0
        %2610 = vmatprep.subr.bf16.mxu0 0
        %2611 = vmatpush1.bf16.msra.mxu0 0
        %2612 = vmatprep.subr.bf16.mxu0 0
        %2613 = vmatpush1.bf16.msra.mxu0 0
        %2614 = vmatprep.subr.bf16.mxu0 0
        %2615 = vmatpush1.bf16.msra.mxu0 0
        %2616 = vmatprep.subr.bf16.mxu0 0
        %2617 = vmatpush1.bf16.msra.mxu0 0
        %2618 = vmatprep.mubr.bf16.mxu0 0
        %2619 = vmatmul.mubr.bf16.gmra.mrb[0].mxu0 %v2536
        %v2620 = vpop.f32.mrb[0].mxu0
        %v2621 = vadd.f32 0.0, %v2620
        %v2622 = vpop.f32.mrb[0].mxu0
        %v2623 = vpop.f32.mrb[0].mxu0
        %v2624 = vadd.f32 0.0, %v2623
        %v2625 = vpop.f32.mrb[0].mxu0
        %2626 = vmatprep.mubr.bf16.mxu0 0
        %2627 = vmatmul.mubr.bf16.gmra.mrb[0].mxu0 %v2539
        %v2628 = vpop.f32.mrb[0].mxu0
        %v2629 = vadd.f32 0.0, %v2628
        %v2630 = vpop.f32.mrb[0].mxu0
        %v2631 = vpop.f32.mrb[0].mxu0
        %v2632 = vadd.f32 0.0, %v2631
        %v2633 = vpop.f32.mrb[0].mxu0
        %2634 = vmatprep.mubr.bf16.mxu0 0
        %2635 = vmatmul.mubr.bf16.gmra.mrb[0].mxu0 %v2542
        %v2636 = vpop.f32.mrb[0].mxu0
        %v2637 = vadd.f32 0.0, %v2636
        %v2638 = vpop.f32.mrb[0].mxu0
        %v2639 = vpop.f32.mrb[0].mxu0
        %v2640 = vadd.f32 0.0, %v2639
        %v2641 = vpop.f32.mrb[0].mxu0
        %2642 = vmatprep.mubr.bf16.mxu0 0
        %2643 = vmatmul.mubr.bf16.gmra.mrb[0].mxu0 %v2545
        %v2644 = vpop.f32.mrb[0].mxu0
        %v2645 = vadd.f32 0.0, %v2644
        %v2646 = vpop.f32.mrb[0].mxu0
        %v2647 = vpop.f32.mrb[0].mxu0
        %v2648 = vadd.f32 0.0, %v2647
        %v2649 = vpop.f32.mrb[0].mxu0
        %2650 = vmatprep.mubr.bf16.mxu0 0
        %2651 = vmatmul.mubr.bf16.gmra.mrb[0].mxu0 %v2548
        %v2652 = vpop.f32.mrb[0].mxu0
        %v2653 = vadd.f32 0.0, %v2652
        %v2654 = vpop.f32.mrb[0].mxu0
        %v2655 = vpop.f32.mrb[0].mxu0
        %v2656 = vadd.f32 0.0, %v2655
        %v2657 = vpop.f32.mrb[0].mxu0
        %2658 = vmatprep.mubr.bf16.mxu0 0
        %2659 = vmatmul.mubr.bf16.gmra.mrb[0].mxu0 %v2551
        %v2660 = vpop.f32.mrb[0].mxu0
        %v2661 = vadd.f32 0.0, %v2660
        %v2662 = vpop.f32.mrb[0].mxu0
        %v2663 = vpop.f32.mrb[0].mxu0
        %v2664 = vadd.f32 0.0, %v2663
        %v2665 = vpop.f32.mrb[0].mxu0
        %2666 = vmatprep.mubr.bf16.mxu0 0
        %2667 = vmatmul.mubr.bf16.gmra.mrb[0].mxu0 %v2554
        %v2668 = vpop.f32.mrb[0].mxu0
        %v2669 = vadd.f32 0.0, %v2668
        %v2670 = vpop.f32.mrb[0].mxu0
        %v2671 = vpop.f32.mrb[0].mxu0
        %v2672 = vadd.f32 0.0, %v2671
        %v2673 = vpop.f32.mrb[0].mxu0
        %2674 = vmatprep.mubr.bf16.mxu0 0
        %2675 = vmatmul.mubr.bf16.gmra.mrb[0].mxu0 %v2557
        %v2676 = vpop.f32.mrb[0].mxu0
        %v2677 = vadd.f32 0.0, %v2676
        %v2678 = vpop.f32.mrb[0].mxu0
        %v2679 = vpop.f32.mrb[0].mxu0
        %v2680 = vadd.f32 0.0, %v2679
        %v2681 = vpop.f32.mrb[0].mxu0
        %2682 = vmatprep.mubr.bf16.mxu0 0
        %2683 = vmatmul.mubr.bf16.gmra.mrb[0].mxu0 %v2560
        %v2684 = vpop.f32.mrb[0].mxu0
        %v2685 = vadd.f32 0.0, %v2684
        %v2686 = vpop.f32.mrb[0].mxu0
        %v2687 = vpop.f32.mrb[0].mxu0
        %v2688 = vadd.f32 0.0, %v2687
        %v2689 = vpop.f32.mrb[0].mxu0
        %2690 = vmatprep.mubr.bf16.mxu0 0
        %2691 = vmatmul.mubr.bf16.gmra.mrb[0].mxu0 %v2563
        %v2692 = vpop.f32.mrb[0].mxu0
        %v2693 = vadd.f32 0.0, %v2692
        %v2694 = vpop.f32.mrb[0].mxu0
        %v2695 = vpop.f32.mrb[0].mxu0
        %v2696 = vadd.f32 0.0, %v2695
        %v2697 = vpop.f32.mrb[0].mxu0
        %2698 = vmatprep.mubr.bf16.mxu0 0
        %2699 = vmatmul.mubr.bf16.gmra.mrb[0].mxu0 %v2566
        %v2700 = vpop.f32.mrb[0].mxu0
        %v2701 = vadd.f32 0.0, %v2700
        %v2702 = vpop.f32.mrb[0].mxu0
        %v2703 = vpop.f32.mrb[0].mxu0
        %v2704 = vadd.f32 0.0, %v2703
        %v2705 = vpop.f32.mrb[0].mxu0
        %2706 = vmatprep.mubr.bf16.mxu0 0
        %2707 = vmatmul.mubr.bf16.gmra.mrb[0].mxu0 %v2569
        %v2708 = vpop.f32.mrb[0].mxu0
        %v2709 = vadd.f32 0.0, %v2708
        %v2710 = vpop.f32.mrb[0].mxu0
        %v2711 = vpop.f32.mrb[0].mxu0
        %v2712 = vadd.f32 0.0, %v2711
        %v2713 = vpop.f32.mrb[0].mxu0
        %2714 = vmatprep.mubr.bf16.mxu0 0
        %2715 = vmatmul.mubr.bf16.gmra.mrb[0].mxu0 %v2572
        %v2716 = vpop.f32.mrb[0].mxu0
        %v2717 = vadd.f32 0.0, %v2716
        %v2718 = vpop.f32.mrb[0].mxu0
        %v2719 = vpop.f32.mrb[0].mxu0
        %v2720 = vadd.f32 0.0, %v2719
        %v2721 = vpop.f32.mrb[0].mxu0
        %2722 = vmatprep.mubr.bf16.mxu0 0
        %2723 = vmatmul.mubr.bf16.gmra.mrb[0].mxu0 %v2575
        %v2724 = vpop.f32.mrb[0].mxu0
        %v2725 = vadd.f32 0.0, %v2724
        %v2726 = vpop.f32.mrb[0].mxu0
        %v2727 = vpop.f32.mrb[0].mxu0
        %v2728 = vadd.f32 0.0, %v2727
        %v2729 = vpop.f32.mrb[0].mxu0
        %2730 = vmatprep.mubr.bf16.mxu0 0
        %2731 = vmatmul.mubr.bf16.gmra.mrb[0].mxu0 %v2578
        %v2732 = vpop.f32.mrb[0].mxu0
        %v2733 = vadd.f32 0.0, %v2732
        %v2734 = vpop.f32.mrb[0].mxu0
        %v2735 = vpop.f32.mrb[0].mxu0
        %v2736 = vadd.f32 0.0, %v2735
        %v2737 = vpop.f32.mrb[0].mxu0
        %2738 = vmatprep.mubr.bf16.mxu0 0
        %2739 = vmatmul.mubr.bf16.gmra.mrb[0].mxu0 %v2581
        %v2740 = vpop.f32.mrb[0].mxu0
        %v2741 = vadd.f32 0.0, %v2740
        %v2742 = vpop.f32.mrb[0].mxu0
        %v2743 = vpop.f32.mrb[0].mxu0
        %v2744 = vadd.f32 0.0, %v2743
        %v2745 = vpop.f32.mrb[0].mxu0
        %2746 = vdwg.mxu0
        %v2747 = vadd.f32 %v2021, %v2621
        %v2748 = vadd.f32 %v2022, %v2624
        %v2749 = vadd.f32 %v2023, %v2629
        %v2750 = vadd.f32 %v2024, %v2632
        %v2751 = vadd.f32 %v2025, %v2637
        %v2752 = vadd.f32 %v2026, %v2640
        %v2753 = vadd.f32 %v2027, %v2645
        %v2754 = vadd.f32 %v2028, %v2648
        %v2755 = vadd.f32 %v2029, %v2653
        %v2756 = vadd.f32 %v2030, %v2656
        %v2757 = vadd.f32 %v2031, %v2661
        %v2758 = vadd.f32 %v2032, %v2664
        %v2759 = vadd.f32 %v2033, %v2669
        %v2760 = vadd.f32 %v2034, %v2672
        %v2761 = vadd.f32 %v2035, %v2677
        %v2762 = vadd.f32 %v2036, %v2680
        %v2763 = vadd.f32 %v2037, %v2685
        %v2764 = vadd.f32 %v2038, %v2688
        %v2765 = vadd.f32 %v2039, %v2693
        %v2766 = vadd.f32 %v2040, %v2696
        %v2767 = vadd.f32 %v2041, %v2701
        %v2768 = vadd.f32 %v2042, %v2704
        %v2769 = vadd.f32 %v2043, %v2709
        %v2770 = vadd.f32 %v2044, %v2712
        %v2771 = vadd.f32 %v2045, %v2717
        %v2772 = vadd.f32 %v2046, %v2720
        %v2773 = vadd.f32 %v2047, %v2725
        %v2774 = vadd.f32 %v2048, %v2728
        %v2775 = vadd.f32 %v2049, %v2733
        %v2776 = vadd.f32 %v2050, %v2736
        %v2777 = vadd.f32 %v2051, %v2741
        %v2778 = vadd.f32 %v2052, %v2744
        %v2779 = vld [vmem:[%s1694] sm:$0xe]
        %v2780 = vld [vmem:[%s1694 + $0xc] sm:$0xe]
        %v2781 = vld [vmem:[%s1694 + $0x18] sm:$0xe]
        %v2782 = vld [vmem:[%s1694 + $0x24] sm:$0xe]
        %v2783 = vld [vmem:[%s1694 + $0x30] sm:$0xe]
        %v2784 = vld [vmem:[%s1694 + $0x3c] sm:$0xe]
        %v2785 = vld [vmem:[%s1694 + $0x48] sm:$0xe]
        %v2786 = vld [vmem:[%s1694 + $0x54] sm:$0xe]
        %v2787 = vld [vmem:[%s1694 + $0x60] sm:$0xe]
        %v2788 = vld [vmem:[%s1694 + $0x6c] sm:$0xe]
        %v2789 = vld [vmem:[%s1694 + $0x78] sm:$0xe]
        %v2790 = vld [vmem:[%s1694 + $0x84] sm:$0xe]
        %v2791 = vld [vmem:[%s1694 + $0x90] sm:$0xe]
        %v2792 = vld [vmem:[%s1694 + $0x9c] sm:$0xe]
        %v2793 = vld [vmem:[%s1694 + $0xa8] sm:$0xe]
        %v2794 = vld [vmem:[%s1694 + $0xb4] sm:$0xe]
        %v2843 = vrot.slane %v2779, 5
        %v2844 = vrot.slane %v2843, 4
        %v2845 = vrot.slane %v2054, 5
        %v2846 = vsel %vm1287, %v2844, %v2845
        %v2847 = vrot.slane %v2845, 4
        %v2848 = vrot.slane %v2055, 5
        %v2849 = vsel %vm1287, %v2847, %v2848
        %v2850 = vrot.slane %v2780, 5
        %v2851 = vrot.slane %v2850, 4
        %v2852 = vrot.slane %v2057, 5
        %v2853 = vsel %vm1287, %v2851, %v2852
        %v2854 = vrot.slane %v2852, 4
        %v2855 = vrot.slane %v2058, 5
        %v2856 = vsel %vm1287, %v2854, %v2855
        %v2857 = vrot.slane %v2781, 5
        %v2858 = vrot.slane %v2857, 4
        %v2859 = vrot.slane %v2060, 5
        %v2860 = vsel %vm1287, %v2858, %v2859
        %v2861 = vrot.slane %v2859, 4
        %v2862 = vrot.slane %v2061, 5
        %v2863 = vsel %vm1287, %v2861, %v2862
        %v2864 = vrot.slane %v2782, 5
        %v2865 = vrot.slane %v2864, 4
        %v2866 = vrot.slane %v2063, 5
        %v2867 = vsel %vm1287, %v2865, %v2866
        %v2868 = vrot.slane %v2866, 4
        %v2869 = vrot.slane %v2064, 5
        %v2870 = vsel %vm1287, %v2868, %v2869
        %v2871 = vrot.slane %v2783, 5
        %v2872 = vrot.slane %v2871, 4
        %v2873 = vrot.slane %v2066, 5
        %v2874 = vsel %vm1287, %v2872, %v2873
        %v2875 = vrot.slane %v2873, 4
        %v2876 = vrot.slane %v2067, 5
        %v2877 = vsel %vm1287, %v2875, %v2876
        %v2878 = vrot.slane %v2784, 5
        %v2879 = vrot.slane %v2878, 4
        %v2880 = vrot.slane %v2069, 5
        %v2881 = vsel %vm1287, %v2879, %v2880
        %v2882 = vrot.slane %v2880, 4
        %v2883 = vrot.slane %v2070, 5
        %v2884 = vsel %vm1287, %v2882, %v2883
        %v2885 = vrot.slane %v2785, 5
        %v2886 = vrot.slane %v2885, 4
        %v2887 = vrot.slane %v2072, 5
        %v2888 = vsel %vm1287, %v2886, %v2887
        %v2889 = vrot.slane %v2887, 4
        %v2890 = vrot.slane %v2073, 5
        %v2891 = vsel %vm1287, %v2889, %v2890
        %v2892 = vrot.slane %v2786, 5
        %v2893 = vrot.slane %v2892, 4
        %v2894 = vrot.slane %v2075, 5
        %v2895 = vsel %vm1287, %v2893, %v2894
        %v2896 = vrot.slane %v2894, 4
        %v2897 = vrot.slane %v2076, 5
        %v2898 = vsel %vm1287, %v2896, %v2897
        %v2899 = vrot.slane %v2787, 5
        %v2900 = vrot.slane %v2899, 4
        %v2901 = vrot.slane %v2078, 5
        %v2902 = vsel %vm1287, %v2900, %v2901
        %v2903 = vrot.slane %v2901, 4
        %v2904 = vrot.slane %v2079, 5
        %v2905 = vsel %vm1287, %v2903, %v2904
        %v2906 = vrot.slane %v2788, 5
        %v2907 = vrot.slane %v2906, 4
        %v2908 = vrot.slane %v2081, 5
        %v2909 = vsel %vm1287, %v2907, %v2908
        %v2910 = vrot.slane %v2908, 4
        %v2911 = vrot.slane %v2082, 5
        %v2912 = vsel %vm1287, %v2910, %v2911
        %v2913 = vrot.slane %v2789, 5
        %v2914 = vrot.slane %v2913, 4
        %v2915 = vrot.slane %v2084, 5
        %v2916 = vsel %vm1287, %v2914, %v2915
        %v2917 = vrot.slane %v2915, 4
        %v2918 = vrot.slane %v2085, 5
        %v2919 = vsel %vm1287, %v2917, %v2918
        %v2920 = vrot.slane %v2790, 5
        %v2921 = vrot.slane %v2920, 4
        %v2922 = vrot.slane %v2087, 5
        %v2923 = vsel %vm1287, %v2921, %v2922
        %v2924 = vrot.slane %v2922, 4
        %v2925 = vrot.slane %v2088, 5
        %v2926 = vsel %vm1287, %v2924, %v2925
        %v2927 = vrot.slane %v2791, 5
        %v2928 = vrot.slane %v2927, 4
        %v2929 = vrot.slane %v2090, 5
        %v2930 = vsel %vm1287, %v2928, %v2929
        %v2931 = vrot.slane %v2929, 4
        %v2932 = vrot.slane %v2091, 5
        %v2933 = vsel %vm1287, %v2931, %v2932
        %v2934 = vrot.slane %v2792, 5
        %v2935 = vrot.slane %v2934, 4
        %v2936 = vrot.slane %v2093, 5
        %v2937 = vsel %vm1287, %v2935, %v2936
        %v2938 = vrot.slane %v2936, 4
        %v2939 = vrot.slane %v2094, 5
        %v2940 = vsel %vm1287, %v2938, %v2939
        %v2941 = vrot.slane %v2793, 5
        %v2942 = vrot.slane %v2941, 4
        %v2943 = vrot.slane %v2096, 5
        %v2944 = vsel %vm1287, %v2942, %v2943
        %v2945 = vrot.slane %v2943, 4
        %v2946 = vrot.slane %v2097, 5
        %v2947 = vsel %vm1287, %v2945, %v2946
        %v2948 = vrot.slane %v2794, 5
        %v2949 = vrot.slane %v2948, 4
        %v2950 = vrot.slane %v2099, 5
        %v2951 = vsel %vm1287, %v2949, %v2950
        %v2952 = vrot.slane %v2950, 4
        %v2953 = vrot.slane %v2100, 5
        %v2954 = vsel %vm1287, %v2952, %v2953
        %s2955 = scalar_lea.vmem [#allocation5], 20
        %v2956 = vld [vmem:[%s2955] sm:$0xf]
        %v2957 = vunpack.c.l.b16 %v2846
        %v2958 = vunpack.c.l.b16 %v2849
        %v2959 = vunpack.c.l.b16 %v2853
        %v2960 = vunpack.c.l.b16 %v2856
        %v2961 = vunpack.c.l.b16 %v2860
        %v2962 = vunpack.c.l.b16 %v2863
        %v2963 = vunpack.c.l.b16 %v2867
        %v2964 = vunpack.c.l.b16 %v2870
        %v2965 = vunpack.c.l.b16 %v2874
        %v2966 = vunpack.c.l.b16 %v2877
        %v2967 = vunpack.c.l.b16 %v2881
        %v2968 = vunpack.c.l.b16 %v2884
        %v2969 = vunpack.c.l.b16 %v2888
        %v2970 = vunpack.c.l.b16 %v2891
        %v2971 = vunpack.c.l.b16 %v2895
        %v2972 = vunpack.c.l.b16 %v2898
        %v2973 = vunpack.c.l.b16 %v2902
        %v2974 = vunpack.c.l.b16 %v2905
        %v2975 = vunpack.c.l.b16 %v2909
        %v2976 = vunpack.c.l.b16 %v2912
        %v2977 = vunpack.c.l.b16 %v2916
        %v2978 = vunpack.c.l.b16 %v2919
        %v2979 = vunpack.c.l.b16 %v2923
        %v2980 = vunpack.c.l.b16 %v2926
        %v2981 = vunpack.c.l.b16 %v2930
        %v2982 = vunpack.c.l.b16 %v2933
        %v2983 = vunpack.c.l.b16 %v2937
        %v2984 = vunpack.c.l.b16 %v2940
        %v2985 = vunpack.c.l.b16 %v2944
        %v2986 = vunpack.c.l.b16 %v2947
        %v2987 = vunpack.c.l.b16 %v2951
        %v2988 = vunpack.c.l.b16 %v2954
        %v2989 = vpack.c.b16 %v2958, %v2957
        %v2990 = vpack.c.b16 %v2960, %v2959
        %v2991 = vpack.c.b16 %v2962, %v2961
        %v2992 = vpack.c.b16 %v2964, %v2963
        %v2993 = vpack.c.b16 %v2966, %v2965
        %v2994 = vpack.c.b16 %v2968, %v2967
        %v2995 = vpack.c.b16 %v2970, %v2969
        %v2996 = vpack.c.b16 %v2972, %v2971
        %v2997 = vpack.c.b16 %v2974, %v2973
        %v2998 = vpack.c.b16 %v2976, %v2975
        %v2999 = vpack.c.b16 %v2978, %v2977
        %v3000 = vpack.c.b16 %v2980, %v2979
        %v3001 = vpack.c.b16 %v2982, %v2981
        %v3002 = vpack.c.b16 %v2984, %v2983
        %v3003 = vpack.c.b16 %v2986, %v2985
        %v3004 = vpack.c.b16 %v2988, %v2987
        %v3006 = vsel %vm731, %v2989, 0
        %v3009 = vsel %vm731, %v2990, 0
        %v3012 = vsel %vm731, %v2991, 0
        %v3015 = vsel %vm731, %v2992, 0
        %v3018 = vsel %vm731, %v2993, 0
        %v3021 = vsel %vm731, %v2994, 0
        %v3024 = vsel %vm731, %v2995, 0
        %v3027 = vsel %vm731, %v2996, 0
        %v3030 = vsel %vm731, %v2997, 0
        %v3033 = vsel %vm731, %v2998, 0
        %v3036 = vsel %vm731, %v2999, 0
        %v3039 = vsel %vm731, %v3000, 0
        %v3042 = vsel %vm731, %v3001, 0
        %v3045 = vsel %vm731, %v3002, 0
        %v3048 = vsel %vm731, %v3003, 0
        %v3051 = vsel %vm731, %v3004, 0
        %v3054 = vsel %vm780, %v2956, 0
        %3056 = vmatprep.subr.bf16.mxu0 0
        %3057 = vmatpush1.bf16.msra.mxu0 %v3054
        %3058 = vmatprep.subr.bf16.mxu0 0
        %3059 = vmatpush1.bf16.msra.mxu0 0
        %3060 = vmatprep.subr.bf16.mxu0 0
        %3061 = vmatpush1.bf16.msra.mxu0 0
        %3062 = vmatprep.subr.bf16.mxu0 0
        %3063 = vmatpush1.bf16.msra.mxu0 0
        %3064 = vmatprep.subr.bf16.mxu0 0
        %3065 = vmatpush1.bf16.msra.mxu0 0
        %3066 = vmatprep.subr.bf16.mxu0 0
        %3067 = vmatpush1.bf16.msra.mxu0 0
        %3068 = vmatprep.subr.bf16.mxu0 0
        %3069 = vmatpush1.bf16.msra.mxu0 0
        %3070 = vmatprep.subr.bf16.mxu0 0
        %3071 = vmatpush1.bf16.msra.mxu0 0
        %3072 = vmatprep.subr.bf16.mxu0 0
        %3073 = vmatpush1.bf16.msra.mxu0 0
        %3074 = vmatprep.subr.bf16.mxu0 0
        %3075 = vmatpush1.bf16.msra.mxu0 0
        %3076 = vmatprep.subr.bf16.mxu0 0
        %3077 = vmatpush1.bf16.msra.mxu0 0
        %3078 = vmatprep.subr.bf16.mxu0 0
        %3079 = vmatpush1.bf16.msra.mxu0 0
        %3080 = vmatprep.subr.bf16.mxu0 0
        %3081 = vmatpush1.bf16.msra.mxu0 0
        %3082 = vmatprep.subr.bf16.mxu0 0
        %3083 = vmatpush1.bf16.msra.mxu0 0
        %3084 = vmatprep.subr.bf16.mxu0 0
        %3085 = vmatpush1.bf16.msra.mxu0 0
        %3086 = vmatprep.subr.bf16.mxu0 0
        %3087 = vmatpush1.bf16.msra.mxu0 0
        %3088 = vmatprep.mubr.bf16.mxu0 0
        %3089 = vmatmul.mubr.bf16.gmra.mrb[0].mxu0 %v3006
        %v3090 = vpop.f32.mrb[0].mxu0
        %v3091 = vadd.f32 0.0, %v3090
        %v3092 = vpop.f32.mrb[0].mxu0
        %v3093 = vpop.f32.mrb[0].mxu0
        %v3094 = vadd.f32 0.0, %v3093
        %v3095 = vpop.f32.mrb[0].mxu0
        %3096 = vmatprep.mubr.bf16.mxu0 0
        %3097 = vmatmul.mubr.bf16.gmra.mrb[0].mxu0 %v3009
        %v3098 = vpop.f32.mrb[0].mxu0
        %v3099 = vadd.f32 0.0, %v3098
        %v3100 = vpop.f32.mrb[0].mxu0
        %v3101 = vpop.f32.mrb[0].mxu0
        %v3102 = vadd.f32 0.0, %v3101
        %v3103 = vpop.f32.mrb[0].mxu0
        %3104 = vmatprep.mubr.bf16.mxu0 0
        %3105 = vmatmul.mubr.bf16.gmra.mrb[0].mxu0 %v3012
        %v3106 = vpop.f32.mrb[0].mxu0
        %v3107 = vadd.f32 0.0, %v3106
        %v3108 = vpop.f32.mrb[0].mxu0
        %v3109 = vpop.f32.mrb[0].mxu0
        %v3110 = vadd.f32 0.0, %v3109
        %v3111 = vpop.f32.mrb[0].mxu0
        %3112 = vmatprep.mubr.bf16.mxu0 0
        %3113 = vmatmul.mubr.bf16.gmra.mrb[0].mxu0 %v3015
        %v3114 = vpop.f32.mrb[0].mxu0
        %v3115 = vadd.f32 0.0, %v3114
        %v3116 = vpop.f32.mrb[0].mxu0
        %v3117 = vpop.f32.mrb[0].mxu0
        %v3118 = vadd.f32 0.0, %v3117
        %v3119 = vpop.f32.mrb[0].mxu0
        %3120 = vmatprep.mubr.bf16.mxu0 0
        %3121 = vmatmul.mubr.bf16.gmra.mrb[0].mxu0 %v3018
        %v3122 = vpop.f32.mrb[0].mxu0
        %v3123 = vadd.f32 0.0, %v3122
        %v3124 = vpop.f32.mrb[0].mxu0
        %v3125 = vpop.f32.mrb[0].mxu0
        %v3126 = vadd.f32 0.0, %v3125
        %v3127 = vpop.f32.mrb[0].mxu0
        %3128 = vmatprep.mubr.bf16.mxu0 0
        %3129 = vmatmul.mubr.bf16.gmra.mrb[0].mxu0 %v3021
        %v3130 = vpop.f32.mrb[0].mxu0
        %v3131 = vadd.f32 0.0, %v3130
        %v3132 = vpop.f32.mrb[0].mxu0
        %v3133 = vpop.f32.mrb[0].mxu0
        %v3134 = vadd.f32 0.0, %v3133
        %v3135 = vpop.f32.mrb[0].mxu0
        %3136 = vmatprep.mubr.bf16.mxu0 0
        %3137 = vmatmul.mubr.bf16.gmra.mrb[0].mxu0 %v3024
        %v3138 = vpop.f32.mrb[0].mxu0
        %v3139 = vadd.f32 0.0, %v3138
        %v3140 = vpop.f32.mrb[0].mxu0
        %v3141 = vpop.f32.mrb[0].mxu0
        %v3142 = vadd.f32 0.0, %v3141
        %v3143 = vpop.f32.mrb[0].mxu0
        %3144 = vmatprep.mubr.bf16.mxu0 0
        %3145 = vmatmul.mubr.bf16.gmra.mrb[0].mxu0 %v3027
        %v3146 = vpop.f32.mrb[0].mxu0
        %v3147 = vadd.f32 0.0, %v3146
        %v3148 = vpop.f32.mrb[0].mxu0
        %v3149 = vpop.f32.mrb[0].mxu0
        %v3150 = vadd.f32 0.0, %v3149
        %v3151 = vpop.f32.mrb[0].mxu0
        %3152 = vmatprep.mubr.bf16.mxu0 0
        %3153 = vmatmul.mubr.bf16.gmra.mrb[0].mxu0 %v3030
        %v3154 = vpop.f32.mrb[0].mxu0
        %v3155 = vadd.f32 0.0, %v3154
        %v3156 = vpop.f32.mrb[0].mxu0
        %v3157 = vpop.f32.mrb[0].mxu0
        %v3158 = vadd.f32 0.0, %v3157
        %v3159 = vpop.f32.mrb[0].mxu0
        %3160 = vmatprep.mubr.bf16.mxu0 0
        %3161 = vmatmul.mubr.bf16.gmra.mrb[0].mxu0 %v3033
        %v3162 = vpop.f32.mrb[0].mxu0
        %v3163 = vadd.f32 0.0, %v3162
        %v3164 = vpop.f32.mrb[0].mxu0
        %v3165 = vpop.f32.mrb[0].mxu0
        %v3166 = vadd.f32 0.0, %v3165
        %v3167 = vpop.f32.mrb[0].mxu0
        %3168 = vmatprep.mubr.bf16.mxu0 0
        %3169 = vmatmul.mubr.bf16.gmra.mrb[0].mxu0 %v3036
        %v3170 = vpop.f32.mrb[0].mxu0
        %v3171 = vadd.f32 0.0, %v3170
        %v3172 = vpop.f32.mrb[0].mxu0
        %v3173 = vpop.f32.mrb[0].mxu0
        %v3174 = vadd.f32 0.0, %v3173
        %v3175 = vpop.f32.mrb[0].mxu0
        %3176 = vmatprep.mubr.bf16.mxu0 0
        %3177 = vmatmul.mubr.bf16.gmra.mrb[0].mxu0 %v3039
        %v3178 = vpop.f32.mrb[0].mxu0
        %v3179 = vadd.f32 0.0, %v3178
        %v3180 = vpop.f32.mrb[0].mxu0
        %v3181 = vpop.f32.mrb[0].mxu0
        %v3182 = vadd.f32 0.0, %v3181
        %v3183 = vpop.f32.mrb[0].mxu0
        %3184 = vmatprep.mubr.bf16.mxu0 0
        %3185 = vmatmul.mubr.bf16.gmra.mrb[0].mxu0 %v3042
        %v3186 = vpop.f32.mrb[0].mxu0
        %v3187 = vadd.f32 0.0, %v3186
        %v3188 = vpop.f32.mrb[0].mxu0
        %v3189 = vpop.f32.mrb[0].mxu0
        %v3190 = vadd.f32 0.0, %v3189
        %v3191 = vpop.f32.mrb[0].mxu0
        %3192 = vmatprep.mubr.bf16.mxu0 0
        %3193 = vmatmul.mubr.bf16.gmra.mrb[0].mxu0 %v3045
        %v3194 = vpop.f32.mrb[0].mxu0
        %v3195 = vadd.f32 0.0, %v3194
        %v3196 = vpop.f32.mrb[0].mxu0
        %v3197 = vpop.f32.mrb[0].mxu0
        %v3198 = vadd.f32 0.0, %v3197
        %v3199 = vpop.f32.mrb[0].mxu0
        %3200 = vmatprep.mubr.bf16.mxu0 0
        %3201 = vmatmul.mubr.bf16.gmra.mrb[0].mxu0 %v3048
        %v3202 = vpop.f32.mrb[0].mxu0
        %v3203 = vadd.f32 0.0, %v3202
        %v3204 = vpop.f32.mrb[0].mxu0
        %v3205 = vpop.f32.mrb[0].mxu0
        %v3206 = vadd.f32 0.0, %v3205
        %v3207 = vpop.f32.mrb[0].mxu0
        %3208 = vmatprep.mubr.bf16.mxu0 0
        %3209 = vmatmul.mubr.bf16.gmra.mrb[0].mxu0 %v3051
        %v3210 = vpop.f32.mrb[0].mxu0
        %v3211 = vadd.f32 0.0, %v3210
        %v3212 = vpop.f32.mrb[0].mxu0
        %v3213 = vpop.f32.mrb[0].mxu0
        %v3214 = vadd.f32 0.0, %v3213
        %v3215 = vpop.f32.mrb[0].mxu0
        %3216 = vdwg.mxu0
        %v3217 = vadd.f32 %v2747, %v3091
        %v3218 = vadd.f32 %v2748, %v3094
        %v3219 = vadd.f32 %v2749, %v3099
        %v3220 = vadd.f32 %v2750, %v3102
        %v3221 = vadd.f32 %v2751, %v3107
        %v3222 = vadd.f32 %v2752, %v3110
        %v3223 = vadd.f32 %v2753, %v3115
        %v3224 = vadd.f32 %v2754, %v3118
        %v3225 = vadd.f32 %v2755, %v3123
        %v3226 = vadd.f32 %v2756, %v3126
        %v3227 = vadd.f32 %v2757, %v3131
        %v3228 = vadd.f32 %v2758, %v3134
        %v3229 = vadd.f32 %v2759, %v3139
        %v3230 = vadd.f32 %v2760, %v3142
        %v3231 = vadd.f32 %v2761, %v3147
        %v3232 = vadd.f32 %v2762, %v3150
        %v3233 = vadd.f32 %v2763, %v3155
        %v3234 = vadd.f32 %v2764, %v3158
        %v3235 = vadd.f32 %v2765, %v3163
        %v3236 = vadd.f32 %v2766, %v3166
        %v3237 = vadd.f32 %v2767, %v3171
        %v3238 = vadd.f32 %v2768, %v3174
        %v3239 = vadd.f32 %v2769, %v3179
        %v3240 = vadd.f32 %v2770, %v3182
        %v3241 = vadd.f32 %v2771, %v3187
        %v3242 = vadd.f32 %v2772, %v3190
        %v3243 = vadd.f32 %v2773, %v3195
        %v3244 = vadd.f32 %v2774, %v3198
        %v3245 = vadd.f32 %v2775, %v3203
        %v3246 = vadd.f32 %v2776, %v3206
        %v3247 = vadd.f32 %v2777, %v3211
        %v3248 = vadd.f32 %v2778, %v3214
        %s3249 = scalar_lea.vmem %s213, 24 [#allocation2]
        %v3250 = vld [vmem:[%s3249] sm:$0xf]
        %v3251 = vld [vmem:[%s3249 + $0x4] sm:$0xf]
        %v3252 = vld [vmem:[%s3249 + $0xc] sm:$0xf]
        %v3253 = vld [vmem:[%s3249 + $0x10] sm:$0xf]
        %v3254 = vld [vmem:[%s3249 + $0x18] sm:$0xf]
        %v3255 = vld [vmem:[%s3249 + $0x1c] sm:$0xf]
        %v3256 = vld [vmem:[%s3249 + $0x24] sm:$0xf]
        %v3257 = vld [vmem:[%s3249 + $0x28] sm:$0xf]
        %v3258 = vld [vmem:[%s3249 + $0x30] sm:$0xf]
        %v3259 = vld [vmem:[%s3249 + $0x34] sm:$0xf]
        %v3260 = vld [vmem:[%s3249 + $0x3c] sm:$0xf]
        %v3261 = vld [vmem:[%s3249 + $0x40] sm:$0xf]
        %v3262 = vld [vmem:[%s3249 + $0x48] sm:$0xf]
        %v3263 = vld [vmem:[%s3249 + $0x4c] sm:$0xf]
        %v3264 = vld [vmem:[%s3249 + $0x54] sm:$0xf]
        %v3265 = vld [vmem:[%s3249 + $0x58] sm:$0xf]
        %v3266 = vld [vmem:[%s3249 + $0x60] sm:$0xf]
        %v3267 = vld [vmem:[%s3249 + $0x64] sm:$0xf]
        %v3268 = vld [vmem:[%s3249 + $0x6c] sm:$0xf]
        %v3269 = vld [vmem:[%s3249 + $0x70] sm:$0xf]
        %v3270 = vld [vmem:[%s3249 + $0x78] sm:$0xf]
        %v3271 = vld [vmem:[%s3249 + $0x7c] sm:$0xf]
        %v3272 = vld [vmem:[%s3249 + $0x84] sm:$0xf]
        %v3273 = vld [vmem:[%s3249 + $0x88] sm:$0xf]
        %v3274 = vld [vmem:[%s3249 + $0x90] sm:$0xf]
        %v3275 = vld [vmem:[%s3249 + $0x94] sm:$0xf]
        %v3276 = vld [vmem:[%s3249 + $0x9c] sm:$0xf]
        %v3277 = vld [vmem:[%s3249 + $0xa0] sm:$0xf]
        %v3278 = vld [vmem:[%s3249 + $0xa8] sm:$0xf]
        %v3279 = vld [vmem:[%s3249 + $0xac] sm:$0xf]
        %v3280 = vld [vmem:[%s3249 + $0xb4] sm:$0xf]
        %v3281 = vld [vmem:[%s3249 + $0xb8] sm:$0xf]
        %s3282 = scalar_lea.vmem [#allocation5], 24
        %v3283 = vld [vmem:[%s3282] sm:$0xf]
        %v3316 = vunpack.c.l.b16 %v3250
        %v3317 = vunpack.c.l.b16 %v3251
        %v3318 = vunpack.c.l.b16 %v3252
        %v3319 = vunpack.c.l.b16 %v3253
        %v3320 = vunpack.c.l.b16 %v3254
        %v3321 = vunpack.c.l.b16 %v3255
        %v3322 = vunpack.c.l.b16 %v3256
        %v3323 = vunpack.c.l.b16 %v3257
        %v3324 = vunpack.c.l.b16 %v3258
        %v3325 = vunpack.c.l.b16 %v3259
        %v3326 = vunpack.c.l.b16 %v3260
        %v3327 = vunpack.c.l.b16 %v3261
        %v3328 = vunpack.c.l.b16 %v3262
        %v3329 = vunpack.c.l.b16 %v3263
        %v3330 = vunpack.c.l.b16 %v3264
        %v3331 = vunpack.c.l.b16 %v3265
        %v3332 = vunpack.c.l.b16 %v3266
        %v3333 = vunpack.c.l.b16 %v3267
        %v3334 = vunpack.c.l.b16 %v3268
        %v3335 = vunpack.c.l.b16 %v3269
        %v3336 = vunpack.c.l.b16 %v3270
        %v3337 = vunpack.c.l.b16 %v3271
        %v3338 = vunpack.c.l.b16 %v3272
        %v3339 = vunpack.c.l.b16 %v3273
        %v3340 = vunpack.c.l.b16 %v3274
        %v3341 = vunpack.c.l.b16 %v3275
        %v3342 = vunpack.c.l.b16 %v3276
        %v3343 = vunpack.c.l.b16 %v3277
        %v3344 = vunpack.c.l.b16 %v3278
        %v3345 = vunpack.c.l.b16 %v3279
        %v3346 = vunpack.c.l.b16 %v3280
        %v3347 = vunpack.c.l.b16 %v3281
        %v3348 = vpack.c.b16 %v3317, %v3316
        %v3349 = vpack.c.b16 %v3319, %v3318
        %v3350 = vpack.c.b16 %v3321, %v3320
        %v3351 = vpack.c.b16 %v3323, %v3322
        %v3352 = vpack.c.b16 %v3325, %v3324
        %v3353 = vpack.c.b16 %v3327, %v3326
        %v3354 = vpack.c.b16 %v3329, %v3328
        %v3355 = vpack.c.b16 %v3331, %v3330
        %v3356 = vpack.c.b16 %v3333, %v3332
        %v3357 = vpack.c.b16 %v3335, %v3334
        %v3358 = vpack.c.b16 %v3337, %v3336
        %v3359 = vpack.c.b16 %v3339, %v3338
        %v3360 = vpack.c.b16 %v3341, %v3340
        %v3361 = vpack.c.b16 %v3343, %v3342
        %v3362 = vpack.c.b16 %v3345, %v3344
        %v3363 = vpack.c.b16 %v3347, %v3346
        %v3365 = vsel %vm731, %v3348, 0
        %v3368 = vsel %vm731, %v3349, 0
        %v3371 = vsel %vm731, %v3350, 0
        %v3374 = vsel %vm731, %v3351, 0
        %v3377 = vsel %vm731, %v3352, 0
        %v3380 = vsel %vm731, %v3353, 0
        %v3383 = vsel %vm731, %v3354, 0
        %v3386 = vsel %vm731, %v3355, 0
        %v3389 = vsel %vm731, %v3356, 0
        %v3392 = vsel %vm731, %v3357, 0
        %v3395 = vsel %vm731, %v3358, 0
        %v3398 = vsel %vm731, %v3359, 0
        %v3401 = vsel %vm731, %v3360, 0
        %v3404 = vsel %vm731, %v3361, 0
        %v3407 = vsel %vm731, %v3362, 0
        %v3410 = vsel %vm731, %v3363, 0
        %v3413 = vsel %vm780, %v3283, 0
        %3415 = vmatprep.subr.bf16.mxu0 0
        %3416 = vmatpush1.bf16.msra.mxu0 %v3413
        %3417 = vmatprep.subr.bf16.mxu0 0
        %3418 = vmatpush1.bf16.msra.mxu0 0
        %3419 = vmatprep.subr.bf16.mxu0 0
        %3420 = vmatpush1.bf16.msra.mxu0 0
        %3421 = vmatprep.subr.bf16.mxu0 0
        %3422 = vmatpush1.bf16.msra.mxu0 0
        %3423 = vmatprep.subr.bf16.mxu0 0
        %3424 = vmatpush1.bf16.msra.mxu0 0
        %3425 = vmatprep.subr.bf16.mxu0 0
        %3426 = vmatpush1.bf16.msra.mxu0 0
        %3427 = vmatprep.subr.bf16.mxu0 0
        %3428 = vmatpush1.bf16.msra.mxu0 0
        %3429 = vmatprep.subr.bf16.mxu0 0
        %3430 = vmatpush1.bf16.msra.mxu0 0
        %3431 = vmatprep.subr.bf16.mxu0 0
        %3432 = vmatpush1.bf16.msra.mxu0 0
        %3433 = vmatprep.subr.bf16.mxu0 0
        %3434 = vmatpush1.bf16.msra.mxu0 0
        %3435 = vmatprep.subr.bf16.mxu0 0
        %3436 = vmatpush1.bf16.msra.mxu0 0
        %3437 = vmatprep.subr.bf16.mxu0 0
        %3438 = vmatpush1.bf16.msra.mxu0 0
        %3439 = vmatprep.subr.bf16.mxu0 0
        %3440 = vmatpush1.bf16.msra.mxu0 0
        %3441 = vmatprep.subr.bf16.mxu0 0
        %3442 = vmatpush1.bf16.msra.mxu0 0
        %3443 = vmatprep.subr.bf16.mxu0 0
        %3444 = vmatpush1.bf16.msra.mxu0 0
        %3445 = vmatprep.subr.bf16.mxu0 0
        %3446 = vmatpush1.bf16.msra.mxu0 0
        %3447 = vmatprep.mubr.bf16.mxu0 0
        %3448 = vmatmul.mubr.bf16.gmra.mrb[0].mxu0 %v3365
        %v3449 = vpop.f32.mrb[0].mxu0
        %v3450 = vadd.f32 0.0, %v3449
        %v3451 = vpop.f32.mrb[0].mxu0
        %v3452 = vpop.f32.mrb[0].mxu0
        %v3453 = vadd.f32 0.0, %v3452
        %v3454 = vpop.f32.mrb[0].mxu0
        %3455 = vmatprep.mubr.bf16.mxu0 0
        %3456 = vmatmul.mubr.bf16.gmra.mrb[0].mxu0 %v3368
        %v3457 = vpop.f32.mrb[0].mxu0
        %v3458 = vadd.f32 0.0, %v3457
        %v3459 = vpop.f32.mrb[0].mxu0
        %v3460 = vpop.f32.mrb[0].mxu0
        %v3461 = vadd.f32 0.0, %v3460
        %v3462 = vpop.f32.mrb[0].mxu0
        %3463 = vmatprep.mubr.bf16.mxu0 0
        %3464 = vmatmul.mubr.bf16.gmra.mrb[0].mxu0 %v3371
        %v3465 = vpop.f32.mrb[0].mxu0
        %v3466 = vadd.f32 0.0, %v3465
        %v3467 = vpop.f32.mrb[0].mxu0
        %v3468 = vpop.f32.mrb[0].mxu0
        %v3469 = vadd.f32 0.0, %v3468
        %v3470 = vpop.f32.mrb[0].mxu0
        %3471 = vmatprep.mubr.bf16.mxu0 0
        %3472 = vmatmul.mubr.bf16.gmra.mrb[0].mxu0 %v3374
        %v3473 = vpop.f32.mrb[0].mxu0
        %v3474 = vadd.f32 0.0, %v3473
        %v3475 = vpop.f32.mrb[0].mxu0
        %v3476 = vpop.f32.mrb[0].mxu0
        %v3477 = vadd.f32 0.0, %v3476
        %v3478 = vpop.f32.mrb[0].mxu0
        %3479 = vmatprep.mubr.bf16.mxu0 0
        %3480 = vmatmul.mubr.bf16.gmra.mrb[0].mxu0 %v3377
        %v3481 = vpop.f32.mrb[0].mxu0
        %v3482 = vadd.f32 0.0, %v3481
        %v3483 = vpop.f32.mrb[0].mxu0
        %v3484 = vpop.f32.mrb[0].mxu0
        %v3485 = vadd.f32 0.0, %v3484
        %v3486 = vpop.f32.mrb[0].mxu0
        %3487 = vmatprep.mubr.bf16.mxu0 0
        %3488 = vmatmul.mubr.bf16.gmra.mrb[0].mxu0 %v3380
        %v3489 = vpop.f32.mrb[0].mxu0
        %v3490 = vadd.f32 0.0, %v3489
        %v3491 = vpop.f32.mrb[0].mxu0
        %v3492 = vpop.f32.mrb[0].mxu0
        %v3493 = vadd.f32 0.0, %v3492
        %v3494 = vpop.f32.mrb[0].mxu0
        %3495 = vmatprep.mubr.bf16.mxu0 0
        %3496 = vmatmul.mubr.bf16.gmra.mrb[0].mxu0 %v3383
        %v3497 = vpop.f32.mrb[0].mxu0
        %v3498 = vadd.f32 0.0, %v3497
        %v3499 = vpop.f32.mrb[0].mxu0
        %v3500 = vpop.f32.mrb[0].mxu0
        %v3501 = vadd.f32 0.0, %v3500
        %v3502 = vpop.f32.mrb[0].mxu0
        %3503 = vmatprep.mubr.bf16.mxu0 0
        %3504 = vmatmul.mubr.bf16.gmra.mrb[0].mxu0 %v3386
        %v3505 = vpop.f32.mrb[0].mxu0
        %v3506 = vadd.f32 0.0, %v3505
        %v3507 = vpop.f32.mrb[0].mxu0
        %v3508 = vpop.f32.mrb[0].mxu0
        %v3509 = vadd.f32 0.0, %v3508
        %v3510 = vpop.f32.mrb[0].mxu0
        %3511 = vmatprep.mubr.bf16.mxu0 0
        %3512 = vmatmul.mubr.bf16.gmra.mrb[0].mxu0 %v3389
        %v3513 = vpop.f32.mrb[0].mxu0
        %v3514 = vadd.f32 0.0, %v3513
        %v3515 = vpop.f32.mrb[0].mxu0
        %v3516 = vpop.f32.mrb[0].mxu0
        %v3517 = vadd.f32 0.0, %v3516
        %v3518 = vpop.f32.mrb[0].mxu0
        %3519 = vmatprep.mubr.bf16.mxu0 0
        %3520 = vmatmul.mubr.bf16.gmra.mrb[0].mxu0 %v3392
        %v3521 = vpop.f32.mrb[0].mxu0
        %v3522 = vadd.f32 0.0, %v3521
        %v3523 = vpop.f32.mrb[0].mxu0
        %v3524 = vpop.f32.mrb[0].mxu0
        %v3525 = vadd.f32 0.0, %v3524
        %v3526 = vpop.f32.mrb[0].mxu0
        %3527 = vmatprep.mubr.bf16.mxu0 0
        %3528 = vmatmul.mubr.bf16.gmra.mrb[0].mxu0 %v3395
        %v3529 = vpop.f32.mrb[0].mxu0
        %v3530 = vadd.f32 0.0, %v3529
        %v3531 = vpop.f32.mrb[0].mxu0
        %v3532 = vpop.f32.mrb[0].mxu0
        %v3533 = vadd.f32 0.0, %v3532
        %v3534 = vpop.f32.mrb[0].mxu0
        %3535 = vmatprep.mubr.bf16.mxu0 0
        %3536 = vmatmul.mubr.bf16.gmra.mrb[0].mxu0 %v3398
        %v3537 = vpop.f32.mrb[0].mxu0
        %v3538 = vadd.f32 0.0, %v3537
        %v3539 = vpop.f32.mrb[0].mxu0
        %v3540 = vpop.f32.mrb[0].mxu0
        %v3541 = vadd.f32 0.0, %v3540
        %v3542 = vpop.f32.mrb[0].mxu0
        %3543 = vmatprep.mubr.bf16.mxu0 0
        %3544 = vmatmul.mubr.bf16.gmra.mrb[0].mxu0 %v3401
        %v3545 = vpop.f32.mrb[0].mxu0
        %v3546 = vadd.f32 0.0, %v3545
        %v3547 = vpop.f32.mrb[0].mxu0
        %v3548 = vpop.f32.mrb[0].mxu0
        %v3549 = vadd.f32 0.0, %v3548
        %v3550 = vpop.f32.mrb[0].mxu0
        %3551 = vmatprep.mubr.bf16.mxu0 0
        %3552 = vmatmul.mubr.bf16.gmra.mrb[0].mxu0 %v3404
        %v3553 = vpop.f32.mrb[0].mxu0
        %v3554 = vadd.f32 0.0, %v3553
        %v3555 = vpop.f32.mrb[0].mxu0
        %v3556 = vpop.f32.mrb[0].mxu0
        %v3557 = vadd.f32 0.0, %v3556
        %v3558 = vpop.f32.mrb[0].mxu0
        %3559 = vmatprep.mubr.bf16.mxu0 0
        %3560 = vmatmul.mubr.bf16.gmra.mrb[0].mxu0 %v3407
        %v3561 = vpop.f32.mrb[0].mxu0
        %v3562 = vadd.f32 0.0, %v3561
        %v3563 = vpop.f32.mrb[0].mxu0
        %v3564 = vpop.f32.mrb[0].mxu0
        %v3565 = vadd.f32 0.0, %v3564
        %v3566 = vpop.f32.mrb[0].mxu0
        %3567 = vmatprep.mubr.bf16.mxu0 0
        %3568 = vmatmul.mubr.bf16.gmra.mrb[0].mxu0 %v3410
        %v3569 = vpop.f32.mrb[0].mxu0
        %v3570 = vadd.f32 0.0, %v3569
        %v3571 = vpop.f32.mrb[0].mxu0
        %v3572 = vpop.f32.mrb[0].mxu0
        %v3573 = vadd.f32 0.0, %v3572
        %v3574 = vpop.f32.mrb[0].mxu0
        %3575 = vdwg.mxu0
        %v3576 = vadd.f32 %v3217, %v3450
        %v3577 = vadd.f32 %v3218, %v3453
        %v3578 = vadd.f32 %v3219, %v3458
        %v3579 = vadd.f32 %v3220, %v3461
        %v3580 = vadd.f32 %v3221, %v3466
        %v3581 = vadd.f32 %v3222, %v3469
        %v3582 = vadd.f32 %v3223, %v3474
        %v3583 = vadd.f32 %v3224, %v3477
        %v3584 = vadd.f32 %v3225, %v3482
        %v3585 = vadd.f32 %v3226, %v3485
        %v3586 = vadd.f32 %v3227, %v3490
        %v3587 = vadd.f32 %v3228, %v3493
        %v3588 = vadd.f32 %v3229, %v3498
        %v3589 = vadd.f32 %v3230, %v3501
        %v3590 = vadd.f32 %v3231, %v3506
        %v3591 = vadd.f32 %v3232, %v3509
        %v3592 = vadd.f32 %v3233, %v3514
        %v3593 = vadd.f32 %v3234, %v3517
        %v3594 = vadd.f32 %v3235, %v3522
        %v3595 = vadd.f32 %v3236, %v3525
        %v3596 = vadd.f32 %v3237, %v3530
        %v3597 = vadd.f32 %v3238, %v3533
        %v3598 = vadd.f32 %v3239, %v3538
        %v3599 = vadd.f32 %v3240, %v3541
        %v3600 = vadd.f32 %v3241, %v3546
        %v3601 = vadd.f32 %v3242, %v3549
        %v3602 = vadd.f32 %v3243, %v3554
        %v3603 = vadd.f32 %v3244, %v3557
        %v3604 = vadd.f32 %v3245, %v3562
        %v3605 = vadd.f32 %v3246, %v3565
        %v3606 = vadd.f32 %v3247, %v3570
        %v3607 = vadd.f32 %v3248, %v3573
        %v3608 = vld [vmem:[%s3249] sm:$0xf]
        %v3609 = vld [vmem:[%s3249 + $0x4] sm:$0xf]
        %v3610 = vld [vmem:[%s3249 + $0x8] sm:$0x1]
        %v3611 = vld [vmem:[%s3249 + $0xc] sm:$0xf]
        %v3612 = vld [vmem:[%s3249 + $0x10] sm:$0xf]
        %v3613 = vld [vmem:[%s3249 + $0x14] sm:$0x1]
        %v3614 = vld [vmem:[%s3249 + $0x18] sm:$0xf]
        %v3615 = vld [vmem:[%s3249 + $0x1c] sm:$0xf]
        %v3616 = vld [vmem:[%s3249 + $0x20] sm:$0x1]
        %v3617 = vld [vmem:[%s3249 + $0x24] sm:$0xf]
        %v3618 = vld [vmem:[%s3249 + $0x28] sm:$0xf]
        %v3619 = vld [vmem:[%s3249 + $0x2c] sm:$0x1]
        %v3620 = vld [vmem:[%s3249 + $0x30] sm:$0xf]
        %v3621 = vld [vmem:[%s3249 + $0x34] sm:$0xf]
        %v3622 = vld [vmem:[%s3249 + $0x38] sm:$0x1]
        %v3623 = vld [vmem:[%s3249 + $0x3c] sm:$0xf]
        %v3624 = vld [vmem:[%s3249 + $0x40] sm:$0xf]
        %v3625 = vld [vmem:[%s3249 + $0x44] sm:$0x1]
        %v3626 = vld [vmem:[%s3249 + $0x48] sm:$0xf]
        %v3627 = vld [vmem:[%s3249 + $0x4c] sm:$0xf]
        %v3628 = vld [vmem:[%s3249 + $0x50] sm:$0x1]
        %v3629 = vld [vmem:[%s3249 + $0x54] sm:$0xf]
        %v3630 = vld [vmem:[%s3249 + $0x58] sm:$0xf]
        %v3631 = vld [vmem:[%s3249 + $0x5c] sm:$0x1]
        %v3632 = vld [vmem:[%s3249 + $0x60] sm:$0xf]
        %v3633 = vld [vmem:[%s3249 + $0x64] sm:$0xf]
        %v3634 = vld [vmem:[%s3249 + $0x68] sm:$0x1]
        %v3635 = vld [vmem:[%s3249 + $0x6c] sm:$0xf]
        %v3636 = vld [vmem:[%s3249 + $0x70] sm:$0xf]
        %v3637 = vld [vmem:[%s3249 + $0x74] sm:$0x1]
        %v3638 = vld [vmem:[%s3249 + $0x78] sm:$0xf]
        %v3639 = vld [vmem:[%s3249 + $0x7c] sm:$0xf]
        %v3640 = vld [vmem:[%s3249 + $0x80] sm:$0x1]
        %v3641 = vld [vmem:[%s3249 + $0x84] sm:$0xf]
        %v3642 = vld [vmem:[%s3249 + $0x88] sm:$0xf]
        %v3643 = vld [vmem:[%s3249 + $0x8c] sm:$0x1]
        %v3644 = vld [vmem:[%s3249 + $0x90] sm:$0xf]
        %v3645 = vld [vmem:[%s3249 + $0x94] sm:$0xf]
        %v3646 = vld [vmem:[%s3249 + $0x98] sm:$0x1]
        %v3647 = vld [vmem:[%s3249 + $0x9c] sm:$0xf]
        %v3648 = vld [vmem:[%s3249 + $0xa0] sm:$0xf]
        %v3649 = vld [vmem:[%s3249 + $0xa4] sm:$0x1]
        %v3650 = vld [vmem:[%s3249 + $0xa8] sm:$0xf]
        %v3651 = vld [vmem:[%s3249 + $0xac] sm:$0xf]
        %v3652 = vld [vmem:[%s3249 + $0xb0] sm:$0x1]
        %v3653 = vld [vmem:[%s3249 + $0xb4] sm:$0xf]
        %v3654 = vld [vmem:[%s3249 + $0xb8] sm:$0xf]
        %v3655 = vld [vmem:[%s3249 + $0xbc] sm:$0x1]
        %v3657 = vshrl.u32 %v3608, 16
        %v3659 = vrot.slane %v3657, 4
        %v3660 = vshll.u32 %v3608, 16
        %v3662 = vrot.slane %v3660, 5
        %v3663 = vor.u32 %v3659, %v3662
        %v3664 = vrot.slane %v3663, 4
        %v3666 = vshll.u32 %v3609, 16
        %v3668 = vrot.slane %v3666, 5
        %v3669 = vsel %vm296, %v3664, %v3668
        %v3670 = vshrl.u32 %v3609, 16
        %v3672 = vrot.slane %v3670, 4
        %v3673 = vor.u32 %v3672, %v3668
        %v3674 = vrot.slane %v3673, 4
        %v3676 = vshll.u32 %v3610, 16
        %v3678 = vrot.slane %v3676, 5
        %v3679 = vsel %vm296, %v3674, %v3678
        %v3681 = vshrl.u32 %v3611, 16
        %v3683 = vrot.slane %v3681, 4
        %v3684 = vshll.u32 %v3611, 16
        %v3686 = vrot.slane %v3684, 5
        %v3687 = vor.u32 %v3683, %v3686
        %v3688 = vrot.slane %v3687, 4
        %v3690 = vshll.u32 %v3612, 16
        %v3692 = vrot.slane %v3690, 5
        %v3693 = vsel %vm296, %v3688, %v3692
        %v3694 = vshrl.u32 %v3612, 16
        %v3696 = vrot.slane %v3694, 4
        %v3697 = vor.u32 %v3696, %v3692
        %v3698 = vrot.slane %v3697, 4
        %v3700 = vshll.u32 %v3613, 16
        %v3702 = vrot.slane %v3700, 5
        %v3703 = vsel %vm296, %v3698, %v3702
        %v3705 = vshrl.u32 %v3614, 16
        %v3707 = vrot.slane %v3705, 4
        %v3708 = vshll.u32 %v3614, 16
        %v3710 = vrot.slane %v3708, 5
        %v3711 = vor.u32 %v3707, %v3710
        %v3712 = vrot.slane %v3711, 4
        %v3714 = vshll.u32 %v3615, 16
        %v3716 = vrot.slane %v3714, 5
        %v3717 = vsel %vm296, %v3712, %v3716
        %v3718 = vshrl.u32 %v3615, 16
        %v3720 = vrot.slane %v3718, 4
        %v3721 = vor.u32 %v3720, %v3716
        %v3722 = vrot.slane %v3721, 4
        %v3724 = vshll.u32 %v3616, 16
        %v3726 = vrot.slane %v3724, 5
        %v3727 = vsel %vm296, %v3722, %v3726
        %v3729 = vshrl.u32 %v3617, 16
        %v3731 = vrot.slane %v3729, 4
        %v3732 = vshll.u32 %v3617, 16
        %v3734 = vrot.slane %v3732, 5
        %v3735 = vor.u32 %v3731, %v3734
        %v3736 = vrot.slane %v3735, 4
        %v3738 = vshll.u32 %v3618, 16
        %v3740 = vrot.slane %v3738, 5
        %v3741 = vsel %vm296, %v3736, %v3740
        %v3742 = vshrl.u32 %v3618, 16
        %v3744 = vrot.slane %v3742, 4
        %v3745 = vor.u32 %v3744, %v3740
        %v3746 = vrot.slane %v3745, 4
        %v3748 = vshll.u32 %v3619, 16
        %v3750 = vrot.slane %v3748, 5
        %v3751 = vsel %vm296, %v3746, %v3750
        %v3753 = vshrl.u32 %v3620, 16
        %v3755 = vrot.slane %v3753, 4
        %v3756 = vshll.u32 %v3620, 16
        %v3758 = vrot.slane %v3756, 5
        %v3759 = vor.u32 %v3755, %v3758
        %v3760 = vrot.slane %v3759, 4
        %v3762 = vshll.u32 %v3621, 16
        %v3764 = vrot.slane %v3762, 5
        %v3765 = vsel %vm296, %v3760, %v3764
        %v3766 = vshrl.u32 %v3621, 16
        %v3768 = vrot.slane %v3766, 4
        %v3769 = vor.u32 %v3768, %v3764
        %v3770 = vrot.slane %v3769, 4
        %v3772 = vshll.u32 %v3622, 16
        %v3774 = vrot.slane %v3772, 5
        %v3775 = vsel %vm296, %v3770, %v3774
        %v3777 = vshrl.u32 %v3623, 16
        %v3779 = vrot.slane %v3777, 4
        %v3780 = vshll.u32 %v3623, 16
        %v3782 = vrot.slane %v3780, 5
        %v3783 = vor.u32 %v3779, %v3782
        %v3784 = vrot.slane %v3783, 4
        %v3786 = vshll.u32 %v3624, 16
        %v3788 = vrot.slane %v3786, 5
        %v3789 = vsel %vm296, %v3784, %v3788
        %v3790 = vshrl.u32 %v3624, 16
        %v3792 = vrot.slane %v3790, 4
        %v3793 = vor.u32 %v3792, %v3788
        %v3794 = vrot.slane %v3793, 4
        %v3796 = vshll.u32 %v3625, 16
        %v3798 = vrot.slane %v3796, 5
        %v3799 = vsel %vm296, %v3794, %v3798
        %v3801 = vshrl.u32 %v3626, 16
        %v3803 = vrot.slane %v3801, 4
        %v3804 = vshll.u32 %v3626, 16
        %v3806 = vrot.slane %v3804, 5
        %v3807 = vor.u32 %v3803, %v3806
        %v3808 = vrot.slane %v3807, 4
        %v3810 = vshll.u32 %v3627, 16
        %v3812 = vrot.slane %v3810, 5
        %v3813 = vsel %vm296, %v3808, %v3812
        %v3814 = vshrl.u32 %v3627, 16
        %v3816 = vrot.slane %v3814, 4
        %v3817 = vor.u32 %v3816, %v3812
        %v3818 = vrot.slane %v3817, 4
        %v3820 = vshll.u32 %v3628, 16
        %v3822 = vrot.slane %v3820, 5
        %v3823 = vsel %vm296, %v3818, %v3822
        %v3825 = vshrl.u32 %v3629, 16
        %v3827 = vrot.slane %v3825, 4
        %v3828 = vshll.u32 %v3629, 16
        %v3830 = vrot.slane %v3828, 5
        %v3831 = vor.u32 %v3827, %v3830
        %v3832 = vrot.slane %v3831, 4
        %v3834 = vshll.u32 %v3630, 16
        %v3836 = vrot.slane %v3834, 5
        %v3837 = vsel %vm296, %v3832, %v3836
        %v3838 = vshrl.u32 %v3630, 16
        %v3840 = vrot.slane %v3838, 4
        %v3841 = vor.u32 %v3840, %v3836
        %v3842 = vrot.slane %v3841, 4
        %v3844 = vshll.u32 %v3631, 16
        %v3846 = vrot.slane %v3844, 5
        %v3847 = vsel %vm296, %v3842, %v3846
        %v3849 = vshrl.u32 %v3632, 16
        %v3851 = vrot.slane %v3849, 4
        %v3852 = vshll.u32 %v3632, 16
        %v3854 = vrot.slane %v3852, 5
        %v3855 = vor.u32 %v3851, %v3854
        %v3856 = vrot.slane %v3855, 4
        %v3858 = vshll.u32 %v3633, 16
        %v3860 = vrot.slane %v3858, 5
        %v3861 = vsel %vm296, %v3856, %v3860
        %v3862 = vshrl.u32 %v3633, 16
        %v3864 = vrot.slane %v3862, 4
        %v3865 = vor.u32 %v3864, %v3860
        %v3866 = vrot.slane %v3865, 4
        %v3868 = vshll.u32 %v3634, 16
        %v3870 = vrot.slane %v3868, 5
        %v3871 = vsel %vm296, %v3866, %v3870
        %v3873 = vshrl.u32 %v3635, 16
        %v3875 = vrot.slane %v3873, 4
        %v3876 = vshll.u32 %v3635, 16
        %v3878 = vrot.slane %v3876, 5
        %v3879 = vor.u32 %v3875, %v3878
        %v3880 = vrot.slane %v3879, 4
        %v3882 = vshll.u32 %v3636, 16
        %v3884 = vrot.slane %v3882, 5
        %v3885 = vsel %vm296, %v3880, %v3884
        %v3886 = vshrl.u32 %v3636, 16
        %v3888 = vrot.slane %v3886, 4
        %v3889 = vor.u32 %v3888, %v3884
        %v3890 = vrot.slane %v3889, 4
        %v3892 = vshll.u32 %v3637, 16
        %v3894 = vrot.slane %v3892, 5
        %v3895 = vsel %vm296, %v3890, %v3894
        %v3897 = vshrl.u32 %v3638, 16
        %v3899 = vrot.slane %v3897, 4
        %v3900 = vshll.u32 %v3638, 16
        %v3902 = vrot.slane %v3900, 5
        %v3903 = vor.u32 %v3899, %v3902
        %v3904 = vrot.slane %v3903, 4
        %v3906 = vshll.u32 %v3639, 16
        %v3908 = vrot.slane %v3906, 5
        %v3909 = vsel %vm296, %v3904, %v3908
        %v3910 = vshrl.u32 %v3639, 16
        %v3912 = vrot.slane %v3910, 4
        %v3913 = vor.u32 %v3912, %v3908
        %v3914 = vrot.slane %v3913, 4
        %v3916 = vshll.u32 %v3640, 16
        %v3918 = vrot.slane %v3916, 5
        %v3919 = vsel %vm296, %v3914, %v3918
        %v3921 = vshrl.u32 %v3641, 16
        %v3923 = vrot.slane %v3921, 4
        %v3924 = vshll.u32 %v3641, 16
        %v3926 = vrot.slane %v3924, 5
        %v3927 = vor.u32 %v3923, %v3926
        %v3928 = vrot.slane %v3927, 4
        %v3930 = vshll.u32 %v3642, 16
        %v3932 = vrot.slane %v3930, 5
        %v3933 = vsel %vm296, %v3928, %v3932
        %v3934 = vshrl.u32 %v3642, 16
        %v3936 = vrot.slane %v3934, 4
        %v3937 = vor.u32 %v3936, %v3932
        %v3938 = vrot.slane %v3937, 4
        %v3940 = vshll.u32 %v3643, 16
        %v3942 = vrot.slane %v3940, 5
        %v3943 = vsel %vm296, %v3938, %v3942
        %v3945 = vshrl.u32 %v3644, 16
        %v3947 = vrot.slane %v3945, 4
        %v3948 = vshll.u32 %v3644, 16
        %v3950 = vrot.slane %v3948, 5
        %v3951 = vor.u32 %v3947, %v3950
        %v3952 = vrot.slane %v3951, 4
        %v3954 = vshll.u32 %v3645, 16
        %v3956 = vrot.slane %v3954, 5
        %v3957 = vsel %vm296, %v3952, %v3956
        %v3958 = vshrl.u32 %v3645, 16
        %v3960 = vrot.slane %v3958, 4
        %v3961 = vor.u32 %v3960, %v3956
        %v3962 = vrot.slane %v3961, 4
        %v3964 = vshll.u32 %v3646, 16
        %v3966 = vrot.slane %v3964, 5
        %v3967 = vsel %vm296, %v3962, %v3966
        %v3969 = vshrl.u32 %v3647, 16
        %v3971 = vrot.slane %v3969, 4
        %v3972 = vshll.u32 %v3647, 16
        %v3974 = vrot.slane %v3972, 5
        %v3975 = vor.u32 %v3971, %v3974
        %v3976 = vrot.slane %v3975, 4
        %v3978 = vshll.u32 %v3648, 16
        %v3980 = vrot.slane %v3978, 5
        %v3981 = vsel %vm296, %v3976, %v3980
        %v3982 = vshrl.u32 %v3648, 16
        %v3984 = vrot.slane %v3982, 4
        %v3985 = vor.u32 %v3984, %v3980
        %v3986 = vrot.slane %v3985, 4
        %v3988 = vshll.u32 %v3649, 16
        %v3990 = vrot.slane %v3988, 5
        %v3991 = vsel %vm296, %v3986, %v3990
        %v3993 = vshrl.u32 %v3650, 16
        %v3995 = vrot.slane %v3993, 4
        %v3996 = vshll.u32 %v3650, 16
        %v3998 = vrot.slane %v3996, 5
        %v3999 = vor.u32 %v3995, %v3998
        %v4000 = vrot.slane %v3999, 4
        %v4002 = vshll.u32 %v3651, 16
        %v4004 = vrot.slane %v4002, 5
        %v4005 = vsel %vm296, %v4000, %v4004
        %v4006 = vshrl.u32 %v3651, 16
        %v4008 = vrot.slane %v4006, 4
        %v4009 = vor.u32 %v4008, %v4004
        %v4010 = vrot.slane %v4009, 4
        %v4012 = vshll.u32 %v3652, 16
        %v4014 = vrot.slane %v4012, 5
        %v4015 = vsel %vm296, %v4010, %v4014
        %v4017 = vshrl.u32 %v3653, 16
        %v4019 = vrot.slane %v4017, 4
        %v4020 = vshll.u32 %v3653, 16
        %v4022 = vrot.slane %v4020, 5
        %v4023 = vor.u32 %v4019, %v4022
        %v4024 = vrot.slane %v4023, 4
        %v4026 = vshll.u32 %v3654, 16
        %v4028 = vrot.slane %v4026, 5
        %v4029 = vsel %vm296, %v4024, %v4028
        %v4030 = vshrl.u32 %v3654, 16
        %v4032 = vrot.slane %v4030, 4
        %v4033 = vor.u32 %v4032, %v4028
        %v4034 = vrot.slane %v4033, 4
        %v4036 = vshll.u32 %v3655, 16
        %v4038 = vrot.slane %v4036, 5
        %v4039 = vsel %vm296, %v4034, %v4038
        %s4040 = scalar_lea.vmem [#allocation5], 28
        %v4041 = vld [vmem:[%s4040] sm:$0xf]
        %v4042 = vunpack.c.l.b16 %v3669
        %v4043 = vunpack.c.l.b16 %v3679
        %v4044 = vunpack.c.l.b16 %v3693
        %v4045 = vunpack.c.l.b16 %v3703
        %v4046 = vunpack.c.l.b16 %v3717
        %v4047 = vunpack.c.l.b16 %v3727
        %v4048 = vunpack.c.l.b16 %v3741
        %v4049 = vunpack.c.l.b16 %v3751
        %v4050 = vunpack.c.l.b16 %v3765
        %v4051 = vunpack.c.l.b16 %v3775
        %v4052 = vunpack.c.l.b16 %v3789
        %v4053 = vunpack.c.l.b16 %v3799
        %v4054 = vunpack.c.l.b16 %v3813
        %v4055 = vunpack.c.l.b16 %v3823
        %v4056 = vunpack.c.l.b16 %v3837
        %v4057 = vunpack.c.l.b16 %v3847
        %v4058 = vunpack.c.l.b16 %v3861
        %v4059 = vunpack.c.l.b16 %v3871
        %v4060 = vunpack.c.l.b16 %v3885
        %v4061 = vunpack.c.l.b16 %v3895
        %v4062 = vunpack.c.l.b16 %v3909
        %v4063 = vunpack.c.l.b16 %v3919
        %v4064 = vunpack.c.l.b16 %v3933
        %v4065 = vunpack.c.l.b16 %v3943
        %v4066 = vunpack.c.l.b16 %v3957
        %v4067 = vunpack.c.l.b16 %v3967
        %v4068 = vunpack.c.l.b16 %v3981
        %v4069 = vunpack.c.l.b16 %v3991
        %v4070 = vunpack.c.l.b16 %v4005
        %v4071 = vunpack.c.l.b16 %v4015
        %v4072 = vunpack.c.l.b16 %v4029
        %v4073 = vunpack.c.l.b16 %v4039
        %v4074 = vpack.c.b16 %v4043, %v4042
        %v4075 = vpack.c.b16 %v4045, %v4044
        %v4076 = vpack.c.b16 %v4047, %v4046
        %v4077 = vpack.c.b16 %v4049, %v4048
        %v4078 = vpack.c.b16 %v4051, %v4050
        %v4079 = vpack.c.b16 %v4053, %v4052
        %v4080 = vpack.c.b16 %v4055, %v4054
        %v4081 = vpack.c.b16 %v4057, %v4056
        %v4082 = vpack.c.b16 %v4059, %v4058
        %v4083 = vpack.c.b16 %v4061, %v4060
        %v4084 = vpack.c.b16 %v4063, %v4062
        %v4085 = vpack.c.b16 %v4065, %v4064
        %v4086 = vpack.c.b16 %v4067, %v4066
        %v4087 = vpack.c.b16 %v4069, %v4068
        %v4088 = vpack.c.b16 %v4071, %v4070
        %v4089 = vpack.c.b16 %v4073, %v4072
        %v4091 = vsel %vm731, %v4074, 0
        %v4094 = vsel %vm731, %v4075, 0
        %v4097 = vsel %vm731, %v4076, 0
        %v4100 = vsel %vm731, %v4077, 0
        %v4103 = vsel %vm731, %v4078, 0
        %v4106 = vsel %vm731, %v4079, 0
        %v4109 = vsel %vm731, %v4080, 0
        %v4112 = vsel %vm731, %v4081, 0
        %v4115 = vsel %vm731, %v4082, 0
        %v4118 = vsel %vm731, %v4083, 0
        %v4121 = vsel %vm731, %v4084, 0
        %v4124 = vsel %vm731, %v4085, 0
        %v4127 = vsel %vm731, %v4086, 0
        %v4130 = vsel %vm731, %v4087, 0
        %v4133 = vsel %vm731, %v4088, 0
        %v4136 = vsel %vm731, %v4089, 0
        %v4139 = vsel %vm780, %v4041, 0
        %4141 = vmatprep.subr.bf16.mxu0 0
        %4142 = vmatpush1.bf16.msra.mxu0 %v4139
        %4143 = vmatprep.subr.bf16.mxu0 0
        %4144 = vmatpush1.bf16.msra.mxu0 0
        %4145 = vmatprep.subr.bf16.mxu0 0
        %4146 = vmatpush1.bf16.msra.mxu0 0
        %4147 = vmatprep.subr.bf16.mxu0 0
        %4148 = vmatpush1.bf16.msra.mxu0 0
        %4149 = vmatprep.subr.bf16.mxu0 0
        %4150 = vmatpush1.bf16.msra.mxu0 0
        %4151 = vmatprep.subr.bf16.mxu0 0
        %4152 = vmatpush1.bf16.msra.mxu0 0
        %4153 = vmatprep.subr.bf16.mxu0 0
        %4154 = vmatpush1.bf16.msra.mxu0 0
        %4155 = vmatprep.subr.bf16.mxu0 0
        %4156 = vmatpush1.bf16.msra.mxu0 0
        %4157 = vmatprep.subr.bf16.mxu0 0
        %4158 = vmatpush1.bf16.msra.mxu0 0
        %4159 = vmatprep.subr.bf16.mxu0 0
        %4160 = vmatpush1.bf16.msra.mxu0 0
        %4161 = vmatprep.subr.bf16.mxu0 0
        %4162 = vmatpush1.bf16.msra.mxu0 0
        %4163 = vmatprep.subr.bf16.mxu0 0
        %4164 = vmatpush1.bf16.msra.mxu0 0
        %4165 = vmatprep.subr.bf16.mxu0 0
        %4166 = vmatpush1.bf16.msra.mxu0 0
        %4167 = vmatprep.subr.bf16.mxu0 0
        %4168 = vmatpush1.bf16.msra.mxu0 0
        %4169 = vmatprep.subr.bf16.mxu0 0
        %4170 = vmatpush1.bf16.msra.mxu0 0
        %4171 = vmatprep.subr.bf16.mxu0 0
        %4172 = vmatpush1.bf16.msra.mxu0 0
        %4173 = vmatprep.mubr.bf16.mxu0 0
        %4174 = vmatmul.mubr.bf16.gmra.mrb[0].mxu0 %v4091
        %v4175 = vpop.f32.mrb[0].mxu0
        %v4176 = vadd.f32 0.0, %v4175
        %v4177 = vpop.f32.mrb[0].mxu0
        %v4178 = vpop.f32.mrb[0].mxu0
        %v4179 = vadd.f32 0.0, %v4178
        %v4180 = vpop.f32.mrb[0].mxu0
        %4181 = vmatprep.mubr.bf16.mxu0 0
        %4182 = vmatmul.mubr.bf16.gmra.mrb[0].mxu0 %v4094
        %v4183 = vpop.f32.mrb[0].mxu0
        %v4184 = vadd.f32 0.0, %v4183
        %v4185 = vpop.f32.mrb[0].mxu0
        %v4186 = vpop.f32.mrb[0].mxu0
        %v4187 = vadd.f32 0.0, %v4186
        %v4188 = vpop.f32.mrb[0].mxu0
        %4189 = vmatprep.mubr.bf16.mxu0 0
        %4190 = vmatmul.mubr.bf16.gmra.mrb[0].mxu0 %v4097
        %v4191 = vpop.f32.mrb[0].mxu0
        %v4192 = vadd.f32 0.0, %v4191
        %v4193 = vpop.f32.mrb[0].mxu0
        %v4194 = vpop.f32.mrb[0].mxu0
        %v4195 = vadd.f32 0.0, %v4194
        %v4196 = vpop.f32.mrb[0].mxu0
        %4197 = vmatprep.mubr.bf16.mxu0 0
        %4198 = vmatmul.mubr.bf16.gmra.mrb[0].mxu0 %v4100
        %v4199 = vpop.f32.mrb[0].mxu0
        %v4200 = vadd.f32 0.0, %v4199
        %v4201 = vpop.f32.mrb[0].mxu0
        %v4202 = vpop.f32.mrb[0].mxu0
        %v4203 = vadd.f32 0.0, %v4202
        %v4204 = vpop.f32.mrb[0].mxu0
        %4205 = vmatprep.mubr.bf16.mxu0 0
        %4206 = vmatmul.mubr.bf16.gmra.mrb[0].mxu0 %v4103
        %v4207 = vpop.f32.mrb[0].mxu0
        %v4208 = vadd.f32 0.0, %v4207
        %v4209 = vpop.f32.mrb[0].mxu0
        %v4210 = vpop.f32.mrb[0].mxu0
        %v4211 = vadd.f32 0.0, %v4210
        %v4212 = vpop.f32.mrb[0].mxu0
        %4213 = vmatprep.mubr.bf16.mxu0 0
        %4214 = vmatmul.mubr.bf16.gmra.mrb[0].mxu0 %v4106
        %v4215 = vpop.f32.mrb[0].mxu0
        %v4216 = vadd.f32 0.0, %v4215
        %v4217 = vpop.f32.mrb[0].mxu0
        %v4218 = vpop.f32.mrb[0].mxu0
        %v4219 = vadd.f32 0.0, %v4218
        %v4220 = vpop.f32.mrb[0].mxu0
        %4221 = vmatprep.mubr.bf16.mxu0 0
        %4222 = vmatmul.mubr.bf16.gmra.mrb[0].mxu0 %v4109
        %v4223 = vpop.f32.mrb[0].mxu0
        %v4224 = vadd.f32 0.0, %v4223
        %v4225 = vpop.f32.mrb[0].mxu0
        %v4226 = vpop.f32.mrb[0].mxu0
        %v4227 = vadd.f32 0.0, %v4226
        %v4228 = vpop.f32.mrb[0].mxu0
        %4229 = vmatprep.mubr.bf16.mxu0 0
        %4230 = vmatmul.mubr.bf16.gmra.mrb[0].mxu0 %v4112
        %v4231 = vpop.f32.mrb[0].mxu0
        %v4232 = vadd.f32 0.0, %v4231
        %v4233 = vpop.f32.mrb[0].mxu0
        %v4234 = vpop.f32.mrb[0].mxu0
        %v4235 = vadd.f32 0.0, %v4234
        %v4236 = vpop.f32.mrb[0].mxu0
        %4237 = vmatprep.mubr.bf16.mxu0 0
        %4238 = vmatmul.mubr.bf16.gmra.mrb[0].mxu0 %v4115
        %v4239 = vpop.f32.mrb[0].mxu0
        %v4240 = vadd.f32 0.0, %v4239
        %v4241 = vpop.f32.mrb[0].mxu0
        %v4242 = vpop.f32.mrb[0].mxu0
        %v4243 = vadd.f32 0.0, %v4242
        %v4244 = vpop.f32.mrb[0].mxu0
        %4245 = vmatprep.mubr.bf16.mxu0 0
        %4246 = vmatmul.mubr.bf16.gmra.mrb[0].mxu0 %v4118
        %v4247 = vpop.f32.mrb[0].mxu0
        %v4248 = vadd.f32 0.0, %v4247
        %v4249 = vpop.f32.mrb[0].mxu0
        %v4250 = vpop.f32.mrb[0].mxu0
        %v4251 = vadd.f32 0.0, %v4250
        %v4252 = vpop.f32.mrb[0].mxu0
        %4253 = vmatprep.mubr.bf16.mxu0 0
        %4254 = vmatmul.mubr.bf16.gmra.mrb[0].mxu0 %v4121
        %v4255 = vpop.f32.mrb[0].mxu0
        %v4256 = vadd.f32 0.0, %v4255
        %v4257 = vpop.f32.mrb[0].mxu0
        %v4258 = vpop.f32.mrb[0].mxu0
        %v4259 = vadd.f32 0.0, %v4258
        %v4260 = vpop.f32.mrb[0].mxu0
        %4261 = vmatprep.mubr.bf16.mxu0 0
        %4262 = vmatmul.mubr.bf16.gmra.mrb[0].mxu0 %v4124
        %v4263 = vpop.f32.mrb[0].mxu0
        %v4264 = vadd.f32 0.0, %v4263
        %v4265 = vpop.f32.mrb[0].mxu0
        %v4266 = vpop.f32.mrb[0].mxu0
        %v4267 = vadd.f32 0.0, %v4266
        %v4268 = vpop.f32.mrb[0].mxu0
        %4269 = vmatprep.mubr.bf16.mxu0 0
        %4270 = vmatmul.mubr.bf16.gmra.mrb[0].mxu0 %v4127
        %v4271 = vpop.f32.mrb[0].mxu0
        %v4272 = vadd.f32 0.0, %v4271
        %v4273 = vpop.f32.mrb[0].mxu0
        %v4274 = vpop.f32.mrb[0].mxu0
        %v4275 = vadd.f32 0.0, %v4274
        %v4276 = vpop.f32.mrb[0].mxu0
        %4277 = vmatprep.mubr.bf16.mxu0 0
        %4278 = vmatmul.mubr.bf16.gmra.mrb[0].mxu0 %v4130
        %v4279 = vpop.f32.mrb[0].mxu0
        %v4280 = vadd.f32 0.0, %v4279
        %v4281 = vpop.f32.mrb[0].mxu0
        %v4282 = vpop.f32.mrb[0].mxu0
        %v4283 = vadd.f32 0.0, %v4282
        %v4284 = vpop.f32.mrb[0].mxu0
        %4285 = vmatprep.mubr.bf16.mxu0 0
        %4286 = vmatmul.mubr.bf16.gmra.mrb[0].mxu0 %v4133
        %v4287 = vpop.f32.mrb[0].mxu0
        %v4288 = vadd.f32 0.0, %v4287
        %v4289 = vpop.f32.mrb[0].mxu0
        %v4290 = vpop.f32.mrb[0].mxu0
        %v4291 = vadd.f32 0.0, %v4290
        %v4292 = vpop.f32.mrb[0].mxu0
        %4293 = vmatprep.mubr.bf16.mxu0 0
        %4294 = vmatmul.mubr.bf16.gmra.mrb[0].mxu0 %v4136
        %v4295 = vpop.f32.mrb[0].mxu0
        %v4296 = vadd.f32 0.0, %v4295
        %v4297 = vpop.f32.mrb[0].mxu0
        %v4298 = vpop.f32.mrb[0].mxu0
        %v4299 = vadd.f32 0.0, %v4298
        %v4300 = vpop.f32.mrb[0].mxu0
        %4301 = vdwg.mxu0
        %v4302 = vadd.f32 %v3576, %v4176
        %v4303 = vadd.f32 %v3577, %v4179
        %v4304 = vadd.f32 %v3578, %v4184
        %v4305 = vadd.f32 %v3579, %v4187
        %v4306 = vadd.f32 %v3580, %v4192
        %v4307 = vadd.f32 %v3581, %v4195
        %v4308 = vadd.f32 %v3582, %v4200
        %v4309 = vadd.f32 %v3583, %v4203
        %v4310 = vadd.f32 %v3584, %v4208
        %v4311 = vadd.f32 %v3585, %v4211
        %v4312 = vadd.f32 %v3586, %v4216
        %v4313 = vadd.f32 %v3587, %v4219
        %v4314 = vadd.f32 %v3588, %v4224
        %v4315 = vadd.f32 %v3589, %v4227
        %v4316 = vadd.f32 %v3590, %v4232
        %v4317 = vadd.f32 %v3591, %v4235
        %v4318 = vadd.f32 %v3592, %v4240
        %v4319 = vadd.f32 %v3593, %v4243
        %v4320 = vadd.f32 %v3594, %v4248
        %v4321 = vadd.f32 %v3595, %v4251
        %v4322 = vadd.f32 %v3596, %v4256
        %v4323 = vadd.f32 %v3597, %v4259
        %v4324 = vadd.f32 %v3598, %v4264
        %v4325 = vadd.f32 %v3599, %v4267
        %v4326 = vadd.f32 %v3600, %v4272
        %v4327 = vadd.f32 %v3601, %v4275
        %v4328 = vadd.f32 %v3602, %v4280
        %v4329 = vadd.f32 %v3603, %v4283
        %v4330 = vadd.f32 %v3604, %v4288
        %v4331 = vadd.f32 %v3605, %v4291
        %v4332 = vadd.f32 %v3606, %v4296
        %v4333 = vadd.f32 %v3607, %v4299
        %v4334 = vld [vmem:[%s3249] sm:$0xe]
        %v4335 = vld [vmem:[%s3249 + $0xc] sm:$0xe]
        %v4336 = vld [vmem:[%s3249 + $0x18] sm:$0xe]
        %v4337 = vld [vmem:[%s3249 + $0x24] sm:$0xe]
        %v4338 = vld [vmem:[%s3249 + $0x30] sm:$0xe]
        %v4339 = vld [vmem:[%s3249 + $0x3c] sm:$0xe]
        %v4340 = vld [vmem:[%s3249 + $0x48] sm:$0xe]
        %v4341 = vld [vmem:[%s3249 + $0x54] sm:$0xe]
        %v4342 = vld [vmem:[%s3249 + $0x60] sm:$0xe]
        %v4343 = vld [vmem:[%s3249 + $0x6c] sm:$0xe]
        %v4344 = vld [vmem:[%s3249 + $0x78] sm:$0xe]
        %v4345 = vld [vmem:[%s3249 + $0x84] sm:$0xe]
        %v4346 = vld [vmem:[%s3249 + $0x90] sm:$0xe]
        %v4347 = vld [vmem:[%s3249 + $0x9c] sm:$0xe]
        %v4348 = vld [vmem:[%s3249 + $0xa8] sm:$0xe]
        %v4349 = vld [vmem:[%s3249 + $0xb4] sm:$0xe]
        %v4398 = vrot.slane %v4334, 5
        %v4399 = vrot.slane %v4398, 4
        %v4400 = vrot.slane %v3609, 5
        %v4401 = vsel %vm1287, %v4399, %v4400
        %v4402 = vrot.slane %v4400, 4
        %v4403 = vrot.slane %v3610, 5
        %v4404 = vsel %vm1287, %v4402, %v4403
        %v4405 = vrot.slane %v4335, 5
        %v4406 = vrot.slane %v4405, 4
        %v4407 = vrot.slane %v3612, 5
        %v4408 = vsel %vm1287, %v4406, %v4407
        %v4409 = vrot.slane %v4407, 4
        %v4410 = vrot.slane %v3613, 5
        %v4411 = vsel %vm1287, %v4409, %v4410
        %v4412 = vrot.slane %v4336, 5
        %v4413 = vrot.slane %v4412, 4
        %v4414 = vrot.slane %v3615, 5
        %v4415 = vsel %vm1287, %v4413, %v4414
        %v4416 = vrot.slane %v4414, 4
        %v4417 = vrot.slane %v3616, 5
        %v4418 = vsel %vm1287, %v4416, %v4417
        %v4419 = vrot.slane %v4337, 5
        %v4420 = vrot.slane %v4419, 4
        %v4421 = vrot.slane %v3618, 5
        %v4422 = vsel %vm1287, %v4420, %v4421
        %v4423 = vrot.slane %v4421, 4
        %v4424 = vrot.slane %v3619, 5
        %v4425 = vsel %vm1287, %v4423, %v4424
        %v4426 = vrot.slane %v4338, 5
        %v4427 = vrot.slane %v4426, 4
        %v4428 = vrot.slane %v3621, 5
        %v4429 = vsel %vm1287, %v4427, %v4428
        %v4430 = vrot.slane %v4428, 4
        %v4431 = vrot.slane %v3622, 5
        %v4432 = vsel %vm1287, %v4430, %v4431
        %v4433 = vrot.slane %v4339, 5
        %v4434 = vrot.slane %v4433, 4
        %v4435 = vrot.slane %v3624, 5
        %v4436 = vsel %vm1287, %v4434, %v4435
        %v4437 = vrot.slane %v4435, 4
        %v4438 = vrot.slane %v3625, 5
        %v4439 = vsel %vm1287, %v4437, %v4438
        %v4440 = vrot.slane %v4340, 5
        %v4441 = vrot.slane %v4440, 4
        %v4442 = vrot.slane %v3627, 5
        %v4443 = vsel %vm1287, %v4441, %v4442
        %v4444 = vrot.slane %v4442, 4
        %v4445 = vrot.slane %v3628, 5
        %v4446 = vsel %vm1287, %v4444, %v4445
        %v4447 = vrot.slane %v4341, 5
        %v4448 = vrot.slane %v4447, 4
        %v4449 = vrot.slane %v3630, 5
        %v4450 = vsel %vm1287, %v4448, %v4449
        %v4451 = vrot.slane %v4449, 4
        %v4452 = vrot.slane %v3631, 5
        %v4453 = vsel %vm1287, %v4451, %v4452
        %v4454 = vrot.slane %v4342, 5
        %v4455 = vrot.slane %v4454, 4
        %v4456 = vrot.slane %v3633, 5
        %v4457 = vsel %vm1287, %v4455, %v4456
        %v4458 = vrot.slane %v4456, 4
        %v4459 = vrot.slane %v3634, 5
        %v4460 = vsel %vm1287, %v4458, %v4459
        %v4461 = vrot.slane %v4343, 5
        %v4462 = vrot.slane %v4461, 4
        %v4463 = vrot.slane %v3636, 5
        %v4464 = vsel %vm1287, %v4462, %v4463
        %v4465 = vrot.slane %v4463, 4
        %v4466 = vrot.slane %v3637, 5
        %v4467 = vsel %vm1287, %v4465, %v4466
        %v4468 = vrot.slane %v4344, 5
        %v4469 = vrot.slane %v4468, 4
        %v4470 = vrot.slane %v3639, 5
        %v4471 = vsel %vm1287, %v4469, %v4470
        %v4472 = vrot.slane %v4470, 4
        %v4473 = vrot.slane %v3640, 5
        %v4474 = vsel %vm1287, %v4472, %v4473
        %v4475 = vrot.slane %v4345, 5
        %v4476 = vrot.slane %v4475, 4
        %v4477 = vrot.slane %v3642, 5
        %v4478 = vsel %vm1287, %v4476, %v4477
        %v4479 = vrot.slane %v4477, 4
        %v4480 = vrot.slane %v3643, 5
        %v4481 = vsel %vm1287, %v4479, %v4480
        %v4482 = vrot.slane %v4346, 5
        %v4483 = vrot.slane %v4482, 4
        %v4484 = vrot.slane %v3645, 5
        %v4485 = vsel %vm1287, %v4483, %v4484
        %v4486 = vrot.slane %v4484, 4
        %v4487 = vrot.slane %v3646, 5
        %v4488 = vsel %vm1287, %v4486, %v4487
        %v4489 = vrot.slane %v4347, 5
        %v4490 = vrot.slane %v4489, 4
        %v4491 = vrot.slane %v3648, 5
        %v4492 = vsel %vm1287, %v4490, %v4491
        %v4493 = vrot.slane %v4491, 4
        %v4494 = vrot.slane %v3649, 5
        %v4495 = vsel %vm1287, %v4493, %v4494
        %v4496 = vrot.slane %v4348, 5
        %v4497 = vrot.slane %v4496, 4
        %v4498 = vrot.slane %v3651, 5
        %v4499 = vsel %vm1287, %v4497, %v4498
        %v4500 = vrot.slane %v4498, 4
        %v4501 = vrot.slane %v3652, 5
        %v4502 = vsel %vm1287, %v4500, %v4501
        %v4503 = vrot.slane %v4349, 5
        %v4504 = vrot.slane %v4503, 4
        %v4505 = vrot.slane %v3654, 5
        %v4506 = vsel %vm1287, %v4504, %v4505
        %v4507 = vrot.slane %v4505, 4
        %v4508 = vrot.slane %v3655, 5
        %v4509 = vsel %vm1287, %v4507, %v4508
        %s4510 = scalar_lea.vmem [#allocation5], 32
        %v4511 = vld [vmem:[%s4510] sm:$0xf]
        %v4512 = vunpack.c.l.b16 %v4401
        %v4513 = vunpack.c.l.b16 %v4404
        %v4514 = vunpack.c.l.b16 %v4408
        %v4515 = vunpack.c.l.b16 %v4411
        %v4516 = vunpack.c.l.b16 %v4415
        %v4517 = vunpack.c.l.b16 %v4418
        %v4518 = vunpack.c.l.b16 %v4422
        %v4519 = vunpack.c.l.b16 %v4425
        %v4520 = vunpack.c.l.b16 %v4429
        %v4521 = vunpack.c.l.b16 %v4432
        %v4522 = vunpack.c.l.b16 %v4436
        %v4523 = vunpack.c.l.b16 %v4439
        %v4524 = vunpack.c.l.b16 %v4443
        %v4525 = vunpack.c.l.b16 %v4446
        %v4526 = vunpack.c.l.b16 %v4450
        %v4527 = vunpack.c.l.b16 %v4453
        %v4528 = vunpack.c.l.b16 %v4457
        %v4529 = vunpack.c.l.b16 %v4460
        %v4530 = vunpack.c.l.b16 %v4464
        %v4531 = vunpack.c.l.b16 %v4467
        %v4532 = vunpack.c.l.b16 %v4471
        %v4533 = vunpack.c.l.b16 %v4474
        %v4534 = vunpack.c.l.b16 %v4478
        %v4535 = vunpack.c.l.b16 %v4481
        %v4536 = vunpack.c.l.b16 %v4485
        %v4537 = vunpack.c.l.b16 %v4488
        %v4538 = vunpack.c.l.b16 %v4492
        %v4539 = vunpack.c.l.b16 %v4495
        %v4540 = vunpack.c.l.b16 %v4499
        %v4541 = vunpack.c.l.b16 %v4502
        %v4542 = vunpack.c.l.b16 %v4506
        %v4543 = vunpack.c.l.b16 %v4509
        %v4544 = vpack.c.b16 %v4513, %v4512
        %v4545 = vpack.c.b16 %v4515, %v4514
        %v4546 = vpack.c.b16 %v4517, %v4516
        %v4547 = vpack.c.b16 %v4519, %v4518
        %v4548 = vpack.c.b16 %v4521, %v4520
        %v4549 = vpack.c.b16 %v4523, %v4522
        %v4550 = vpack.c.b16 %v4525, %v4524
        %v4551 = vpack.c.b16 %v4527, %v4526
        %v4552 = vpack.c.b16 %v4529, %v4528
        %v4553 = vpack.c.b16 %v4531, %v4530
        %v4554 = vpack.c.b16 %v4533, %v4532
        %v4555 = vpack.c.b16 %v4535, %v4534
        %v4556 = vpack.c.b16 %v4537, %v4536
        %v4557 = vpack.c.b16 %v4539, %v4538
        %v4558 = vpack.c.b16 %v4541, %v4540
        %v4559 = vpack.c.b16 %v4543, %v4542
        %v4561 = vsel %vm731, %v4544, 0
        %v4564 = vsel %vm731, %v4545, 0
        %v4567 = vsel %vm731, %v4546, 0
        %v4570 = vsel %vm731, %v4547, 0
        %v4573 = vsel %vm731, %v4548, 0
        %v4576 = vsel %vm731, %v4549, 0
        %v4579 = vsel %vm731, %v4550, 0
        %v4582 = vsel %vm731, %v4551, 0
        %v4585 = vsel %vm731, %v4552, 0
        %v4588 = vsel %vm731, %v4553, 0
        %v4591 = vsel %vm731, %v4554, 0
        %v4594 = vsel %vm731, %v4555, 0
        %v4597 = vsel %vm731, %v4556, 0
        %v4600 = vsel %vm731, %v4557, 0
        %v4603 = vsel %vm731, %v4558, 0
        %v4606 = vsel %vm731, %v4559, 0
        %v4609 = vsel %vm780, %v4511, 0
        %4611 = vmatprep.subr.bf16.mxu0 0
        %4612 = vmatpush1.bf16.msra.mxu0 %v4609
        %4613 = vmatprep.subr.bf16.mxu0 0
        %4614 = vmatpush1.bf16.msra.mxu0 0
        %4615 = vmatprep.subr.bf16.mxu0 0
        %4616 = vmatpush1.bf16.msra.mxu0 0
        %4617 = vmatprep.subr.bf16.mxu0 0
        %4618 = vmatpush1.bf16.msra.mxu0 0
        %4619 = vmatprep.subr.bf16.mxu0 0
        %4620 = vmatpush1.bf16.msra.mxu0 0
        %4621 = vmatprep.subr.bf16.mxu0 0
        %4622 = vmatpush1.bf16.msra.mxu0 0
        %4623 = vmatprep.subr.bf16.mxu0 0
        %4624 = vmatpush1.bf16.msra.mxu0 0
        %4625 = vmatprep.subr.bf16.mxu0 0
        %4626 = vmatpush1.bf16.msra.mxu0 0
        %4627 = vmatprep.subr.bf16.mxu0 0
        %4628 = vmatpush1.bf16.msra.mxu0 0
        %4629 = vmatprep.subr.bf16.mxu0 0
        %4630 = vmatpush1.bf16.msra.mxu0 0
        %4631 = vmatprep.subr.bf16.mxu0 0
        %4632 = vmatpush1.bf16.msra.mxu0 0
        %4633 = vmatprep.subr.bf16.mxu0 0
        %4634 = vmatpush1.bf16.msra.mxu0 0
        %4635 = vmatprep.subr.bf16.mxu0 0
        %4636 = vmatpush1.bf16.msra.mxu0 0
        %4637 = vmatprep.subr.bf16.mxu0 0
        %4638 = vmatpush1.bf16.msra.mxu0 0
        %4639 = vmatprep.subr.bf16.mxu0 0
        %4640 = vmatpush1.bf16.msra.mxu0 0
        %4641 = vmatprep.subr.bf16.mxu0 0
        %4642 = vmatpush1.bf16.msra.mxu0 0
        %4643 = vmatprep.mubr.bf16.mxu0 0
        %4644 = vmatmul.mubr.bf16.gmra.mrb[0].mxu0 %v4561
        %v4645 = vpop.f32.mrb[0].mxu0
        %v4646 = vadd.f32 0.0, %v4645
        %v4647 = vpop.f32.mrb[0].mxu0
        %v4648 = vpop.f32.mrb[0].mxu0
        %v4649 = vadd.f32 0.0, %v4648
        %v4650 = vpop.f32.mrb[0].mxu0
        %4651 = vmatprep.mubr.bf16.mxu0 0
        %4652 = vmatmul.mubr.bf16.gmra.mrb[0].mxu0 %v4564
        %v4653 = vpop.f32.mrb[0].mxu0
        %v4654 = vadd.f32 0.0, %v4653
        %v4655 = vpop.f32.mrb[0].mxu0
        %v4656 = vpop.f32.mrb[0].mxu0
        %v4657 = vadd.f32 0.0, %v4656
        %v4658 = vpop.f32.mrb[0].mxu0
        %4659 = vmatprep.mubr.bf16.mxu0 0
        %4660 = vmatmul.mubr.bf16.gmra.mrb[0].mxu0 %v4567
        %v4661 = vpop.f32.mrb[0].mxu0
        %v4662 = vadd.f32 0.0, %v4661
        %v4663 = vpop.f32.mrb[0].mxu0
        %v4664 = vpop.f32.mrb[0].mxu0
        %v4665 = vadd.f32 0.0, %v4664
        %v4666 = vpop.f32.mrb[0].mxu0
        %4667 = vmatprep.mubr.bf16.mxu0 0
        %4668 = vmatmul.mubr.bf16.gmra.mrb[0].mxu0 %v4570
        %v4669 = vpop.f32.mrb[0].mxu0
        %v4670 = vadd.f32 0.0, %v4669
        %v4671 = vpop.f32.mrb[0].mxu0
        %v4672 = vpop.f32.mrb[0].mxu0
        %v4673 = vadd.f32 0.0, %v4672
        %v4674 = vpop.f32.mrb[0].mxu0
        %4675 = vmatprep.mubr.bf16.mxu0 0
        %4676 = vmatmul.mubr.bf16.gmra.mrb[0].mxu0 %v4573
        %v4677 = vpop.f32.mrb[0].mxu0
        %v4678 = vadd.f32 0.0, %v4677
        %v4679 = vpop.f32.mrb[0].mxu0
        %v4680 = vpop.f32.mrb[0].mxu0
        %v4681 = vadd.f32 0.0, %v4680
        %v4682 = vpop.f32.mrb[0].mxu0
        %4683 = vmatprep.mubr.bf16.mxu0 0
        %4684 = vmatmul.mubr.bf16.gmra.mrb[0].mxu0 %v4576
        %v4685 = vpop.f32.mrb[0].mxu0
        %v4686 = vadd.f32 0.0, %v4685
        %v4687 = vpop.f32.mrb[0].mxu0
        %v4688 = vpop.f32.mrb[0].mxu0
        %v4689 = vadd.f32 0.0, %v4688
        %v4690 = vpop.f32.mrb[0].mxu0
        %4691 = vmatprep.mubr.bf16.mxu0 0
        %4692 = vmatmul.mubr.bf16.gmra.mrb[0].mxu0 %v4579
        %v4693 = vpop.f32.mrb[0].mxu0
        %v4694 = vadd.f32 0.0, %v4693
        %v4695 = vpop.f32.mrb[0].mxu0
        %v4696 = vpop.f32.mrb[0].mxu0
        %v4697 = vadd.f32 0.0, %v4696
        %v4698 = vpop.f32.mrb[0].mxu0
        %4699 = vmatprep.mubr.bf16.mxu0 0
        %4700 = vmatmul.mubr.bf16.gmra.mrb[0].mxu0 %v4582
        %v4701 = vpop.f32.mrb[0].mxu0
        %v4702 = vadd.f32 0.0, %v4701
        %v4703 = vpop.f32.mrb[0].mxu0
        %v4704 = vpop.f32.mrb[0].mxu0
        %v4705 = vadd.f32 0.0, %v4704
        %v4706 = vpop.f32.mrb[0].mxu0
        %4707 = vmatprep.mubr.bf16.mxu0 0
        %4708 = vmatmul.mubr.bf16.gmra.mrb[0].mxu0 %v4585
        %v4709 = vpop.f32.mrb[0].mxu0
        %v4710 = vadd.f32 0.0, %v4709
        %v4711 = vpop.f32.mrb[0].mxu0
        %v4712 = vpop.f32.mrb[0].mxu0
        %v4713 = vadd.f32 0.0, %v4712
        %v4714 = vpop.f32.mrb[0].mxu0
        %4715 = vmatprep.mubr.bf16.mxu0 0
        %4716 = vmatmul.mubr.bf16.gmra.mrb[0].mxu0 %v4588
        %v4717 = vpop.f32.mrb[0].mxu0
        %v4718 = vadd.f32 0.0, %v4717
        %v4719 = vpop.f32.mrb[0].mxu0
        %v4720 = vpop.f32.mrb[0].mxu0
        %v4721 = vadd.f32 0.0, %v4720
        %v4722 = vpop.f32.mrb[0].mxu0
        %4723 = vmatprep.mubr.bf16.mxu0 0
        %4724 = vmatmul.mubr.bf16.gmra.mrb[0].mxu0 %v4591
        %v4725 = vpop.f32.mrb[0].mxu0
        %v4726 = vadd.f32 0.0, %v4725
        %v4727 = vpop.f32.mrb[0].mxu0
        %v4728 = vpop.f32.mrb[0].mxu0
        %v4729 = vadd.f32 0.0, %v4728
        %v4730 = vpop.f32.mrb[0].mxu0
        %4731 = vmatprep.mubr.bf16.mxu0 0
        %4732 = vmatmul.mubr.bf16.gmra.mrb[0].mxu0 %v4594
        %v4733 = vpop.f32.mrb[0].mxu0
        %v4734 = vadd.f32 0.0, %v4733
        %v4735 = vpop.f32.mrb[0].mxu0
        %v4736 = vpop.f32.mrb[0].mxu0
        %v4737 = vadd.f32 0.0, %v4736
        %v4738 = vpop.f32.mrb[0].mxu0
        %4739 = vmatprep.mubr.bf16.mxu0 0
        %4740 = vmatmul.mubr.bf16.gmra.mrb[0].mxu0 %v4597
        %v4741 = vpop.f32.mrb[0].mxu0
        %v4742 = vadd.f32 0.0, %v4741
        %v4743 = vpop.f32.mrb[0].mxu0
        %v4744 = vpop.f32.mrb[0].mxu0
        %v4745 = vadd.f32 0.0, %v4744
        %v4746 = vpop.f32.mrb[0].mxu0
        %4747 = vmatprep.mubr.bf16.mxu0 0
        %4748 = vmatmul.mubr.bf16.gmra.mrb[0].mxu0 %v4600
        %v4749 = vpop.f32.mrb[0].mxu0
        %v4750 = vadd.f32 0.0, %v4749
        %v4751 = vpop.f32.mrb[0].mxu0
        %v4752 = vpop.f32.mrb[0].mxu0
        %v4753 = vadd.f32 0.0, %v4752
        %v4754 = vpop.f32.mrb[0].mxu0
        %4755 = vmatprep.mubr.bf16.mxu0 0
        %4756 = vmatmul.mubr.bf16.gmra.mrb[0].mxu0 %v4603
        %v4757 = vpop.f32.mrb[0].mxu0
        %v4758 = vadd.f32 0.0, %v4757
        %v4759 = vpop.f32.mrb[0].mxu0
        %v4760 = vpop.f32.mrb[0].mxu0
        %v4761 = vadd.f32 0.0, %v4760
        %v4762 = vpop.f32.mrb[0].mxu0
        %4763 = vmatprep.mubr.bf16.mxu0 0
        %4764 = vmatmul.mubr.bf16.gmra.mrb[0].mxu0 %v4606
        %v4765 = vpop.f32.mrb[0].mxu0
        %v4766 = vadd.f32 0.0, %v4765
        %v4767 = vpop.f32.mrb[0].mxu0
        %v4768 = vpop.f32.mrb[0].mxu0
        %v4769 = vadd.f32 0.0, %v4768
        %v4770 = vpop.f32.mrb[0].mxu0
        %4771 = vdwg.mxu0
        %v4772 = vadd.f32 %v4302, %v4646
        %v4773 = vadd.f32 %v4303, %v4649
        %v4774 = vadd.f32 %v4304, %v4654
        %v4775 = vadd.f32 %v4305, %v4657
        %v4776 = vadd.f32 %v4306, %v4662
        %v4777 = vadd.f32 %v4307, %v4665
        %v4778 = vadd.f32 %v4308, %v4670
        %v4779 = vadd.f32 %v4309, %v4673
        %v4780 = vadd.f32 %v4310, %v4678
        %v4781 = vadd.f32 %v4311, %v4681
        %v4782 = vadd.f32 %v4312, %v4686
        %v4783 = vadd.f32 %v4313, %v4689
        %v4784 = vadd.f32 %v4314, %v4694
        %v4785 = vadd.f32 %v4315, %v4697
        %v4786 = vadd.f32 %v4316, %v4702
        %v4787 = vadd.f32 %v4317, %v4705
        %v4788 = vadd.f32 %v4318, %v4710
        %v4789 = vadd.f32 %v4319, %v4713
        %v4790 = vadd.f32 %v4320, %v4718
        %v4791 = vadd.f32 %v4321, %v4721
        %v4792 = vadd.f32 %v4322, %v4726
        %v4793 = vadd.f32 %v4323, %v4729
        %v4794 = vadd.f32 %v4324, %v4734
        %v4795 = vadd.f32 %v4325, %v4737
        %v4796 = vadd.f32 %v4326, %v4742
        %v4797 = vadd.f32 %v4327, %v4745
        %v4798 = vadd.f32 %v4328, %v4750
        %v4799 = vadd.f32 %v4329, %v4753
        %v4800 = vadd.f32 %v4330, %v4758
        %v4801 = vadd.f32 %v4331, %v4761
        %v4802 = vadd.f32 %v4332, %v4766
        %v4803 = vadd.f32 %v4333, %v4769
        %v4804 = vld [vmem:[#allocation7] sm:$0x1]
        %v4806 = vlaneseq
        %v4807 = vshrl.u32 %v4806, 7
        %v4808 = vsub.s32 0, %v4807
        %v4809 = vrot.slane %v4804, %v4808
        %v4811 = vadd.f32 %v4772, %v4809
        %v4812 = vadd.f32 %v4773, %v4809
        %v4813 = vadd.f32 %v4774, %v4809
        %v4814 = vadd.f32 %v4775, %v4809
        %v4815 = vadd.f32 %v4776, %v4809
        %v4816 = vadd.f32 %v4777, %v4809
        %v4817 = vadd.f32 %v4778, %v4809
        %v4818 = vadd.f32 %v4779, %v4809
        %v4819 = vadd.f32 %v4780, %v4809
        %v4820 = vadd.f32 %v4781, %v4809
        %v4821 = vadd.f32 %v4782, %v4809
        %v4822 = vadd.f32 %v4783, %v4809
        %v4823 = vadd.f32 %v4784, %v4809
        %v4824 = vadd.f32 %v4785, %v4809
        %v4825 = vadd.f32 %v4786, %v4809
        %v4826 = vadd.f32 %v4787, %v4809
        %v4827 = vadd.f32 %v4788, %v4809
        %v4828 = vadd.f32 %v4789, %v4809
        %v4829 = vadd.f32 %v4790, %v4809
        %v4830 = vadd.f32 %v4791, %v4809
        %v4831 = vadd.f32 %v4792, %v4809
        %v4832 = vadd.f32 %v4793, %v4809
        %v4833 = vadd.f32 %v4794, %v4809
        %v4834 = vadd.f32 %v4795, %v4809
        %v4835 = vadd.f32 %v4796, %v4809
        %v4836 = vadd.f32 %v4797, %v4809
        %v4837 = vadd.f32 %v4798, %v4809
        %v4838 = vadd.f32 %v4799, %v4809
        %v4839 = vadd.f32 %v4800, %v4809
        %v4840 = vadd.f32 %v4801, %v4809
        %v4841 = vadd.f32 %v4802, %v4809
        %v4842 = vadd.f32 %v4803, %v4809
        %v4843 = vpack.c.bf16 %v4812, %v4811
        %v4844 = vpack.c.bf16 %v4814, %v4813
        %v4845 = vpack.c.bf16 %v4816, %v4815
        %v4846 = vpack.c.bf16 %v4818, %v4817
        %v4847 = vpack.c.bf16 %v4820, %v4819
        %v4848 = vpack.c.bf16 %v4822, %v4821
        %v4849 = vpack.c.bf16 %v4824, %v4823
        %v4850 = vpack.c.bf16 %v4826, %v4825
        %v4851 = vpack.c.bf16 %v4828, %v4827
        %v4852 = vpack.c.bf16 %v4830, %v4829
        %v4853 = vpack.c.bf16 %v4832, %v4831
        %v4854 = vpack.c.bf16 %v4834, %v4833
        %v4855 = vpack.c.bf16 %v4836, %v4835
        %v4856 = vpack.c.bf16 %v4838, %v4837
        %v4857 = vpack.c.bf16 %v4840, %v4839
        %v4858 = vpack.c.bf16 %v4842, %v4841
        %v4875 = vunpack.c.l.b16 %v4843
        %v4876 = vunpack.c.h.b16 %v4843
        %v4877 = vunpack.c.l.b16 %v4844
        %v4878 = vunpack.c.h.b16 %v4844
        %v4879 = vunpack.c.l.b16 %v4845
        %v4880 = vunpack.c.h.b16 %v4845
        %v4881 = vunpack.c.l.b16 %v4846
        %v4882 = vunpack.c.h.b16 %v4846
        %v4883 = vunpack.c.l.b16 %v4847
        %v4884 = vunpack.c.h.b16 %v4847
        %v4885 = vunpack.c.l.b16 %v4848
        %v4886 = vunpack.c.h.b16 %v4848
        %v4887 = vunpack.c.l.b16 %v4849
        %v4888 = vunpack.c.h.b16 %v4849
        %v4889 = vunpack.c.l.b16 %v4850
        %v4890 = vunpack.c.h.b16 %v4850
        %v4891 = vunpack.c.l.b16 %v4851
        %v4892 = vunpack.c.h.b16 %v4851
        %v4893 = vunpack.c.l.b16 %v4852
        %v4894 = vunpack.c.h.b16 %v4852
        %v4895 = vunpack.c.l.b16 %v4853
        %v4896 = vunpack.c.h.b16 %v4853
        %v4897 = vunpack.c.l.b16 %v4854
        %v4898 = vunpack.c.h.b16 %v4854
        %v4899 = vunpack.c.l.b16 %v4855
        %v4900 = vunpack.c.h.b16 %v4855
        %v4901 = vunpack.c.l.b16 %v4856
        %v4902 = vunpack.c.h.b16 %v4856
        %v4903 = vunpack.c.l.b16 %v4857
        %v4904 = vunpack.c.h.b16 %v4857
        %v4905 = vunpack.c.l.b16 %v4858
        %v4906 = vunpack.c.h.b16 %v4858
        %v4907 = vpack.c.b16 %v4875, %v4875
        %v4908 = vpack.c.b16 %v4876, %v4876
        %v4909 = vpack.c.b16 %v4877, %v4877
        %v4910 = vpack.c.b16 %v4878, %v4878
        %v4911 = vpack.c.b16 %v4879, %v4879
        %v4912 = vpack.c.b16 %v4880, %v4880
        %v4913 = vpack.c.b16 %v4881, %v4881
        %v4914 = vpack.c.b16 %v4882, %v4882
        %v4915 = vpack.c.b16 %v4883, %v4883
        %v4916 = vpack.c.b16 %v4884, %v4884
        %v4917 = vpack.c.b16 %v4885, %v4885
        %v4918 = vpack.c.b16 %v4886, %v4886
        %v4919 = vpack.c.b16 %v4887, %v4887
        %v4920 = vpack.c.b16 %v4888, %v4888
        %v4921 = vpack.c.b16 %v4889, %v4889
        %v4922 = vpack.c.b16 %v4890, %v4890
        %v4923 = vpack.c.b16 %v4891, %v4891
        %v4924 = vpack.c.b16 %v4892, %v4892
        %v4925 = vpack.c.b16 %v4893, %v4893
        %v4926 = vpack.c.b16 %v4894, %v4894
        %v4927 = vpack.c.b16 %v4895, %v4895
        %v4928 = vpack.c.b16 %v4896, %v4896
        %v4929 = vpack.c.b16 %v4897, %v4897
        %v4930 = vpack.c.b16 %v4898, %v4898
        %v4931 = vpack.c.b16 %v4899, %v4899
        %v4932 = vpack.c.b16 %v4900, %v4900
        %v4933 = vpack.c.b16 %v4901, %v4901
        %v4934 = vpack.c.b16 %v4902, %v4902
        %v4935 = vpack.c.b16 %v4903, %v4903
        %v4936 = vpack.c.b16 %v4904, %v4904
        %v4937 = vpack.c.b16 %v4905, %v4905
        %v4938 = vpack.c.b16 %v4906, %v4906
        %vm4971 = vcmask 257024
        %4972 = vst.msk [vmem:[%s243] sm:$0xf] %vm4971, %v4907
        %4973 = vst.msk [vmem:[%s243 + $0x4] sm:$0xf] %vm4971, %v4908
        %4974 = vst.msk [vmem:[%s243 + $0x8] sm:$0xf] %vm4971, %v4909
        %4975 = vst.msk [vmem:[%s243 + $0xc] sm:$0xf] %vm4971, %v4910
        %4976 = vst.msk [vmem:[%s243 + $0x10] sm:$0xf] %vm4971, %v4911
        %4977 = vst.msk [vmem:[%s243 + $0x14] sm:$0xf] %vm4971, %v4912
        %4978 = vst.msk [vmem:[%s243 + $0x18] sm:$0xf] %vm4971, %v4913
        %4979 = vst.msk [vmem:[%s243 + $0x1c] sm:$0xf] %vm4971, %v4914
        %4980 = vst.msk [vmem:[%s243 + $0x20] sm:$0xf] %vm4971, %v4915
        %4981 = vst.msk [vmem:[%s243 + $0x24] sm:$0xf] %vm4971, %v4916
        %4982 = vst.msk [vmem:[%s243 + $0x28] sm:$0xf] %vm4971, %v4917
        %4983 = vst.msk [vmem:[%s243 + $0x2c] sm:$0xf] %vm4971, %v4918
        %4984 = vst.msk [vmem:[%s243 + $0x30] sm:$0xf] %vm4971, %v4919
        %4985 = vst.msk [vmem:[%s243 + $0x34] sm:$0xf] %vm4971, %v4920
        %4986 = vst.msk [vmem:[%s243 + $0x38] sm:$0xf] %vm4971, %v4921
        %4987 = vst.msk [vmem:[%s243 + $0x3c] sm:$0xf] %vm4971, %v4922
        %4988 = vst.msk [vmem:[%s243 + $0x40] sm:$0xf] %vm4971, %v4923
        %4989 = vst.msk [vmem:[%s243 + $0x44] sm:$0xf] %vm4971, %v4924
        %4990 = vst.msk [vmem:[%s243 + $0x48] sm:$0xf] %vm4971, %v4925
        %4991 = vst.msk [vmem:[%s243 + $0x4c] sm:$0xf] %vm4971, %v4926
        %4992 = vst.msk [vmem:[%s243 + $0x50] sm:$0xf] %vm4971, %v4927
        %4993 = vst.msk [vmem:[%s243 + $0x54] sm:$0xf] %vm4971, %v4928
        %4994 = vst.msk [vmem:[%s243 + $0x58] sm:$0xf] %vm4971, %v4929
        %4995 = vst.msk [vmem:[%s243 + $0x5c] sm:$0xf] %vm4971, %v4930
        %4996 = vst.msk [vmem:[%s243 + $0x60] sm:$0xf] %vm4971, %v4931
        %4997 = vst.msk [vmem:[%s243 + $0x64] sm:$0xf] %vm4971, %v4932
        %4998 = vst.msk [vmem:[%s243 + $0x68] sm:$0xf] %vm4971, %v4933
        %4999 = vst.msk [vmem:[%s243 + $0x6c] sm:$0xf] %vm4971, %v4934
        %5000 = vst.msk [vmem:[%s243 + $0x70] sm:$0xf] %vm4971, %v4935
        %5001 = vst.msk [vmem:[%s243 + $0x74] sm:$0xf] %vm4971, %v4936
        %5002 = vst.msk [vmem:[%s243 + $0x78] sm:$0xf] %vm4971, %v4937
        %5003 = vst.msk [vmem:[%s243 + $0x7c] sm:$0xf] %vm4971, %v4938
        %s5004 = sand.u32 %s121, 1
        %s5005 = scalar_lea.sflag [#allocation4], %s5004
        %s5006 = sand.u32 %s121, 1
        %s5007 = smul.addr %s5006, 128
        %s5008 = scalar_lea.vmem [#allocation8], %s5007
        // Predicated region
        $region45: #{tpu_custom_call.1} parent=31 // pred_check
          %p5009 = pneg %p131
        $region46: #{tpu_custom_call.1} parent=31 // pred_check_branch
          %5011 = sbr.rel (%p5009) target = $region48
        $region47: #{tpu_custom_call.1} parent=31 // pred_region
          %s5013 = ssub.s32 2048, 2048
          %5014 = vsyncadd %s5005, %s5013
          %s5015 = smul.addr %s25, 32
          %s5016 = sadd.s32 %s26, %s5015
          %s5017 = smul.addr %s5016, 64
          %s5018 = scalar_lea.hbm %s3, %s5017
          %s5019 = sshll.u32 %s5008, 4
          %s5020 = int_to_ptr.vmem [resolvable:$true] %s5019
          %5025 = dma.vmem_to_hbm [thread:$0]  %s5020, 2048, %s5018, %s5005, 64, 64, 4
        $region48: #{tpu_custom_call.1} parent=31 // pred_fallthru
          _
      $region32: #{tpu_custom_call.1} parent=5 // pred_fallthru
        _
      %p5026 = scmp.le.s32.totalorder 2, %s16
      // Predicated region
      $region49: #{tpu_custom_call.1} parent=5 // pred_check
        %p5027 = pneg %p5026
      $region50: #{tpu_custom_call.1} parent=5 // pred_check_branch
        %5029 = sbr.rel (%p5027) target = $region52
      $region51: #{tpu_custom_call.1} parent=5 // pred_region
        %s5030 = ssub.s32 %s16, 2
        // Predicated region
        $region53: #{tpu_custom_call.1} parent=51 // pred_check
          %p5031 = pneg %p137
        $region54: #{tpu_custom_call.1} parent=51 // pred_check_branch
          %5033 = sbr.rel (%p5031) target = $region56
        $region55: #{tpu_custom_call.1} parent=51 // pred_region
          %s5034 = sand.u32 %s122, 1
          %s5035 = scalar_lea.sflag [#allocation4], %s5034
          %s5036 = sand.u32 %s122, 1
          %s5037 = smul.addr %s5036, 128
          %s5038 = scalar_lea.vmem [#allocation8], %s5037
          %5039 = dma.done %s5035, 2048
        $region56: #{tpu_custom_call.1} parent=51 // pred_fallthru
          _
      $region52: #{tpu_custom_call.1} parent=5 // pred_fallthru
        _
    $region6: #{tpu_custom_call.1} parent=1 // loop_footer
      %s20 = sadd.s32 1, %s16
    $region7: #{tpu_custom_call.1} parent=1 // loop_footer_branch
      %15 = sbr.rel target = $region3
    $region8: #{tpu_custom_call.1} parent=1 // loop_exit
      _
    %5040 = vsyncpa [#allocation3], 1
    %s5041 = scalar_lea.sflag [#allocation3], 1
    %5042 = vsyncpa %s5041, 1
    %5043 = vsyncpa [#allocation6], 1
    %5044 = vsyncpa [#allocation4], 1
    %s5045 = scalar_lea.sflag [#allocation4], 1
    %5046 = vsyncpa %s5045, 1

</llo_original>
